<compile_context>
chip_gen: v7x
topology: tpu7x:2x2x1
jax: 0.10.0
libtpu: 0.0.40
codegen_flags: <defaults>
</compile_context>

<pallas_src>
import math

import numpy as np
import jax
import jax.numpy as jnp
from jax.experimental import pallas as pl
from jax.experimental.pallas import tpu as pltpu

MODEL_DIM = 32
NUM_HEADS = 4
FF_DIM = 32
NUM_LAYERS = 4
HEAD_DIM = MODEL_DIM // NUM_HEADS
LN_EPS = 1e-5
# bf16 matmul inputs (v6e/v7x MXU is bf16-native); accumulation stays f32.
MATMUL_DTYPE = jnp.bfloat16


def _round_up(x, m):
    return ((x + m - 1) // m) * m


def _layernorm(x, gamma, beta):
    mean = jnp.mean(x, axis=-1, keepdims=True)
    var = jnp.mean((x - mean) ** 2, axis=-1, keepdims=True)
    return (x - mean) * jax.lax.rsqrt(var + LN_EPS) * gamma + beta


def _make_decoder_kernel(TB, Lp_pad, Lb_pad, NBp, Dbn, cdt):
    D, H, NL = MODEL_DIM, NUM_HEADS, NUM_LAYERS
    M = TB * Lp_pad
    Mc = TB * Lb_pad
    HLb = H * Lb_pad
    half = D // 2
    f32 = jnp.float32

    def kernel(time_ref, band_ref, bott_ref,
               freqs_ref, kmask_ref, hmask_ref, table_ref,
               embW1, embB1, embW2, embB2,
               ctxW1, ctxB1, ctxW2, ctxB2,
               Wq_ref, WkF_ref, bkF_ref, WvF_ref, bvF_ref,
               Wo_ref, Wf1_ref, Wf2_ref, bias_ref,
               wout_ref, bout_ref, out_ref):

        # ---- sinusoidal time features (freqs are a host-built constant) ----
        tf = time_ref[...]                                       # (TB, Lp_pad) f32
        freqs = freqs_ref[...].reshape(1, 1, half)
        args = tf[:, :, None] * freqs                            # (TB, Lp_pad, half)
        sin_feat = jnp.concatenate([jnp.sin(args), jnp.cos(args)],
                                   axis=-1).reshape(M, D)        # (M, D) f32

        # ---- band embedding via one-hot matmul gather ----
        bidx = band_ref[...][:, :, None]                         # (TB, Lp_pad, 1)
        lane_ids = jax.lax.broadcasted_iota(jnp.int32, (1, 1, NBp), 2)
        onehot = (bidx == lane_ids).astype(cdt).reshape(M, NBp)
        band_embd = jnp.dot(onehot, table_ref[...],
                            preferred_element_type=f32)          # (M, D) f32

        # ---- SinusoidalMLPPositionalEmbedding MLP ----
        h1 = jnp.maximum(jnp.dot(sin_feat.astype(cdt), embW1[...],
                                 preferred_element_type=f32) + embB1[...], 0.0)
        time_embd = jnp.dot(h1.astype(cdt), embW2[...],
                            preferred_element_type=f32) + embB2[...]

        x = time_embd + band_embd                                # (M, D) f32

        # ---- contextfc = MLP(Dbn -> D, hidden=[D]) on flattened bottleneck ----
        bott = bott_ref[...].reshape(Mc, Dbn)
        c1 = jnp.maximum(jnp.dot(bott.astype(cdt), ctxW1[...],
                                 preferred_element_type=f32) + ctxB1[...], 0.0)
        ctx = jnp.dot(c1.astype(cdt), ctxW2[...],
                      preferred_element_type=f32) + ctxB2[...]   # (Mc, D) f32

        # ---- K/V fused across all layers: two lane-dense (D, NL*D) matmuls ----
        ctx_c = ctx.astype(cdt)
        K_all = jnp.dot(ctx_c, WkF_ref[...],
                        preferred_element_type=f32) + bkF_ref[...]   # (Mc, NL*D)
        V_all = jnp.dot(ctx_c, WvF_ref[...],
                        preferred_element_type=f32) + bvF_ref[...]

        hmask = hmask_ref[...]                                   # (H, D) 0/1
        kmask = kmask_ref[...].reshape(1, 1, HLb)                # -1e30 on padded keys

        h = x
        for l in range(NL):                       # static unroll over layers
            base = l * 8
            bq = bias_ref[base + 0]
            bo = bias_ref[base + 1]
            bf1 = bias_ref[base + 2]
            bf2 = bias_ref[base + 3]
            g1 = bias_ref[base + 4]
            b1 = bias_ref[base + 5]
            g2 = bias_ref[base + 6]
            b2 = bias_ref[base + 7]

            # Q projection (1/sqrt(head_dim) pre-folded into Wq / bq).
            q = jnp.dot(h.astype(cdt), Wq_ref[l],
                        preferred_element_type=f32) + bq          # (M, D) f32
            q3 = q.reshape(TB, Lp_pad, D).astype(cdt)

            sl = slice(l * D, (l + 1) * D)
            k3 = K_all[:, sl].reshape(TB, Lb_pad, D).astype(cdt)
            v3 = V_all[:, sl].reshape(TB, Lb_pad, D).astype(cdt)

            # Block-diagonal head expansion: row (hh, l) keeps only head hh's
            # lanes, so all heads' scores come from ONE K=32 matmul per sample
            # (instead of NUM_HEADS K=8 matmuls per sample), and the weighted
            # sum is likewise one K=32 matmul per sample.
            K_exp = jnp.concatenate(
                [k3 * hmask[hh][None, None, :] for hh in range(H)], axis=1)
            V_exp = jnp.concatenate(
                [v3 * hmask[hh][None, None, :] for hh in range(H)], axis=1)

            s = jnp.einsum('bqd,bmd->bqm', q3, K_exp,
                           preferred_element_type=f32)            # (TB, Lp, HLb)
            s = s + kmask

            # grouped (per-head) softmax over each head's Lb_pad lane block
            p_parts = []
            for hh in range(H):
                g = s[:, :, hh * Lb_pad:(hh + 1) * Lb_pad]
                mx = jnp.max(g, axis=-1, keepdims=True)
                e = jnp.exp(g - mx)
                p_parts.append(e / jnp.sum(e, axis=-1, keepdims=True))
            p = jnp.concatenate(p_parts, axis=-1).astype(cdt)     # (TB, Lp, HLb)

            o3 = jnp.einsum('bqm,bmd->bqd', p, V_exp,
                            preferred_element_type=f32)           # (TB, Lp, D)
            attn = jnp.dot(o3.reshape(M, D).astype(cdt), Wo_ref[l],
                           preferred_element_type=f32) + bo       # (M, D)

            h = _layernorm(h + attn, g1, b1)
            ff = jnp.maximum(jnp.dot(h.astype(cdt), Wf1_ref[l],
                                     preferred_element_type=f32) + bf1, 0.0)
            ff = jnp.dot(ff.astype(cdt), Wf2_ref[l],
                         preferred_element_type=f32) + bf2
            h = _layernorm(h + ff, g2, b2)

        x = x + h                                                 # (M, D)

        # ---- output head: (TB, Lp_pad) flux slab ----
        x3 = x.reshape(TB, Lp_pad, D)
        w3 = wout_ref[...].reshape(1, 1, D)
        flux = jnp.sum(x3 * w3, axis=-1) + bout_ref[...]          # (TB, Lp_pad)
        out_ref[...] = flux[None]

    return kernel


def _pick_batch_block(B, Lp_pad, Lb_pad, max_rows=4096, min_rows=256):
    # candidates: divisors of B that keep the (TB, Lp_pad) block sublane-legal
    # (multiple of 8) or cover the whole batch.
    cands = [d for d in range(1, B + 1)
             if B % d == 0 and (d % 8 == 0 or d == B)]
    fits = [d for d in cands
            if d * Lp_pad <= max_rows and d * Lb_pad <= max_rows] or [min(cands)]
    # v7x megacore: prefer an even number (>=2) of grid steps so both TCs get
    # equal work along the "parallel" axis, as long as blocks stay big enough.
    pref_even = [d for d in fits
                 if (B // d) >= 2 and (B // d) % 2 == 0 and d * Lp_pad >= min_rows]
    if pref_even:
        return max(pref_even)
    pref = [d for d in fits if (B // d) >= 2 and d * Lp_pad >= min_rows]
    if pref:
        return max(pref)
    return max(fits)


def photometric_transformer_decoder(time, band, bottleneck, params,
                                    mask=None, donotmask=False,
                                    batch_block=None, matmul_dtype=None):
    """Forward pass. Returns flux (B, Lp)."""
    if donotmask:
        mask = None
    # TODO(synk): mask semantics of the reference TransformerBlock are unknown;
    # only the mask=None path is implemented.
    assert mask is None

    cdt = MATMUL_DTYPE if matmul_dtype is None else matmul_dtype
    B, Lp = time.shape
    _, Lb, Dbn = bottleneck.shape
    D, H, Hd, NL = MODEL_DIM, NUM_HEADS, HEAD_DIM, NUM_LAYERS
    assert FF_DIM == MODEL_DIM, "bias-pack layout assumes ff_dim == model_dim"

    Lp_pad = _round_up(Lp, 8)
    Lb_pad = _round_up(Lb, 8)
    HLb = H * Lb_pad

    if batch_block is None:
        TB = _pick_batch_block(B, Lp_pad, Lb_pad)
    else:
        TB = batch_block
        assert B % TB == 0 and (TB % 8 == 0 or TB == B)
    G = B // TB

    # ---- pad data inputs (cheap host-side glue) ----
    time_p = jnp.pad(time.astype(jnp.float32), ((0, 0), (0, Lp_pad - Lp)))
    band_p = jnp.pad(band.astype(jnp.int32), ((0, 0), (0, Lp_pad - Lp)))
    bott_p = jnp.pad(bottleneck.astype(jnp.float32),
                     ((0, 0), (0, Lb_pad - Lb), (0, 0)))

    # ---- compile-time constants (hoisted out of the kernel) ----
    half = D // 2
    freqs = np.exp(-(math.log(10000.0) / (half - 1))
                   * np.arange(half, dtype=np.float32)).reshape(1, half)
    # TODO(synk): frequency spacing assumed; verify against the real
    # SinusoidalMLPPositionalEmbedding implementation.
    kmask = np.zeros((1, HLb), np.float32)
    if Lb_pad != Lb:
        for hh in range(H):
            kmask[0, hh * Lb_pad + Lb:(hh + 1) * Lb_pad] = -1e30
    hmask = np.zeros((H, D), np.float32)
    for hh in range(H):
        hmask[hh, hh * Hd:(hh + 1) * Hd] = 1.0

    # ---- pack / fuse weights ----
    scale = 1.0 / math.sqrt(Hd)

    def c(a):
        return jnp.asarray(a, cdt)

    num_bands = params["band_table"].shape[0]
    NBp = _round_up(num_bands, 8)
    table = jnp.pad(params["band_table"].astype(jnp.float32),
                    ((0, NBp - num_bands), (0, 0)))

    # K/V projections fused across layers -> lane-dense (D, NL*D) weights.
    Wk_f = jnp.concatenate([params["Wk"][l] for l in range(NL)], axis=1)
    Wv_f = jnp.concatenate([params["Wv"][l] for l in range(NL)], axis=1)
    bk_f = params["bk"].astype(jnp.float32).reshape(1, NL * D)
    bv_f = params["bv"].astype(jnp.float32).reshape(1, NL * D)

    Wq_s = params["Wq"] * scale            # fold 1/sqrt(head_dim) into Q proj
    bq_s = params["bq"] * scale

    bias_pack = jnp.concatenate([
        bq_s, params["bo"], params["bf1"], params["bf2"],
        params["ln1g"], params["ln1b"], params["ln2g"], params["ln2b"],
    ], axis=1).astype(jnp.float32).reshape(NL * 8, D)

    wout_row = params["Wout"].T.astype(jnp.float32)   # (1, D)
    bout = params["bout"].astype(jnp.float32)         # (1, 1)

    f32 = jnp.float32
    weight_args = [
        jnp.asarray(freqs, f32), jnp.asarray(kmask, f32), jnp.asarray(hmask, cdt),
        c(table),
        c(params["embW1"]), params["embB1"].astype(f32),
        c(params["embW2"]), params["embB2"].astype(f32),
        c(params["ctxW1"]), params["ctxB1"].astype(f32),
        c(params["ctxW2"]), params["ctxB2"].astype(f32),
        c(Wq_s), c(Wk_f), bk_f, c(Wv_f), bv_f,
        c(params["Wo"]), c(params["Wf1"]), c(params["Wf2"]),
        bias_pack, wout_row, bout,
    ]

    def full_spec(a):
        nd = a.ndim
        return pl.BlockSpec(a.shape, lambda g, _nd=nd: (0,) * _nd)

    in_specs = [
        pl.BlockSpec((TB, Lp_pad), lambda g: (g, 0)),
        pl.BlockSpec((TB, Lp_pad), lambda g: (g, 0)),
        pl.BlockSpec((TB, Lb_pad, Dbn), lambda g: (g, 0, 0)),
    ] + [full_spec(a) for a in weight_args]

    kernel = _make_decoder_kernel(TB, Lp_pad, Lb_pad, NBp, Dbn, cdt)

    out = pl.pallas_call(
        kernel,
        out_shape=jax.ShapeDtypeStruct((G, TB, Lp_pad), jnp.float32),
        grid_spec=pltpu.PrefetchScalarGridSpec(
            num_scalar_prefetch=0,
            grid=(G,),
            in_specs=in_specs,
            out_specs=pl.BlockSpec((1, TB, Lp_pad), lambda g: (g, 0, 0)),
        ),
        compiler_params=pltpu.CompilerParams(
            dimension_semantics=("parallel",),
            vmem_limit_bytes=64 * 1024 * 1024),
    )(time_p, band_p, bott_p, *weight_args)

    return out.reshape(B, Lp_pad)[:, :Lp]


def init_params(key, num_bands, bottleneck_dim):
    D, F, NL = MODEL_DIM, FF_DIM, NUM_LAYERS
    ks = jax.random.split(key, 16)

    def dense(k, shape, scale=0.1):
        return (scale * jax.random.normal(k, shape)).astype(jnp.float32)

    z = lambda shape: jnp.zeros(shape, jnp.float32)
    o = lambda shape: jnp.ones(shape, jnp.float32)

    return dict(
        band_table=dense(ks[0], (num_bands, D), 1.0),
        embW1=dense(ks[1], (D, D)), embB1=z((1, D)),
        embW2=dense(ks[2], (D, D)), embB2=z((1, D)),
        ctxW1=dense(ks[3], (bottleneck_dim, D)), ctxB1=z((1, D)),
        ctxW2=dense(ks[4], (D, D)), ctxB2=z((1, D)),
        Wq=dense(ks[5], (NL, D, D)), Wk=dense(ks[6], (NL, D, D)),
        Wv=dense(ks[7], (NL, D, D)), Wo=dense(ks[8], (NL, D, D)),
        bq=z((NL, 1, D)), bk=z((NL, 1, D)), bv=z((NL, 1, D)), bo=z((NL, 1, D)),
        ln1g=o((NL, 1, D)), ln1b=z((NL, 1, D)),
        Wf1=dense(ks[9], (NL, D, F)), bf1=z((NL, 1, F)),
        Wf2=dense(ks[10], (NL, F, D)), bf2=z((NL, 1, D)),
        ln2g=o((NL, 1, D)), ln2b=z((NL, 1, D)),
        Wout=dense(ks[11], (D, 1)), bout=z((1, 1)),
    )


if __name__ == "__main__":
    key = jax.random.PRNGKey(0)
    B, Lp, Lb = 2, 8, 6
    num_bands = 6
    bottleneck_dim = 16

    k1, k2, k3, k4 = jax.random.split(key, 4)
    time = jax.random.uniform(k1, (B, Lp), minval=0.0, maxval=100.0)
    band = jax.random.randint(k2, (B, Lp), 0, num_bands)
    bottleneck = jax.random.normal(k3, (B, Lb, bottleneck_dim))
    params = init_params(k4, num_bands, bottleneck_dim)

    flux = photometric_transformer_decoder(time, band, bottleneck, params)
    jax.block_until_ready(flux)
    assert flux.shape == (B, Lp) and flux.dtype == jnp.float32
    assert bool(jnp.all(jnp.isfinite(flux)))
    print("KERNEL_OK")
</pallas_src>

<mosaic_0001>
module attributes {stable_mosaic.version = 11 : i64} {
  func.func @kernel(%arg0: i32, %arg1: memref<2x8xf32, #tpu.memory_space<vmem>>, %arg2: memref<2x8xi32, #tpu.memory_space<vmem>>, %arg3: memref<2x8x16xf32, #tpu.memory_space<vmem>>, %arg4: memref<1x16xf32, #tpu.memory_space<vmem>>, %arg5: memref<1x32xf32, #tpu.memory_space<vmem>>, %arg6: memref<4x32xbf16, #tpu.memory_space<vmem>>, %arg7: memref<8x32xbf16, #tpu.memory_space<vmem>>, %arg8: memref<32x32xbf16, #tpu.memory_space<vmem>>, %arg9: memref<1x32xf32, #tpu.memory_space<vmem>>, %arg10: memref<32x32xbf16, #tpu.memory_space<vmem>>, %arg11: memref<1x32xf32, #tpu.memory_space<vmem>>, %arg12: memref<16x32xbf16, #tpu.memory_space<vmem>>, %arg13: memref<1x32xf32, #tpu.memory_space<vmem>>, %arg14: memref<32x32xbf16, #tpu.memory_space<vmem>>, %arg15: memref<1x32xf32, #tpu.memory_space<vmem>>, %arg16: memref<4x32x32xbf16, #tpu.memory_space<vmem>>, %arg17: memref<32x128xbf16, #tpu.memory_space<vmem>>, %arg18: memref<1x128xf32, #tpu.memory_space<vmem>>, %arg19: memref<32x128xbf16, #tpu.memory_space<vmem>>, %arg20: memref<1x128xf32, #tpu.memory_space<vmem>>, %arg21: memref<4x32x32xbf16, #tpu.memory_space<vmem>>, %arg22: memref<4x32x32xbf16, #tpu.memory_space<vmem>>, %arg23: memref<4x32x32xbf16, #tpu.memory_space<vmem>>, %arg24: memref<32x32xf32, #tpu.memory_space<vmem>>, %arg25: memref<1x32xf32, #tpu.memory_space<vmem>>, %arg26: memref<1x1xf32, #tpu.memory_space<vmem>>, %arg27: memref<1x2x8xf32, #tpu.memory_space<vmem>>) attributes {dimension_semantics = [#tpu.dimension_semantics<parallel>], iteration_bounds = array<i64: 1>, scalar_prefetch = 0 : i64, scratch_operands = 0 : i64, tpu.core_type = #tpu.core_type<tc>, window_params = [{transform_indices = @transform_0, window_bounds = array<i64: 2, 8>}, {transform_indices = @transform_1, window_bounds = array<i64: 2, 8>}, {transform_indices = @transform_2, window_bounds = array<i64: 2, 8, 16>}, {pipeline_mode = #tpu.pipeline_mode<synchronous>, transform_indices = @transform_3, window_bounds = array<i64: 1, 16>}, {pipeline_mode = #tpu.pipeline_mode<synchronous>, transform_indices = @transform_4, window_bounds = array<i64: 1, 32>}, {pipeline_mode = #tpu.pipeline_mode<synchronous>, transform_indices = @transform_5, window_bounds = array<i64: 4, 32>}, {pipeline_mode = #tpu.pipeline_mode<synchronous>, transform_indices = @transform_6, window_bounds = array<i64: 8, 32>}, {pipeline_mode = #tpu.pipeline_mode<synchronous>, transform_indices = @transform_7, window_bounds = array<i64: 32, 32>}, {pipeline_mode = #tpu.pipeline_mode<synchronous>, transform_indices = @transform_8, window_bounds = array<i64: 1, 32>}, {pipeline_mode = #tpu.pipeline_mode<synchronous>, transform_indices = @transform_9, window_bounds = array<i64: 32, 32>}, {pipeline_mode = #tpu.pipeline_mode<synchronous>, transform_indices = @transform_10, window_bounds = array<i64: 1, 32>}, {pipeline_mode = #tpu.pipeline_mode<synchronous>, transform_indices = @transform_11, window_bounds = array<i64: 16, 32>}, {pipeline_mode = #tpu.pipeline_mode<synchronous>, transform_indices = @transform_12, window_bounds = array<i64: 1, 32>}, {pipeline_mode = #tpu.pipeline_mode<synchronous>, transform_indices = @transform_13, window_bounds = array<i64: 32, 32>}, {pipeline_mode = #tpu.pipeline_mode<synchronous>, transform_indices = @transform_14, window_bounds = array<i64: 1, 32>}, {pipeline_mode = #tpu.pipeline_mode<synchronous>, transform_indices = @transform_15, window_bounds = array<i64: 4, 32, 32>}, {pipeline_mode = #tpu.pipeline_mode<synchronous>, transform_indices = @transform_16, window_bounds = array<i64: 32, 128>}, {pipeline_mode = #tpu.pipeline_mode<synchronous>, transform_indices = @transform_17, window_bounds = array<i64: 1, 128>}, {pipeline_mode = #tpu.pipeline_mode<synchronous>, transform_indices = @transform_18, window_bounds = array<i64: 32, 128>}, {pipeline_mode = #tpu.pipeline_mode<synchronous>, transform_indices = @transform_19, window_bounds = array<i64: 1, 128>}, {pipeline_mode = #tpu.pipeline_mode<synchronous>, transform_indices = @transform_20, window_bounds = array<i64: 4, 32, 32>}, {pipeline_mode = #tpu.pipeline_mode<synchronous>, transform_indices = @transform_21, window_bounds = array<i64: 4, 32, 32>}, {pipeline_mode = #tpu.pipeline_mode<synchronous>, transform_indices = @transform_22, window_bounds = array<i64: 4, 32, 32>}, {pipeline_mode = #tpu.pipeline_mode<synchronous>, transform_indices = @transform_23, window_bounds = array<i64: 32, 32>}, {pipeline_mode = #tpu.pipeline_mode<synchronous>, transform_indices = @transform_24, window_bounds = array<i64: 1, 32>}, {pipeline_mode = #tpu.pipeline_mode<synchronous>, transform_indices = @transform_25, window_bounds = array<i64: 1, 1>}, {transform_indices = @transform_26, window_bounds = array<i64: 1, 2, 8>}]} {
    %c0 = arith.constant 0 : index
    %c0_0 = arith.constant 0 : index
    %0 = vector.load %arg1[%c0, %c0_0] : memref<2x8xf32, #tpu.memory_space<vmem>>, vector<2x8xf32>
    %c0_1 = arith.constant 0 : index
    %c0_2 = arith.constant 0 : index
    %1 = vector.load %arg4[%c0_1, %c0_2] : memref<1x16xf32, #tpu.memory_space<vmem>>, vector<1x16xf32>
    %2 = vector.shape_cast %1 : vector<1x16xf32> to vector<1x1x16xf32>
    %3 = vector.shape_cast %0 : vector<2x8xf32> to vector<2x8x1xf32>
    %4 = vector.broadcast %3 : vector<2x8x1xf32> to vector<2x8x16xf32>
    %5 = vector.broadcast %2 : vector<1x1x16xf32> to vector<2x8x16xf32>
    %6 = arith.mulf %4, %5 : vector<2x8x16xf32>
    %7 = math.sin %6 : vector<2x8x16xf32>
    %8 = math.cos %6 : vector<2x8x16xf32>
    %9 = tpu.concatenate %7, %8 in 2 : vector<2x8x16xf32>, vector<2x8x16xf32> -> vector<2x8x32xf32>
    %10 = vector.shape_cast %9 : vector<2x8x32xf32> to vector<16x32xf32>
    %c0_3 = arith.constant 0 : index
    %c0_4 = arith.constant 0 : index
    %11 = vector.load %arg2[%c0_3, %c0_4] : memref<2x8xi32, #tpu.memory_space<vmem>>, vector<2x8xi32>
    %12 = vector.shape_cast %11 : vector<2x8xi32> to vector<2x8x1xi32>
    %13 = tpu.iota {dimensions = array<i32: 2>} : vector<1x1x8xi32>
    %14 = vector.broadcast %12 : vector<2x8x1xi32> to vector<2x8x8xi32>
    %15 = vector.broadcast %13 : vector<1x1x8xi32> to vector<2x8x8xi32>
    %16 = arith.cmpi eq, %14, %15 : vector<2x8x8xi32>
    %17 = arith.extui %16 : vector<2x8x8xi1> to vector<2x8x8xi32>
    %18 = arith.sitofp %17 : vector<2x8x8xi32> to vector<2x8x8xf32>
    %19 = arith.truncf %18 : vector<2x8x8xf32> to vector<2x8x8xbf16>
    %20 = vector.shape_cast %19 : vector<2x8x8xbf16> to vector<16x8xbf16>
    %c0_5 = arith.constant 0 : index
    %c0_6 = arith.constant 0 : index
    %21 = vector.load %arg7[%c0_5, %c0_6] : memref<8x32xbf16, #tpu.memory_space<vmem>>, vector<8x32xbf16>
    %cst = arith.constant dense<0.000000e+00> : vector<16x32xf32>
    %22 = tpu.matmul %20, %21, %cst {dimension_numbers = #tpu.dot_dimension_numbers<[1], [0], [0], [1], [0, 0, 1, 1], [], []>} : vector<16x8xbf16>, vector<8x32xbf16>, vector<16x32xf32> -> vector<16x32xf32>
    %23 = arith.truncf %10 : vector<16x32xf32> to vector<16x32xbf16>
    %c0_7 = arith.constant 0 : index
    %c0_8 = arith.constant 0 : index
    %24 = vector.load %arg8[%c0_7, %c0_8] : memref<32x32xbf16, #tpu.memory_space<vmem>>, vector<32x32xbf16>
    %cst_9 = arith.constant dense<0.000000e+00> : vector<16x32xf32>
    %25 = tpu.matmul %23, %24, %cst_9 {dimension_numbers = #tpu.dot_dimension_numbers<[1], [0], [0], [1], [0, 0, 1, 1], [], []>} : vector<16x32xbf16>, vector<32x32xbf16>, vector<16x32xf32> -> vector<16x32xf32>
    %c0_10 = arith.constant 0 : index
    %c0_11 = arith.constant 0 : index
    %26 = vector.load %arg9[%c0_10, %c0_11] : memref<1x32xf32, #tpu.memory_space<vmem>>, vector<1x32xf32>
    %27 = vector.broadcast %26 : vector<1x32xf32> to vector<16x32xf32>
    %28 = arith.addf %25, %27 : vector<16x32xf32>
    %cst_12 = arith.constant 0.000000e+00 : f32
    %29 = vector.broadcast %cst_12 : f32 to vector<16x32xf32>
    %30 = arith.maximumf %28, %29 : vector<16x32xf32>
    %31 = arith.truncf %30 : vector<16x32xf32> to vector<16x32xbf16>
    %c0_13 = arith.constant 0 : index
    %c0_14 = arith.constant 0 : index
    %32 = vector.load %arg10[%c0_13, %c0_14] : memref<32x32xbf16, #tpu.memory_space<vmem>>, vector<32x32xbf16>
    %cst_15 = arith.constant dense<0.000000e+00> : vector<16x32xf32>
    %33 = tpu.matmul %31, %32, %cst_15 {dimension_numbers = #tpu.dot_dimension_numbers<[1], [0], [0], [1], [0, 0, 1, 1], [], []>} : vector<16x32xbf16>, vector<32x32xbf16>, vector<16x32xf32> -> vector<16x32xf32>
    %c0_16 = arith.constant 0 : index
    %c0_17 = arith.constant 0 : index
    %34 = vector.load %arg11[%c0_16, %c0_17] : memref<1x32xf32, #tpu.memory_space<vmem>>, vector<1x32xf32>
    %35 = vector.broadcast %34 : vector<1x32xf32> to vector<16x32xf32>
    %36 = arith.addf %33, %35 : vector<16x32xf32>
    %37 = arith.addf %36, %22 : vector<16x32xf32>
    %c0_18 = arith.constant 0 : index
    %c0_19 = arith.constant 0 : index
    %c0_20 = arith.constant 0 : index
    %38 = vector.load %arg3[%c0_18, %c0_19, %c0_20] : memref<2x8x16xf32, #tpu.memory_space<vmem>>, vector<2x8x16xf32>
    %39 = vector.shape_cast %38 : vector<2x8x16xf32> to vector<16x16xf32>
    %40 = arith.truncf %39 : vector<16x16xf32> to vector<16x16xbf16>
    %c0_21 = arith.constant 0 : index
    %c0_22 = arith.constant 0 : index
    %41 = vector.load %arg12[%c0_21, %c0_22] : memref<16x32xbf16, #tpu.memory_space<vmem>>, vector<16x32xbf16>
    %cst_23 = arith.constant dense<0.000000e+00> : vector<16x32xf32>
    %42 = tpu.matmul %40, %41, %cst_23 {dimension_numbers = #tpu.dot_dimension_numbers<[1], [0], [0], [1], [0, 0, 1, 1], [], []>} : vector<16x16xbf16>, vector<16x32xbf16>, vector<16x32xf32> -> vector<16x32xf32>
    %c0_24 = arith.constant 0 : index
    %c0_25 = arith.constant 0 : index
    %43 = vector.load %arg13[%c0_24, %c0_25] : memref<1x32xf32, #tpu.memory_space<vmem>>, vector<1x32xf32>
    %44 = vector.broadcast %43 : vector<1x32xf32> to vector<16x32xf32>
    %45 = arith.addf %42, %44 : vector<16x32xf32>
    %cst_26 = arith.constant 0.000000e+00 : f32
    %46 = vector.broadcast %cst_26 : f32 to vector<16x32xf32>
    %47 = arith.maximumf %45, %46 : vector<16x32xf32>
    %48 = arith.truncf %47 : vector<16x32xf32> to vector<16x32xbf16>
    %c0_27 = arith.constant 0 : index
    %c0_28 = arith.constant 0 : index
    %49 = vector.load %arg14[%c0_27, %c0_28] : memref<32x32xbf16, #tpu.memory_space<vmem>>, vector<32x32xbf16>
    %cst_29 = arith.constant dense<0.000000e+00> : vector<16x32xf32>
    %50 = tpu.matmul %48, %49, %cst_29 {dimension_numbers = #tpu.dot_dimension_numbers<[1], [0], [0], [1], [0, 0, 1, 1], [], []>} : vector<16x32xbf16>, vector<32x32xbf16>, vector<16x32xf32> -> vector<16x32xf32>
    %c0_30 = arith.constant 0 : index
    %c0_31 = arith.constant 0 : index
    %51 = vector.load %arg15[%c0_30, %c0_31] : memref<1x32xf32, #tpu.memory_space<vmem>>, vector<1x32xf32>
    %52 = vector.broadcast %51 : vector<1x32xf32> to vector<16x32xf32>
    %53 = arith.addf %50, %52 : vector<16x32xf32>
    %54 = arith.truncf %53 : vector<16x32xf32> to vector<16x32xbf16>
    %c0_32 = arith.constant 0 : index
    %c0_33 = arith.constant 0 : index
    %55 = vector.load %arg17[%c0_32, %c0_33] : memref<32x128xbf16, #tpu.memory_space<vmem>>, vector<32x128xbf16>
    %cst_34 = arith.constant dense<0.000000e+00> : vector<16x128xf32>
    %56 = tpu.matmul %54, %55, %cst_34 {dimension_numbers = #tpu.dot_dimension_numbers<[1], [0], [0], [1], [0, 0, 1, 1], [], []>} : vector<16x32xbf16>, vector<32x128xbf16>, vector<16x128xf32> -> vector<16x128xf32>
    %c0_35 = arith.constant 0 : index
    %c0_36 = arith.constant 0 : index
    %57 = vector.load %arg18[%c0_35, %c0_36] : memref<1x128xf32, #tpu.memory_space<vmem>>, vector<1x128xf32>
    %58 = vector.broadcast %57 : vector<1x128xf32> to vector<16x128xf32>
    %59 = arith.addf %56, %58 : vector<16x128xf32>
    %c0_37 = arith.constant 0 : index
    %c0_38 = arith.constant 0 : index
    %60 = vector.load %arg19[%c0_37, %c0_38] : memref<32x128xbf16, #tpu.memory_space<vmem>>, vector<32x128xbf16>
    %cst_39 = arith.constant dense<0.000000e+00> : vector<16x128xf32>
    %61 = tpu.matmul %54, %60, %cst_39 {dimension_numbers = #tpu.dot_dimension_numbers<[1], [0], [0], [1], [0, 0, 1, 1], [], []>} : vector<16x32xbf16>, vector<32x128xbf16>, vector<16x128xf32> -> vector<16x128xf32>
    %c0_40 = arith.constant 0 : index
    %c0_41 = arith.constant 0 : index
    %62 = vector.load %arg20[%c0_40, %c0_41] : memref<1x128xf32, #tpu.memory_space<vmem>>, vector<1x128xf32>
    %63 = vector.broadcast %62 : vector<1x128xf32> to vector<16x128xf32>
    %64 = arith.addf %61, %63 : vector<16x128xf32>
    %c0_42 = arith.constant 0 : index
    %c0_43 = arith.constant 0 : index
    %65 = vector.load %arg6[%c0_42, %c0_43] : memref<4x32xbf16, #tpu.memory_space<vmem>>, vector<4x32xbf16>
    %c0_44 = arith.constant 0 : index
    %c0_45 = arith.constant 0 : index
    %66 = vector.load %arg5[%c0_44, %c0_45] : memref<1x32xf32, #tpu.memory_space<vmem>>, vector<1x32xf32>
    %67 = vector.shape_cast %66 : vector<1x32xf32> to vector<1x1x32xf32>
    %c0_46 = arith.constant 0 : index
    %c0_47 = arith.constant 0 : index
    %68 = vector.load %arg24[%c0_46, %c0_47] : memref<32x32xf32, #tpu.memory_space<vmem>>, vector<1x32xf32>
    %69 = vector.shape_cast %68 : vector<1x32xf32> to vector<32xf32>
    %c1 = arith.constant 1 : index
    %c0_48 = arith.constant 0 : index
    %70 = vector.load %arg24[%c1, %c0_48] : memref<32x32xf32, #tpu.memory_space<vmem>>, vector<1x32xf32>
    %71 = vector.shape_cast %70 : vector<1x32xf32> to vector<32xf32>
    %c2 = arith.constant 2 : index
    %c0_49 = arith.constant 0 : index
    %72 = vector.load %arg24[%c2, %c0_49] : memref<32x32xf32, #tpu.memory_space<vmem>>, vector<1x32xf32>
    %73 = vector.shape_cast %72 : vector<1x32xf32> to vector<32xf32>
    %c3 = arith.constant 3 : index
    %c0_50 = arith.constant 0 : index
    %74 = vector.load %arg24[%c3, %c0_50] : memref<32x32xf32, #tpu.memory_space<vmem>>, vector<1x32xf32>
    %75 = vector.shape_cast %74 : vector<1x32xf32> to vector<32xf32>
    %c4 = arith.constant 4 : index
    %c0_51 = arith.constant 0 : index
    %76 = vector.load %arg24[%c4, %c0_51] : memref<32x32xf32, #tpu.memory_space<vmem>>, vector<1x32xf32>
    %77 = vector.shape_cast %76 : vector<1x32xf32> to vector<32xf32>
    %c5 = arith.constant 5 : index
    %c0_52 = arith.constant 0 : index
    %78 = vector.load %arg24[%c5, %c0_52] : memref<32x32xf32, #tpu.memory_space<vmem>>, vector<1x32xf32>
    %79 = vector.shape_cast %78 : vector<1x32xf32> to vector<32xf32>
    %c6 = arith.constant 6 : index
    %c0_53 = arith.constant 0 : index
    %80 = vector.load %arg24[%c6, %c0_53] : memref<32x32xf32, #tpu.memory_space<vmem>>, vector<1x32xf32>
    %81 = vector.shape_cast %80 : vector<1x32xf32> to vector<32xf32>
    %c7 = arith.constant 7 : index
    %c0_54 = arith.constant 0 : index
    %82 = vector.load %arg24[%c7, %c0_54] : memref<32x32xf32, #tpu.memory_space<vmem>>, vector<1x32xf32>
    %83 = vector.shape_cast %82 : vector<1x32xf32> to vector<32xf32>
    %84 = arith.truncf %37 : vector<16x32xf32> to vector<16x32xbf16>
    %c0_55 = arith.constant 0 : index
    %c0_56 = arith.constant 0 : index
    %c0_57 = arith.constant 0 : index
    %85 = vector.load %arg16[%c0_55, %c0_56, %c0_57] : memref<4x32x32xbf16, #tpu.memory_space<vmem>>, vector<1x32x32xbf16>
    %86 = vector.shape_cast %85 : vector<1x32x32xbf16> to vector<32x32xbf16>
    %cst_58 = arith.constant dense<0.000000e+00> : vector<16x32xf32>
    %87 = tpu.matmul %84, %86, %cst_58 {dimension_numbers = #tpu.dot_dimension_numbers<[1], [0], [0], [1], [0, 0, 1, 1], [], []>} : vector<16x32xbf16>, vector<32x32xbf16>, vector<16x32xf32> -> vector<16x32xf32>
    %88 = vector.shape_cast %69 : vector<32xf32> to vector<1x32xf32>
    %89 = vector.broadcast %88 : vector<1x32xf32> to vector<16x32xf32>
    %90 = arith.addf %87, %89 : vector<16x32xf32>
    %91 = vector.shape_cast %90 : vector<16x32xf32> to vector<2x8x32xf32>
    %92 = arith.truncf %91 : vector<2x8x32xf32> to vector<2x8x32xbf16>
    %93 = vector.extract_strided_slice %59 {offsets = [0, 0], sizes = [16, 32], strides = [1, 1]} : vector<16x128xf32> to vector<16x32xf32>
    %94 = vector.shape_cast %93 : vector<16x32xf32> to vector<2x8x32xf32>
    %95 = arith.truncf %94 : vector<2x8x32xf32> to vector<2x8x32xbf16>
    %96 = vector.extract_strided_slice %64 {offsets = [0, 0], sizes = [16, 32], strides = [1, 1]} : vector<16x128xf32> to vector<16x32xf32>
    %97 = vector.shape_cast %96 : vector<16x32xf32> to vector<2x8x32xf32>
    %98 = arith.truncf %97 : vector<2x8x32xf32> to vector<2x8x32xbf16>
    %99 = vector.extract_strided_slice %65 {offsets = [0, 0], sizes = [1, 32], strides = [1, 1]} : vector<4x32xbf16> to vector<1x32xbf16>
    %100 = vector.shape_cast %99 : vector<1x32xbf16> to vector<32xbf16>
    %101 = vector.shape_cast %100 : vector<32xbf16> to vector<1x1x32xbf16>
    %102 = vector.broadcast %101 : vector<1x1x32xbf16> to vector<2x8x32xbf16>
    %103 = arith.mulf %95, %102 : vector<2x8x32xbf16>
    %104 = vector.extract_strided_slice %65 {offsets = [1, 0], sizes = [1, 32], strides = [1, 1]} : vector<4x32xbf16> to vector<1x32xbf16>
    %105 = vector.shape_cast %104 : vector<1x32xbf16> to vector<32xbf16>
    %106 = vector.shape_cast %105 : vector<32xbf16> to vector<1x1x32xbf16>
    %107 = vector.broadcast %106 : vector<1x1x32xbf16> to vector<2x8x32xbf16>
    %108 = arith.mulf %95, %107 : vector<2x8x32xbf16>
    %109 = vector.extract_strided_slice %65 {offsets = [2, 0], sizes = [1, 32], strides = [1, 1]} : vector<4x32xbf16> to vector<1x32xbf16>
    %110 = vector.shape_cast %109 : vector<1x32xbf16> to vector<32xbf16>
    %111 = vector.shape_cast %110 : vector<32xbf16> to vector<1x1x32xbf16>
    %112 = vector.broadcast %111 : vector<1x1x32xbf16> to vector<2x8x32xbf16>
    %113 = arith.mulf %95, %112 : vector<2x8x32xbf16>
    %114 = vector.extract_strided_slice %65 {offsets = [3, 0], sizes = [1, 32], strides = [1, 1]} : vector<4x32xbf16> to vector<1x32xbf16>
    %115 = vector.shape_cast %114 : vector<1x32xbf16> to vector<32xbf16>
    %116 = vector.shape_cast %115 : vector<32xbf16> to vector<1x1x32xbf16>
    %117 = vector.broadcast %116 : vector<1x1x32xbf16> to vector<2x8x32xbf16>
    %118 = arith.mulf %95, %117 : vector<2x8x32xbf16>
    %119 = tpu.concatenate %103, %108, %113, %118 in 1 : vector<2x8x32xbf16>, vector<2x8x32xbf16>, vector<2x8x32xbf16>, vector<2x8x32xbf16> -> vector<2x32x32xbf16>
    %120 = vector.extract_strided_slice %65 {offsets = [0, 0], sizes = [1, 32], strides = [1, 1]} : vector<4x32xbf16> to vector<1x32xbf16>
    %121 = vector.shape_cast %120 : vector<1x32xbf16> to vector<32xbf16>
    %122 = vector.shape_cast %121 : vector<32xbf16> to vector<1x1x32xbf16>
    %123 = vector.broadcast %122 : vector<1x1x32xbf16> to vector<2x8x32xbf16>
    %124 = arith.mulf %98, %123 : vector<2x8x32xbf16>
    %125 = vector.extract_strided_slice %65 {offsets = [1, 0], sizes = [1, 32], strides = [1, 1]} : vector<4x32xbf16> to vector<1x32xbf16>
    %126 = vector.shape_cast %125 : vector<1x32xbf16> to vector<32xbf16>
    %127 = vector.shape_cast %126 : vector<32xbf16> to vector<1x1x32xbf16>
    %128 = vector.broadcast %127 : vector<1x1x32xbf16> to vector<2x8x32xbf16>
    %129 = arith.mulf %98, %128 : vector<2x8x32xbf16>
    %130 = vector.extract_strided_slice %65 {offsets = [2, 0], sizes = [1, 32], strides = [1, 1]} : vector<4x32xbf16> to vector<1x32xbf16>
    %131 = vector.shape_cast %130 : vector<1x32xbf16> to vector<32xbf16>
    %132 = vector.shape_cast %131 : vector<32xbf16> to vector<1x1x32xbf16>
    %133 = vector.broadcast %132 : vector<1x1x32xbf16> to vector<2x8x32xbf16>
    %134 = arith.mulf %98, %133 : vector<2x8x32xbf16>
    %135 = vector.extract_strided_slice %65 {offsets = [3, 0], sizes = [1, 32], strides = [1, 1]} : vector<4x32xbf16> to vector<1x32xbf16>
    %136 = vector.shape_cast %135 : vector<1x32xbf16> to vector<32xbf16>
    %137 = vector.shape_cast %136 : vector<32xbf16> to vector<1x1x32xbf16>
    %138 = vector.broadcast %137 : vector<1x1x32xbf16> to vector<2x8x32xbf16>
    %139 = arith.mulf %98, %138 : vector<2x8x32xbf16>
    %140 = tpu.concatenate %124, %129, %134, %139 in 1 : vector<2x8x32xbf16>, vector<2x8x32xbf16>, vector<2x8x32xbf16>, vector<2x8x32xbf16> -> vector<2x32x32xbf16>
    "tpu.trace_start"() <{level = 10 : i32, message = "bqd,bmd->bqm"}> : () -> ()
    %cst_59 = arith.constant dense<0.000000e+00> : vector<2x8x32xf32>
    %141 = tpu.matmul %92, %119, %cst_59 {dimension_numbers = #tpu.dot_dimension_numbers<[2], [2], [1], [1], [0, 0, 0, 1, 1, 1], [0], [0]>} : vector<2x8x32xbf16>, vector<2x32x32xbf16>, vector<2x8x32xf32> -> vector<2x8x32xf32>
    "tpu.trace_stop"() : () -> ()
    %142 = vector.broadcast %67 : vector<1x1x32xf32> to vector<2x8x32xf32>
    %143 = arith.addf %141, %142 : vector<2x8x32xf32>
    %144 = vector.extract_strided_slice %143 {offsets = [0, 0, 0], sizes = [2, 8, 8], strides = [1, 1, 1]} : vector<2x8x32xf32> to vector<2x8x8xf32>
    %cst_60 = arith.constant dense<0xFF800000> : vector<2x8xf32>
    %145 = vector.multi_reduction <maximumf>, %144, %cst_60 [2] : vector<2x8x8xf32> to vector<2x8xf32>
    %146 = vector.shape_cast %145 : vector<2x8xf32> to vector<2x8x1xf32>
    %147 = vector.broadcast %146 : vector<2x8x1xf32> to vector<2x8x8xf32>
    %148 = arith.subf %144, %147 : vector<2x8x8xf32>
    %149 = math.exp %148 : vector<2x8x8xf32>
    %cst_61 = arith.constant dense<0.000000e+00> : vector<2x8xf32>
    %150 = vector.multi_reduction <add>, %149, %cst_61 [2] : vector<2x8x8xf32> to vector<2x8xf32>
    %151 = vector.shape_cast %150 : vector<2x8xf32> to vector<2x8x1xf32>
    %152 = vector.broadcast %151 : vector<2x8x1xf32> to vector<2x8x8xf32>
    %153 = arith.divf %149, %152 : vector<2x8x8xf32>
    %154 = vector.extract_strided_slice %143 {offsets = [0, 0, 8], sizes = [2, 8, 8], strides = [1, 1, 1]} : vector<2x8x32xf32> to vector<2x8x8xf32>
    %cst_62 = arith.constant dense<0xFF800000> : vector<2x8xf32>
    %155 = vector.multi_reduction <maximumf>, %154, %cst_62 [2] : vector<2x8x8xf32> to vector<2x8xf32>
    %156 = vector.shape_cast %155 : vector<2x8xf32> to vector<2x8x1xf32>
    %157 = vector.broadcast %156 : vector<2x8x1xf32> to vector<2x8x8xf32>
    %158 = arith.subf %154, %157 : vector<2x8x8xf32>
    %159 = math.exp %158 : vector<2x8x8xf32>
    %cst_63 = arith.constant dense<0.000000e+00> : vector<2x8xf32>
    %160 = vector.multi_reduction <add>, %159, %cst_63 [2] : vector<2x8x8xf32> to vector<2x8xf32>
    %161 = vector.shape_cast %160 : vector<2x8xf32> to vector<2x8x1xf32>
    %162 = vector.broadcast %161 : vector<2x8x1xf32> to vector<2x8x8xf32>
    %163 = arith.divf %159, %162 : vector<2x8x8xf32>
    %164 = vector.extract_strided_slice %143 {offsets = [0, 0, 16], sizes = [2, 8, 8], strides = [1, 1, 1]} : vector<2x8x32xf32> to vector<2x8x8xf32>
    %cst_64 = arith.constant dense<0xFF800000> : vector<2x8xf32>
    %165 = vector.multi_reduction <maximumf>, %164, %cst_64 [2] : vector<2x8x8xf32> to vector<2x8xf32>
    %166 = vector.shape_cast %165 : vector<2x8xf32> to vector<2x8x1xf32>
    %167 = vector.broadcast %166 : vector<2x8x1xf32> to vector<2x8x8xf32>
    %168 = arith.subf %164, %167 : vector<2x8x8xf32>
    %169 = math.exp %168 : vector<2x8x8xf32>
    %cst_65 = arith.constant dense<0.000000e+00> : vector<2x8xf32>
    %170 = vector.multi_reduction <add>, %169, %cst_65 [2] : vector<2x8x8xf32> to vector<2x8xf32>
    %171 = vector.shape_cast %170 : vector<2x8xf32> to vector<2x8x1xf32>
    %172 = vector.broadcast %171 : vector<2x8x1xf32> to vector<2x8x8xf32>
    %173 = arith.divf %169, %172 : vector<2x8x8xf32>
    %174 = vector.extract_strided_slice %143 {offsets = [0, 0, 24], sizes = [2, 8, 8], strides = [1, 1, 1]} : vector<2x8x32xf32> to vector<2x8x8xf32>
    %cst_66 = arith.constant dense<0xFF800000> : vector<2x8xf32>
    %175 = vector.multi_reduction <maximumf>, %174, %cst_66 [2] : vector<2x8x8xf32> to vector<2x8xf32>
    %176 = vector.shape_cast %175 : vector<2x8xf32> to vector<2x8x1xf32>
    %177 = vector.broadcast %176 : vector<2x8x1xf32> to vector<2x8x8xf32>
    %178 = arith.subf %174, %177 : vector<2x8x8xf32>
    %179 = math.exp %178 : vector<2x8x8xf32>
    %cst_67 = arith.constant dense<0.000000e+00> : vector<2x8xf32>
    %180 = vector.multi_reduction <add>, %179, %cst_67 [2] : vector<2x8x8xf32> to vector<2x8xf32>
    %181 = vector.shape_cast %180 : vector<2x8xf32> to vector<2x8x1xf32>
    %182 = vector.broadcast %181 : vector<2x8x1xf32> to vector<2x8x8xf32>
    %183 = arith.divf %179, %182 : vector<2x8x8xf32>
    %184 = tpu.concatenate %153, %163, %173, %183 in 2 : vector<2x8x8xf32>, vector<2x8x8xf32>, vector<2x8x8xf32>, vector<2x8x8xf32> -> vector<2x8x32xf32>
    %185 = arith.truncf %184 : vector<2x8x32xf32> to vector<2x8x32xbf16>
    "tpu.trace_start"() <{level = 10 : i32, message = "bqm,bmd->bqd"}> : () -> ()
    %cst_68 = arith.constant dense<0.000000e+00> : vector<2x8x32xf32>
    %186 = tpu.matmul %185, %140, %cst_68 {dimension_numbers = #tpu.dot_dimension_numbers<[2], [1], [1], [2], [0, 0, 0, 1, 1, 2], [0], [0]>} : vector<2x8x32xbf16>, vector<2x32x32xbf16>, vector<2x8x32xf32> -> vector<2x8x32xf32>
    "tpu.trace_stop"() : () -> ()
    %187 = vector.shape_cast %186 : vector<2x8x32xf32> to vector<16x32xf32>
    %188 = arith.truncf %187 : vector<16x32xf32> to vector<16x32xbf16>
    %c0_69 = arith.constant 0 : index
    %c0_70 = arith.constant 0 : index
    %c0_71 = arith.constant 0 : index
    %189 = vector.load %arg21[%c0_69, %c0_70, %c0_71] : memref<4x32x32xbf16, #tpu.memory_space<vmem>>, vector<1x32x32xbf16>
    %190 = vector.shape_cast %189 : vector<1x32x32xbf16> to vector<32x32xbf16>
    %cst_72 = arith.constant dense<0.000000e+00> : vector<16x32xf32>
    %191 = tpu.matmul %188, %190, %cst_72 {dimension_numbers = #tpu.dot_dimension_numbers<[1], [0], [0], [1], [0, 0, 1, 1], [], []>} : vector<16x32xbf16>, vector<32x32xbf16>, vector<16x32xf32> -> vector<16x32xf32>
    %192 = vector.shape_cast %71 : vector<32xf32> to vector<1x32xf32>
    %193 = vector.broadcast %192 : vector<1x32xf32> to vector<16x32xf32>
    %194 = arith.addf %191, %193 : vector<16x32xf32>
    %195 = arith.addf %37, %194 : vector<16x32xf32>
    %cst_73 = arith.constant dense<0.000000e+00> : vector<16xf32>
    %196 = vector.multi_reduction <add>, %195, %cst_73 [1] : vector<16x32xf32> to vector<16xf32>
    %197 = vector.shape_cast %196 : vector<16xf32> to vector<16x1xf32>
    %cst_74 = arith.constant 3.200000e+01 : f32
    %198 = vector.broadcast %cst_74 : f32 to vector<16x1xf32>
    %199 = arith.divf %197, %198 : vector<16x1xf32>
    %200 = vector.broadcast %199 : vector<16x1xf32> to vector<16x32xf32>
    %201 = arith.subf %195, %200 : vector<16x32xf32>
    %202 = arith.mulf %201, %201 : vector<16x32xf32>
    %cst_75 = arith.constant dense<0.000000e+00> : vector<16xf32>
    %203 = vector.multi_reduction <add>, %202, %cst_75 [1] : vector<16x32xf32> to vector<16xf32>
    %204 = vector.shape_cast %203 : vector<16xf32> to vector<16x1xf32>
    %cst_76 = arith.constant 3.200000e+01 : f32
    %205 = vector.broadcast %cst_76 : f32 to vector<16x1xf32>
    %206 = arith.divf %204, %205 : vector<16x1xf32>
    %207 = vector.broadcast %199 : vector<16x1xf32> to vector<16x32xf32>
    %208 = arith.subf %195, %207 : vector<16x32xf32>
    %cst_77 = arith.constant 9.99999974E-6 : f32
    %209 = vector.broadcast %cst_77 : f32 to vector<16x1xf32>
    %210 = arith.addf %206, %209 : vector<16x1xf32>
    %211 = math.rsqrt %210 : vector<16x1xf32>
    %212 = vector.broadcast %211 : vector<16x1xf32> to vector<16x32xf32>
    %213 = arith.mulf %208, %212 : vector<16x32xf32>
    %214 = vector.shape_cast %77 : vector<32xf32> to vector<1x32xf32>
    %215 = vector.broadcast %214 : vector<1x32xf32> to vector<16x32xf32>
    %216 = arith.mulf %213, %215 : vector<16x32xf32>
    %217 = vector.shape_cast %79 : vector<32xf32> to vector<1x32xf32>
    %218 = vector.broadcast %217 : vector<1x32xf32> to vector<16x32xf32>
    %219 = arith.addf %216, %218 : vector<16x32xf32>
    %220 = arith.truncf %219 : vector<16x32xf32> to vector<16x32xbf16>
    %c0_78 = arith.constant 0 : index
    %c0_79 = arith.constant 0 : index
    %c0_80 = arith.constant 0 : index
    %221 = vector.load %arg22[%c0_78, %c0_79, %c0_80] : memref<4x32x32xbf16, #tpu.memory_space<vmem>>, vector<1x32x32xbf16>
    %222 = vector.shape_cast %221 : vector<1x32x32xbf16> to vector<32x32xbf16>
    %cst_81 = arith.constant dense<0.000000e+00> : vector<16x32xf32>
    %223 = tpu.matmul %220, %222, %cst_81 {dimension_numbers = #tpu.dot_dimension_numbers<[1], [0], [0], [1], [0, 0, 1, 1], [], []>} : vector<16x32xbf16>, vector<32x32xbf16>, vector<16x32xf32> -> vector<16x32xf32>
    %224 = vector.shape_cast %73 : vector<32xf32> to vector<1x32xf32>
    %225 = vector.broadcast %224 : vector<1x32xf32> to vector<16x32xf32>
    %226 = arith.addf %223, %225 : vector<16x32xf32>
    %cst_82 = arith.constant 0.000000e+00 : f32
    %227 = vector.broadcast %cst_82 : f32 to vector<16x32xf32>
    %228 = arith.maximumf %226, %227 : vector<16x32xf32>
    %229 = arith.truncf %228 : vector<16x32xf32> to vector<16x32xbf16>
    %c0_83 = arith.constant 0 : index
    %c0_84 = arith.constant 0 : index
    %c0_85 = arith.constant 0 : index
    %230 = vector.load %arg23[%c0_83, %c0_84, %c0_85] : memref<4x32x32xbf16, #tpu.memory_space<vmem>>, vector<1x32x32xbf16>
    %231 = vector.shape_cast %230 : vector<1x32x32xbf16> to vector<32x32xbf16>
    %cst_86 = arith.constant dense<0.000000e+00> : vector<16x32xf32>
    %232 = tpu.matmul %229, %231, %cst_86 {dimension_numbers = #tpu.dot_dimension_numbers<[1], [0], [0], [1], [0, 0, 1, 1], [], []>} : vector<16x32xbf16>, vector<32x32xbf16>, vector<16x32xf32> -> vector<16x32xf32>
    %233 = vector.shape_cast %75 : vector<32xf32> to vector<1x32xf32>
    %234 = vector.broadcast %233 : vector<1x32xf32> to vector<16x32xf32>
    %235 = arith.addf %232, %234 : vector<16x32xf32>
    %236 = arith.addf %219, %235 : vector<16x32xf32>
    %cst_87 = arith.constant dense<0.000000e+00> : vector<16xf32>
    %237 = vector.multi_reduction <add>, %236, %cst_87 [1] : vector<16x32xf32> to vector<16xf32>
    %238 = vector.shape_cast %237 : vector<16xf32> to vector<16x1xf32>
    %cst_88 = arith.constant 3.200000e+01 : f32
    %239 = vector.broadcast %cst_88 : f32 to vector<16x1xf32>
    %240 = arith.divf %238, %239 : vector<16x1xf32>
    %241 = vector.broadcast %240 : vector<16x1xf32> to vector<16x32xf32>
    %242 = arith.subf %236, %241 : vector<16x32xf32>
    %243 = arith.mulf %242, %242 : vector<16x32xf32>
    %cst_89 = arith.constant dense<0.000000e+00> : vector<16xf32>
    %244 = vector.multi_reduction <add>, %243, %cst_89 [1] : vector<16x32xf32> to vector<16xf32>
    %245 = vector.shape_cast %244 : vector<16xf32> to vector<16x1xf32>
    %cst_90 = arith.constant 3.200000e+01 : f32
    %246 = vector.broadcast %cst_90 : f32 to vector<16x1xf32>
    %247 = arith.divf %245, %246 : vector<16x1xf32>
    %248 = vector.broadcast %240 : vector<16x1xf32> to vector<16x32xf32>
    %249 = arith.subf %236, %248 : vector<16x32xf32>
    %cst_91 = arith.constant 9.99999974E-6 : f32
    %250 = vector.broadcast %cst_91 : f32 to vector<16x1xf32>
    %251 = arith.addf %247, %250 : vector<16x1xf32>
    %252 = math.rsqrt %251 : vector<16x1xf32>
    %253 = vector.broadcast %252 : vector<16x1xf32> to vector<16x32xf32>
    %254 = arith.mulf %249, %253 : vector<16x32xf32>
    %255 = vector.shape_cast %81 : vector<32xf32> to vector<1x32xf32>
    %256 = vector.broadcast %255 : vector<1x32xf32> to vector<16x32xf32>
    %257 = arith.mulf %254, %256 : vector<16x32xf32>
    %258 = vector.shape_cast %83 : vector<32xf32> to vector<1x32xf32>
    %259 = vector.broadcast %258 : vector<1x32xf32> to vector<16x32xf32>
    %260 = arith.addf %257, %259 : vector<16x32xf32>
    %c8 = arith.constant 8 : index
    %c0_92 = arith.constant 0 : index
    %261 = vector.load %arg24[%c8, %c0_92] : memref<32x32xf32, #tpu.memory_space<vmem>>, vector<1x32xf32>
    %262 = vector.shape_cast %261 : vector<1x32xf32> to vector<32xf32>
    %c9 = arith.constant 9 : index
    %c0_93 = arith.constant 0 : index
    %263 = vector.load %arg24[%c9, %c0_93] : memref<32x32xf32, #tpu.memory_space<vmem>>, vector<1x32xf32>
    %264 = vector.shape_cast %263 : vector<1x32xf32> to vector<32xf32>
    %c10 = arith.constant 10 : index
    %c0_94 = arith.constant 0 : index
    %265 = vector.load %arg24[%c10, %c0_94] : memref<32x32xf32, #tpu.memory_space<vmem>>, vector<1x32xf32>
    %266 = vector.shape_cast %265 : vector<1x32xf32> to vector<32xf32>
    %c11 = arith.constant 11 : index
    %c0_95 = arith.constant 0 : index
    %267 = vector.load %arg24[%c11, %c0_95] : memref<32x32xf32, #tpu.memory_space<vmem>>, vector<1x32xf32>
    %268 = vector.shape_cast %267 : vector<1x32xf32> to vector<32xf32>
    %c12 = arith.constant 12 : index
    %c0_96 = arith.constant 0 : index
    %269 = vector.load %arg24[%c12, %c0_96] : memref<32x32xf32, #tpu.memory_space<vmem>>, vector<1x32xf32>
    %270 = vector.shape_cast %269 : vector<1x32xf32> to vector<32xf32>
    %c13 = arith.constant 13 : index
    %c0_97 = arith.constant 0 : index
    %271 = vector.load %arg24[%c13, %c0_97] : memref<32x32xf32, #tpu.memory_space<vmem>>, vector<1x32xf32>
    %272 = vector.shape_cast %271 : vector<1x32xf32> to vector<32xf32>
    %c14 = arith.constant 14 : index
    %c0_98 = arith.constant 0 : index
    %273 = vector.load %arg24[%c14, %c0_98] : memref<32x32xf32, #tpu.memory_space<vmem>>, vector<1x32xf32>
    %274 = vector.shape_cast %273 : vector<1x32xf32> to vector<32xf32>
    %c15 = arith.constant 15 : index
    %c0_99 = arith.constant 0 : index
    %275 = vector.load %arg24[%c15, %c0_99] : memref<32x32xf32, #tpu.memory_space<vmem>>, vector<1x32xf32>
    %276 = vector.shape_cast %275 : vector<1x32xf32> to vector<32xf32>
    %277 = arith.truncf %260 : vector<16x32xf32> to vector<16x32xbf16>
    %c1_100 = arith.constant 1 : index
    %c0_101 = arith.constant 0 : index
    %c0_102 = arith.constant 0 : index
    %278 = vector.load %arg16[%c1_100, %c0_101, %c0_102] : memref<4x32x32xbf16, #tpu.memory_space<vmem>>, vector<1x32x32xbf16>
    %279 = vector.shape_cast %278 : vector<1x32x32xbf16> to vector<32x32xbf16>
    %cst_103 = arith.constant dense<0.000000e+00> : vector<16x32xf32>
    %280 = tpu.matmul %277, %279, %cst_103 {dimension_numbers = #tpu.dot_dimension_numbers<[1], [0], [0], [1], [0, 0, 1, 1], [], []>} : vector<16x32xbf16>, vector<32x32xbf16>, vector<16x32xf32> -> vector<16x32xf32>
    %281 = vector.shape_cast %262 : vector<32xf32> to vector<1x32xf32>
    %282 = vector.broadcast %281 : vector<1x32xf32> to vector<16x32xf32>
    %283 = arith.addf %280, %282 : vector<16x32xf32>
    %284 = vector.shape_cast %283 : vector<16x32xf32> to vector<2x8x32xf32>
    %285 = arith.truncf %284 : vector<2x8x32xf32> to vector<2x8x32xbf16>
    %286 = vector.extract_strided_slice %59 {offsets = [0, 32], sizes = [16, 32], strides = [1, 1]} : vector<16x128xf32> to vector<16x32xf32>
    %287 = vector.shape_cast %286 : vector<16x32xf32> to vector<2x8x32xf32>
    %288 = arith.truncf %287 : vector<2x8x32xf32> to vector<2x8x32xbf16>
    %289 = vector.extract_strided_slice %64 {offsets = [0, 32], sizes = [16, 32], strides = [1, 1]} : vector<16x128xf32> to vector<16x32xf32>
    %290 = vector.shape_cast %289 : vector<16x32xf32> to vector<2x8x32xf32>
    %291 = arith.truncf %290 : vector<2x8x32xf32> to vector<2x8x32xbf16>
    %292 = vector.extract_strided_slice %65 {offsets = [0, 0], sizes = [1, 32], strides = [1, 1]} : vector<4x32xbf16> to vector<1x32xbf16>
    %293 = vector.shape_cast %292 : vector<1x32xbf16> to vector<32xbf16>
    %294 = vector.shape_cast %293 : vector<32xbf16> to vector<1x1x32xbf16>
    %295 = vector.broadcast %294 : vector<1x1x32xbf16> to vector<2x8x32xbf16>
    %296 = arith.mulf %288, %295 : vector<2x8x32xbf16>
    %297 = vector.extract_strided_slice %65 {offsets = [1, 0], sizes = [1, 32], strides = [1, 1]} : vector<4x32xbf16> to vector<1x32xbf16>
    %298 = vector.shape_cast %297 : vector<1x32xbf16> to vector<32xbf16>
    %299 = vector.shape_cast %298 : vector<32xbf16> to vector<1x1x32xbf16>
    %300 = vector.broadcast %299 : vector<1x1x32xbf16> to vector<2x8x32xbf16>
    %301 = arith.mulf %288, %300 : vector<2x8x32xbf16>
    %302 = vector.extract_strided_slice %65 {offsets = [2, 0], sizes = [1, 32], strides = [1, 1]} : vector<4x32xbf16> to vector<1x32xbf16>
    %303 = vector.shape_cast %302 : vector<1x32xbf16> to vector<32xbf16>
    %304 = vector.shape_cast %303 : vector<32xbf16> to vector<1x1x32xbf16>
    %305 = vector.broadcast %304 : vector<1x1x32xbf16> to vector<2x8x32xbf16>
    %306 = arith.mulf %288, %305 : vector<2x8x32xbf16>
    %307 = vector.extract_strided_slice %65 {offsets = [3, 0], sizes = [1, 32], strides = [1, 1]} : vector<4x32xbf16> to vector<1x32xbf16>
    %308 = vector.shape_cast %307 : vector<1x32xbf16> to vector<32xbf16>
    %309 = vector.shape_cast %308 : vector<32xbf16> to vector<1x1x32xbf16>
    %310 = vector.broadcast %309 : vector<1x1x32xbf16> to vector<2x8x32xbf16>
    %311 = arith.mulf %288, %310 : vector<2x8x32xbf16>
    %312 = tpu.concatenate %296, %301, %306, %311 in 1 : vector<2x8x32xbf16>, vector<2x8x32xbf16>, vector<2x8x32xbf16>, vector<2x8x32xbf16> -> vector<2x32x32xbf16>
    %313 = vector.extract_strided_slice %65 {offsets = [0, 0], sizes = [1, 32], strides = [1, 1]} : vector<4x32xbf16> to vector<1x32xbf16>
    %314 = vector.shape_cast %313 : vector<1x32xbf16> to vector<32xbf16>
    %315 = vector.shape_cast %314 : vector<32xbf16> to vector<1x1x32xbf16>
    %316 = vector.broadcast %315 : vector<1x1x32xbf16> to vector<2x8x32xbf16>
    %317 = arith.mulf %291, %316 : vector<2x8x32xbf16>
    %318 = vector.extract_strided_slice %65 {offsets = [1, 0], sizes = [1, 32], strides = [1, 1]} : vector<4x32xbf16> to vector<1x32xbf16>
    %319 = vector.shape_cast %318 : vector<1x32xbf16> to vector<32xbf16>
    %320 = vector.shape_cast %319 : vector<32xbf16> to vector<1x1x32xbf16>
    %321 = vector.broadcast %320 : vector<1x1x32xbf16> to vector<2x8x32xbf16>
    %322 = arith.mulf %291, %321 : vector<2x8x32xbf16>
    %323 = vector.extract_strided_slice %65 {offsets = [2, 0], sizes = [1, 32], strides = [1, 1]} : vector<4x32xbf16> to vector<1x32xbf16>
    %324 = vector.shape_cast %323 : vector<1x32xbf16> to vector<32xbf16>
    %325 = vector.shape_cast %324 : vector<32xbf16> to vector<1x1x32xbf16>
    %326 = vector.broadcast %325 : vector<1x1x32xbf16> to vector<2x8x32xbf16>
    %327 = arith.mulf %291, %326 : vector<2x8x32xbf16>
    %328 = vector.extract_strided_slice %65 {offsets = [3, 0], sizes = [1, 32], strides = [1, 1]} : vector<4x32xbf16> to vector<1x32xbf16>
    %329 = vector.shape_cast %328 : vector<1x32xbf16> to vector<32xbf16>
    %330 = vector.shape_cast %329 : vector<32xbf16> to vector<1x1x32xbf16>
    %331 = vector.broadcast %330 : vector<1x1x32xbf16> to vector<2x8x32xbf16>
    %332 = arith.mulf %291, %331 : vector<2x8x32xbf16>
    %333 = tpu.concatenate %317, %322, %327, %332 in 1 : vector<2x8x32xbf16>, vector<2x8x32xbf16>, vector<2x8x32xbf16>, vector<2x8x32xbf16> -> vector<2x32x32xbf16>
    "tpu.trace_start"() <{level = 10 : i32, message = "bqd,bmd->bqm"}> : () -> ()
    %cst_104 = arith.constant dense<0.000000e+00> : vector<2x8x32xf32>
    %334 = tpu.matmul %285, %312, %cst_104 {dimension_numbers = #tpu.dot_dimension_numbers<[2], [2], [1], [1], [0, 0, 0, 1, 1, 1], [0], [0]>} : vector<2x8x32xbf16>, vector<2x32x32xbf16>, vector<2x8x32xf32> -> vector<2x8x32xf32>
    "tpu.trace_stop"() : () -> ()
    %335 = vector.broadcast %67 : vector<1x1x32xf32> to vector<2x8x32xf32>
    %336 = arith.addf %334, %335 : vector<2x8x32xf32>
    %337 = vector.extract_strided_slice %336 {offsets = [0, 0, 0], sizes = [2, 8, 8], strides = [1, 1, 1]} : vector<2x8x32xf32> to vector<2x8x8xf32>
    %cst_105 = arith.constant dense<0xFF800000> : vector<2x8xf32>
    %338 = vector.multi_reduction <maximumf>, %337, %cst_105 [2] : vector<2x8x8xf32> to vector<2x8xf32>
    %339 = vector.shape_cast %338 : vector<2x8xf32> to vector<2x8x1xf32>
    %340 = vector.broadcast %339 : vector<2x8x1xf32> to vector<2x8x8xf32>
    %341 = arith.subf %337, %340 : vector<2x8x8xf32>
    %342 = math.exp %341 : vector<2x8x8xf32>
    %cst_106 = arith.constant dense<0.000000e+00> : vector<2x8xf32>
    %343 = vector.multi_reduction <add>, %342, %cst_106 [2] : vector<2x8x8xf32> to vector<2x8xf32>
    %344 = vector.shape_cast %343 : vector<2x8xf32> to vector<2x8x1xf32>
    %345 = vector.broadcast %344 : vector<2x8x1xf32> to vector<2x8x8xf32>
    %346 = arith.divf %342, %345 : vector<2x8x8xf32>
    %347 = vector.extract_strided_slice %336 {offsets = [0, 0, 8], sizes = [2, 8, 8], strides = [1, 1, 1]} : vector<2x8x32xf32> to vector<2x8x8xf32>
    %cst_107 = arith.constant dense<0xFF800000> : vector<2x8xf32>
    %348 = vector.multi_reduction <maximumf>, %347, %cst_107 [2] : vector<2x8x8xf32> to vector<2x8xf32>
    %349 = vector.shape_cast %348 : vector<2x8xf32> to vector<2x8x1xf32>
    %350 = vector.broadcast %349 : vector<2x8x1xf32> to vector<2x8x8xf32>
    %351 = arith.subf %347, %350 : vector<2x8x8xf32>
    %352 = math.exp %351 : vector<2x8x8xf32>
    %cst_108 = arith.constant dense<0.000000e+00> : vector<2x8xf32>
    %353 = vector.multi_reduction <add>, %352, %cst_108 [2] : vector<2x8x8xf32> to vector<2x8xf32>
    %354 = vector.shape_cast %353 : vector<2x8xf32> to vector<2x8x1xf32>
    %355 = vector.broadcast %354 : vector<2x8x1xf32> to vector<2x8x8xf32>
    %356 = arith.divf %352, %355 : vector<2x8x8xf32>
    %357 = vector.extract_strided_slice %336 {offsets = [0, 0, 16], sizes = [2, 8, 8], strides = [1, 1, 1]} : vector<2x8x32xf32> to vector<2x8x8xf32>
    %cst_109 = arith.constant dense<0xFF800000> : vector<2x8xf32>
    %358 = vector.multi_reduction <maximumf>, %357, %cst_109 [2] : vector<2x8x8xf32> to vector<2x8xf32>
    %359 = vector.shape_cast %358 : vector<2x8xf32> to vector<2x8x1xf32>
    %360 = vector.broadcast %359 : vector<2x8x1xf32> to vector<2x8x8xf32>
    %361 = arith.subf %357, %360 : vector<2x8x8xf32>
    %362 = math.exp %361 : vector<2x8x8xf32>
    %cst_110 = arith.constant dense<0.000000e+00> : vector<2x8xf32>
    %363 = vector.multi_reduction <add>, %362, %cst_110 [2] : vector<2x8x8xf32> to vector<2x8xf32>
    %364 = vector.shape_cast %363 : vector<2x8xf32> to vector<2x8x1xf32>
    %365 = vector.broadcast %364 : vector<2x8x1xf32> to vector<2x8x8xf32>
    %366 = arith.divf %362, %365 : vector<2x8x8xf32>
    %367 = vector.extract_strided_slice %336 {offsets = [0, 0, 24], sizes = [2, 8, 8], strides = [1, 1, 1]} : vector<2x8x32xf32> to vector<2x8x8xf32>
    %cst_111 = arith.constant dense<0xFF800000> : vector<2x8xf32>
    %368 = vector.multi_reduction <maximumf>, %367, %cst_111 [2] : vector<2x8x8xf32> to vector<2x8xf32>
    %369 = vector.shape_cast %368 : vector<2x8xf32> to vector<2x8x1xf32>
    %370 = vector.broadcast %369 : vector<2x8x1xf32> to vector<2x8x8xf32>
    %371 = arith.subf %367, %370 : vector<2x8x8xf32>
    %372 = math.exp %371 : vector<2x8x8xf32>
    %cst_112 = arith.constant dense<0.000000e+00> : vector<2x8xf32>
    %373 = vector.multi_reduction <add>, %372, %cst_112 [2] : vector<2x8x8xf32> to vector<2x8xf32>
    %374 = vector.shape_cast %373 : vector<2x8xf32> to vector<2x8x1xf32>
    %375 = vector.broadcast %374 : vector<2x8x1xf32> to vector<2x8x8xf32>
    %376 = arith.divf %372, %375 : vector<2x8x8xf32>
    %377 = tpu.concatenate %346, %356, %366, %376 in 2 : vector<2x8x8xf32>, vector<2x8x8xf32>, vector<2x8x8xf32>, vector<2x8x8xf32> -> vector<2x8x32xf32>
    %378 = arith.truncf %377 : vector<2x8x32xf32> to vector<2x8x32xbf16>
    "tpu.trace_start"() <{level = 10 : i32, message = "bqm,bmd->bqd"}> : () -> ()
    %cst_113 = arith.constant dense<0.000000e+00> : vector<2x8x32xf32>
    %379 = tpu.matmul %378, %333, %cst_113 {dimension_numbers = #tpu.dot_dimension_numbers<[2], [1], [1], [2], [0, 0, 0, 1, 1, 2], [0], [0]>} : vector<2x8x32xbf16>, vector<2x32x32xbf16>, vector<2x8x32xf32> -> vector<2x8x32xf32>
    "tpu.trace_stop"() : () -> ()
    %380 = vector.shape_cast %379 : vector<2x8x32xf32> to vector<16x32xf32>
    %381 = arith.truncf %380 : vector<16x32xf32> to vector<16x32xbf16>
    %c1_114 = arith.constant 1 : index
    %c0_115 = arith.constant 0 : index
    %c0_116 = arith.constant 0 : index
    %382 = vector.load %arg21[%c1_114, %c0_115, %c0_116] : memref<4x32x32xbf16, #tpu.memory_space<vmem>>, vector<1x32x32xbf16>
    %383 = vector.shape_cast %382 : vector<1x32x32xbf16> to vector<32x32xbf16>
    %cst_117 = arith.constant dense<0.000000e+00> : vector<16x32xf32>
    %384 = tpu.matmul %381, %383, %cst_117 {dimension_numbers = #tpu.dot_dimension_numbers<[1], [0], [0], [1], [0, 0, 1, 1], [], []>} : vector<16x32xbf16>, vector<32x32xbf16>, vector<16x32xf32> -> vector<16x32xf32>
    %385 = vector.shape_cast %264 : vector<32xf32> to vector<1x32xf32>
    %386 = vector.broadcast %385 : vector<1x32xf32> to vector<16x32xf32>
    %387 = arith.addf %384, %386 : vector<16x32xf32>
    %388 = arith.addf %260, %387 : vector<16x32xf32>
    %cst_118 = arith.constant dense<0.000000e+00> : vector<16xf32>
    %389 = vector.multi_reduction <add>, %388, %cst_118 [1] : vector<16x32xf32> to vector<16xf32>
    %390 = vector.shape_cast %389 : vector<16xf32> to vector<16x1xf32>
    %cst_119 = arith.constant 3.200000e+01 : f32
    %391 = vector.broadcast %cst_119 : f32 to vector<16x1xf32>
    %392 = arith.divf %390, %391 : vector<16x1xf32>
    %393 = vector.broadcast %392 : vector<16x1xf32> to vector<16x32xf32>
    %394 = arith.subf %388, %393 : vector<16x32xf32>
    %395 = arith.mulf %394, %394 : vector<16x32xf32>
    %cst_120 = arith.constant dense<0.000000e+00> : vector<16xf32>
    %396 = vector.multi_reduction <add>, %395, %cst_120 [1] : vector<16x32xf32> to vector<16xf32>
    %397 = vector.shape_cast %396 : vector<16xf32> to vector<16x1xf32>
    %cst_121 = arith.constant 3.200000e+01 : f32
    %398 = vector.broadcast %cst_121 : f32 to vector<16x1xf32>
    %399 = arith.divf %397, %398 : vector<16x1xf32>
    %400 = vector.broadcast %392 : vector<16x1xf32> to vector<16x32xf32>
    %401 = arith.subf %388, %400 : vector<16x32xf32>
    %cst_122 = arith.constant 9.99999974E-6 : f32
    %402 = vector.broadcast %cst_122 : f32 to vector<16x1xf32>
    %403 = arith.addf %399, %402 : vector<16x1xf32>
    %404 = math.rsqrt %403 : vector<16x1xf32>
    %405 = vector.broadcast %404 : vector<16x1xf32> to vector<16x32xf32>
    %406 = arith.mulf %401, %405 : vector<16x32xf32>
    %407 = vector.shape_cast %270 : vector<32xf32> to vector<1x32xf32>
    %408 = vector.broadcast %407 : vector<1x32xf32> to vector<16x32xf32>
    %409 = arith.mulf %406, %408 : vector<16x32xf32>
    %410 = vector.shape_cast %272 : vector<32xf32> to vector<1x32xf32>
    %411 = vector.broadcast %410 : vector<1x32xf32> to vector<16x32xf32>
    %412 = arith.addf %409, %411 : vector<16x32xf32>
    %413 = arith.truncf %412 : vector<16x32xf32> to vector<16x32xbf16>
    %c1_123 = arith.constant 1 : index
    %c0_124 = arith.constant 0 : index
    %c0_125 = arith.constant 0 : index
    %414 = vector.load %arg22[%c1_123, %c0_124, %c0_125] : memref<4x32x32xbf16, #tpu.memory_space<vmem>>, vector<1x32x32xbf16>
    %415 = vector.shape_cast %414 : vector<1x32x32xbf16> to vector<32x32xbf16>
    %cst_126 = arith.constant dense<0.000000e+00> : vector<16x32xf32>
    %416 = tpu.matmul %413, %415, %cst_126 {dimension_numbers = #tpu.dot_dimension_numbers<[1], [0], [0], [1], [0, 0, 1, 1], [], []>} : vector<16x32xbf16>, vector<32x32xbf16>, vector<16x32xf32> -> vector<16x32xf32>
    %417 = vector.shape_cast %266 : vector<32xf32> to vector<1x32xf32>
    %418 = vector.broadcast %417 : vector<1x32xf32> to vector<16x32xf32>
    %419 = arith.addf %416, %418 : vector<16x32xf32>
    %cst_127 = arith.constant 0.000000e+00 : f32
    %420 = vector.broadcast %cst_127 : f32 to vector<16x32xf32>
    %421 = arith.maximumf %419, %420 : vector<16x32xf32>
    %422 = arith.truncf %421 : vector<16x32xf32> to vector<16x32xbf16>
    %c1_128 = arith.constant 1 : index
    %c0_129 = arith.constant 0 : index
    %c0_130 = arith.constant 0 : index
    %423 = vector.load %arg23[%c1_128, %c0_129, %c0_130] : memref<4x32x32xbf16, #tpu.memory_space<vmem>>, vector<1x32x32xbf16>
    %424 = vector.shape_cast %423 : vector<1x32x32xbf16> to vector<32x32xbf16>
    %cst_131 = arith.constant dense<0.000000e+00> : vector<16x32xf32>
    %425 = tpu.matmul %422, %424, %cst_131 {dimension_numbers = #tpu.dot_dimension_numbers<[1], [0], [0], [1], [0, 0, 1, 1], [], []>} : vector<16x32xbf16>, vector<32x32xbf16>, vector<16x32xf32> -> vector<16x32xf32>
    %426 = vector.shape_cast %268 : vector<32xf32> to vector<1x32xf32>
    %427 = vector.broadcast %426 : vector<1x32xf32> to vector<16x32xf32>
    %428 = arith.addf %425, %427 : vector<16x32xf32>
    %429 = arith.addf %412, %428 : vector<16x32xf32>
    %cst_132 = arith.constant dense<0.000000e+00> : vector<16xf32>
    %430 = vector.multi_reduction <add>, %429, %cst_132 [1] : vector<16x32xf32> to vector<16xf32>
    %431 = vector.shape_cast %430 : vector<16xf32> to vector<16x1xf32>
    %cst_133 = arith.constant 3.200000e+01 : f32
    %432 = vector.broadcast %cst_133 : f32 to vector<16x1xf32>
    %433 = arith.divf %431, %432 : vector<16x1xf32>
    %434 = vector.broadcast %433 : vector<16x1xf32> to vector<16x32xf32>
    %435 = arith.subf %429, %434 : vector<16x32xf32>
    %436 = arith.mulf %435, %435 : vector<16x32xf32>
    %cst_134 = arith.constant dense<0.000000e+00> : vector<16xf32>
    %437 = vector.multi_reduction <add>, %436, %cst_134 [1] : vector<16x32xf32> to vector<16xf32>
    %438 = vector.shape_cast %437 : vector<16xf32> to vector<16x1xf32>
    %cst_135 = arith.constant 3.200000e+01 : f32
    %439 = vector.broadcast %cst_135 : f32 to vector<16x1xf32>
    %440 = arith.divf %438, %439 : vector<16x1xf32>
    %441 = vector.broadcast %433 : vector<16x1xf32> to vector<16x32xf32>
    %442 = arith.subf %429, %441 : vector<16x32xf32>
    %cst_136 = arith.constant 9.99999974E-6 : f32
    %443 = vector.broadcast %cst_136 : f32 to vector<16x1xf32>
    %444 = arith.addf %440, %443 : vector<16x1xf32>
    %445 = math.rsqrt %444 : vector<16x1xf32>
    %446 = vector.broadcast %445 : vector<16x1xf32> to vector<16x32xf32>
    %447 = arith.mulf %442, %446 : vector<16x32xf32>
    %448 = vector.shape_cast %274 : vector<32xf32> to vector<1x32xf32>
    %449 = vector.broadcast %448 : vector<1x32xf32> to vector<16x32xf32>
    %450 = arith.mulf %447, %449 : vector<16x32xf32>
    %451 = vector.shape_cast %276 : vector<32xf32> to vector<1x32xf32>
    %452 = vector.broadcast %451 : vector<1x32xf32> to vector<16x32xf32>
    %453 = arith.addf %450, %452 : vector<16x32xf32>
    %c16 = arith.constant 16 : index
    %c0_137 = arith.constant 0 : index
    %454 = vector.load %arg24[%c16, %c0_137] : memref<32x32xf32, #tpu.memory_space<vmem>>, vector<1x32xf32>
    %455 = vector.shape_cast %454 : vector<1x32xf32> to vector<32xf32>
    %c17 = arith.constant 17 : index
    %c0_138 = arith.constant 0 : index
    %456 = vector.load %arg24[%c17, %c0_138] : memref<32x32xf32, #tpu.memory_space<vmem>>, vector<1x32xf32>
    %457 = vector.shape_cast %456 : vector<1x32xf32> to vector<32xf32>
    %c18 = arith.constant 18 : index
    %c0_139 = arith.constant 0 : index
    %458 = vector.load %arg24[%c18, %c0_139] : memref<32x32xf32, #tpu.memory_space<vmem>>, vector<1x32xf32>
    %459 = vector.shape_cast %458 : vector<1x32xf32> to vector<32xf32>
    %c19 = arith.constant 19 : index
    %c0_140 = arith.constant 0 : index
    %460 = vector.load %arg24[%c19, %c0_140] : memref<32x32xf32, #tpu.memory_space<vmem>>, vector<1x32xf32>
    %461 = vector.shape_cast %460 : vector<1x32xf32> to vector<32xf32>
    %c20 = arith.constant 20 : index
    %c0_141 = arith.constant 0 : index
    %462 = vector.load %arg24[%c20, %c0_141] : memref<32x32xf32, #tpu.memory_space<vmem>>, vector<1x32xf32>
    %463 = vector.shape_cast %462 : vector<1x32xf32> to vector<32xf32>
    %c21 = arith.constant 21 : index
    %c0_142 = arith.constant 0 : index
    %464 = vector.load %arg24[%c21, %c0_142] : memref<32x32xf32, #tpu.memory_space<vmem>>, vector<1x32xf32>
    %465 = vector.shape_cast %464 : vector<1x32xf32> to vector<32xf32>
    %c22 = arith.constant 22 : index
    %c0_143 = arith.constant 0 : index
    %466 = vector.load %arg24[%c22, %c0_143] : memref<32x32xf32, #tpu.memory_space<vmem>>, vector<1x32xf32>
    %467 = vector.shape_cast %466 : vector<1x32xf32> to vector<32xf32>
    %c23 = arith.constant 23 : index
    %c0_144 = arith.constant 0 : index
    %468 = vector.load %arg24[%c23, %c0_144] : memref<32x32xf32, #tpu.memory_space<vmem>>, vector<1x32xf32>
    %469 = vector.shape_cast %468 : vector<1x32xf32> to vector<32xf32>
    %470 = arith.truncf %453 : vector<16x32xf32> to vector<16x32xbf16>
    %c2_145 = arith.constant 2 : index
    %c0_146 = arith.constant 0 : index
    %c0_147 = arith.constant 0 : index
    %471 = vector.load %arg16[%c2_145, %c0_146, %c0_147] : memref<4x32x32xbf16, #tpu.memory_space<vmem>>, vector<1x32x32xbf16>
    %472 = vector.shape_cast %471 : vector<1x32x32xbf16> to vector<32x32xbf16>
    %cst_148 = arith.constant dense<0.000000e+00> : vector<16x32xf32>
    %473 = tpu.matmul %470, %472, %cst_148 {dimension_numbers = #tpu.dot_dimension_numbers<[1], [0], [0], [1], [0, 0, 1, 1], [], []>} : vector<16x32xbf16>, vector<32x32xbf16>, vector<16x32xf32> -> vector<16x32xf32>
    %474 = vector.shape_cast %455 : vector<32xf32> to vector<1x32xf32>
    %475 = vector.broadcast %474 : vector<1x32xf32> to vector<16x32xf32>
    %476 = arith.addf %473, %475 : vector<16x32xf32>
    %477 = vector.shape_cast %476 : vector<16x32xf32> to vector<2x8x32xf32>
    %478 = arith.truncf %477 : vector<2x8x32xf32> to vector<2x8x32xbf16>
    %479 = vector.extract_strided_slice %59 {offsets = [0, 64], sizes = [16, 32], strides = [1, 1]} : vector<16x128xf32> to vector<16x32xf32>
    %480 = vector.shape_cast %479 : vector<16x32xf32> to vector<2x8x32xf32>
    %481 = arith.truncf %480 : vector<2x8x32xf32> to vector<2x8x32xbf16>
    %482 = vector.extract_strided_slice %64 {offsets = [0, 64], sizes = [16, 32], strides = [1, 1]} : vector<16x128xf32> to vector<16x32xf32>
    %483 = vector.shape_cast %482 : vector<16x32xf32> to vector<2x8x32xf32>
    %484 = arith.truncf %483 : vector<2x8x32xf32> to vector<2x8x32xbf16>
    %485 = vector.extract_strided_slice %65 {offsets = [0, 0], sizes = [1, 32], strides = [1, 1]} : vector<4x32xbf16> to vector<1x32xbf16>
    %486 = vector.shape_cast %485 : vector<1x32xbf16> to vector<32xbf16>
    %487 = vector.shape_cast %486 : vector<32xbf16> to vector<1x1x32xbf16>
    %488 = vector.broadcast %487 : vector<1x1x32xbf16> to vector<2x8x32xbf16>
    %489 = arith.mulf %481, %488 : vector<2x8x32xbf16>
    %490 = vector.extract_strided_slice %65 {offsets = [1, 0], sizes = [1, 32], strides = [1, 1]} : vector<4x32xbf16> to vector<1x32xbf16>
    %491 = vector.shape_cast %490 : vector<1x32xbf16> to vector<32xbf16>
    %492 = vector.shape_cast %491 : vector<32xbf16> to vector<1x1x32xbf16>
    %493 = vector.broadcast %492 : vector<1x1x32xbf16> to vector<2x8x32xbf16>
    %494 = arith.mulf %481, %493 : vector<2x8x32xbf16>
    %495 = vector.extract_strided_slice %65 {offsets = [2, 0], sizes = [1, 32], strides = [1, 1]} : vector<4x32xbf16> to vector<1x32xbf16>
    %496 = vector.shape_cast %495 : vector<1x32xbf16> to vector<32xbf16>
    %497 = vector.shape_cast %496 : vector<32xbf16> to vector<1x1x32xbf16>
    %498 = vector.broadcast %497 : vector<1x1x32xbf16> to vector<2x8x32xbf16>
    %499 = arith.mulf %481, %498 : vector<2x8x32xbf16>
    %500 = vector.extract_strided_slice %65 {offsets = [3, 0], sizes = [1, 32], strides = [1, 1]} : vector<4x32xbf16> to vector<1x32xbf16>
    %501 = vector.shape_cast %500 : vector<1x32xbf16> to vector<32xbf16>
    %502 = vector.shape_cast %501 : vector<32xbf16> to vector<1x1x32xbf16>
    %503 = vector.broadcast %502 : vector<1x1x32xbf16> to vector<2x8x32xbf16>
    %504 = arith.mulf %481, %503 : vector<2x8x32xbf16>
    %505 = tpu.concatenate %489, %494, %499, %504 in 1 : vector<2x8x32xbf16>, vector<2x8x32xbf16>, vector<2x8x32xbf16>, vector<2x8x32xbf16> -> vector<2x32x32xbf16>
    %506 = vector.extract_strided_slice %65 {offsets = [0, 0], sizes = [1, 32], strides = [1, 1]} : vector<4x32xbf16> to vector<1x32xbf16>
    %507 = vector.shape_cast %506 : vector<1x32xbf16> to vector<32xbf16>
    %508 = vector.shape_cast %507 : vector<32xbf16> to vector<1x1x32xbf16>
    %509 = vector.broadcast %508 : vector<1x1x32xbf16> to vector<2x8x32xbf16>
    %510 = arith.mulf %484, %509 : vector<2x8x32xbf16>
    %511 = vector.extract_strided_slice %65 {offsets = [1, 0], sizes = [1, 32], strides = [1, 1]} : vector<4x32xbf16> to vector<1x32xbf16>
    %512 = vector.shape_cast %511 : vector<1x32xbf16> to vector<32xbf16>
    %513 = vector.shape_cast %512 : vector<32xbf16> to vector<1x1x32xbf16>
    %514 = vector.broadcast %513 : vector<1x1x32xbf16> to vector<2x8x32xbf16>
    %515 = arith.mulf %484, %514 : vector<2x8x32xbf16>
    %516 = vector.extract_strided_slice %65 {offsets = [2, 0], sizes = [1, 32], strides = [1, 1]} : vector<4x32xbf16> to vector<1x32xbf16>
    %517 = vector.shape_cast %516 : vector<1x32xbf16> to vector<32xbf16>
    %518 = vector.shape_cast %517 : vector<32xbf16> to vector<1x1x32xbf16>
    %519 = vector.broadcast %518 : vector<1x1x32xbf16> to vector<2x8x32xbf16>
    %520 = arith.mulf %484, %519 : vector<2x8x32xbf16>
    %521 = vector.extract_strided_slice %65 {offsets = [3, 0], sizes = [1, 32], strides = [1, 1]} : vector<4x32xbf16> to vector<1x32xbf16>
    %522 = vector.shape_cast %521 : vector<1x32xbf16> to vector<32xbf16>
    %523 = vector.shape_cast %522 : vector<32xbf16> to vector<1x1x32xbf16>
    %524 = vector.broadcast %523 : vector<1x1x32xbf16> to vector<2x8x32xbf16>
    %525 = arith.mulf %484, %524 : vector<2x8x32xbf16>
    %526 = tpu.concatenate %510, %515, %520, %525 in 1 : vector<2x8x32xbf16>, vector<2x8x32xbf16>, vector<2x8x32xbf16>, vector<2x8x32xbf16> -> vector<2x32x32xbf16>
    "tpu.trace_start"() <{level = 10 : i32, message = "bqd,bmd->bqm"}> : () -> ()
    %cst_149 = arith.constant dense<0.000000e+00> : vector<2x8x32xf32>
    %527 = tpu.matmul %478, %505, %cst_149 {dimension_numbers = #tpu.dot_dimension_numbers<[2], [2], [1], [1], [0, 0, 0, 1, 1, 1], [0], [0]>} : vector<2x8x32xbf16>, vector<2x32x32xbf16>, vector<2x8x32xf32> -> vector<2x8x32xf32>
    "tpu.trace_stop"() : () -> ()
    %528 = vector.broadcast %67 : vector<1x1x32xf32> to vector<2x8x32xf32>
    %529 = arith.addf %527, %528 : vector<2x8x32xf32>
    %530 = vector.extract_strided_slice %529 {offsets = [0, 0, 0], sizes = [2, 8, 8], strides = [1, 1, 1]} : vector<2x8x32xf32> to vector<2x8x8xf32>
    %cst_150 = arith.constant dense<0xFF800000> : vector<2x8xf32>
    %531 = vector.multi_reduction <maximumf>, %530, %cst_150 [2] : vector<2x8x8xf32> to vector<2x8xf32>
    %532 = vector.shape_cast %531 : vector<2x8xf32> to vector<2x8x1xf32>
    %533 = vector.broadcast %532 : vector<2x8x1xf32> to vector<2x8x8xf32>
    %534 = arith.subf %530, %533 : vector<2x8x8xf32>
    %535 = math.exp %534 : vector<2x8x8xf32>
    %cst_151 = arith.constant dense<0.000000e+00> : vector<2x8xf32>
    %536 = vector.multi_reduction <add>, %535, %cst_151 [2] : vector<2x8x8xf32> to vector<2x8xf32>
    %537 = vector.shape_cast %536 : vector<2x8xf32> to vector<2x8x1xf32>
    %538 = vector.broadcast %537 : vector<2x8x1xf32> to vector<2x8x8xf32>
    %539 = arith.divf %535, %538 : vector<2x8x8xf32>
    %540 = vector.extract_strided_slice %529 {offsets = [0, 0, 8], sizes = [2, 8, 8], strides = [1, 1, 1]} : vector<2x8x32xf32> to vector<2x8x8xf32>
    %cst_152 = arith.constant dense<0xFF800000> : vector<2x8xf32>
    %541 = vector.multi_reduction <maximumf>, %540, %cst_152 [2] : vector<2x8x8xf32> to vector<2x8xf32>
    %542 = vector.shape_cast %541 : vector<2x8xf32> to vector<2x8x1xf32>
    %543 = vector.broadcast %542 : vector<2x8x1xf32> to vector<2x8x8xf32>
    %544 = arith.subf %540, %543 : vector<2x8x8xf32>
    %545 = math.exp %544 : vector<2x8x8xf32>
    %cst_153 = arith.constant dense<0.000000e+00> : vector<2x8xf32>
    %546 = vector.multi_reduction <add>, %545, %cst_153 [2] : vector<2x8x8xf32> to vector<2x8xf32>
    %547 = vector.shape_cast %546 : vector<2x8xf32> to vector<2x8x1xf32>
    %548 = vector.broadcast %547 : vector<2x8x1xf32> to vector<2x8x8xf32>
    %549 = arith.divf %545, %548 : vector<2x8x8xf32>
    %550 = vector.extract_strided_slice %529 {offsets = [0, 0, 16], sizes = [2, 8, 8], strides = [1, 1, 1]} : vector<2x8x32xf32> to vector<2x8x8xf32>
    %cst_154 = arith.constant dense<0xFF800000> : vector<2x8xf32>
    %551 = vector.multi_reduction <maximumf>, %550, %cst_154 [2] : vector<2x8x8xf32> to vector<2x8xf32>
    %552 = vector.shape_cast %551 : vector<2x8xf32> to vector<2x8x1xf32>
    %553 = vector.broadcast %552 : vector<2x8x1xf32> to vector<2x8x8xf32>
    %554 = arith.subf %550, %553 : vector<2x8x8xf32>
    %555 = math.exp %554 : vector<2x8x8xf32>
    %cst_155 = arith.constant dense<0.000000e+00> : vector<2x8xf32>
    %556 = vector.multi_reduction <add>, %555, %cst_155 [2] : vector<2x8x8xf32> to vector<2x8xf32>
    %557 = vector.shape_cast %556 : vector<2x8xf32> to vector<2x8x1xf32>
    %558 = vector.broadcast %557 : vector<2x8x1xf32> to vector<2x8x8xf32>
    %559 = arith.divf %555, %558 : vector<2x8x8xf32>
    %560 = vector.extract_strided_slice %529 {offsets = [0, 0, 24], sizes = [2, 8, 8], strides = [1, 1, 1]} : vector<2x8x32xf32> to vector<2x8x8xf32>
    %cst_156 = arith.constant dense<0xFF800000> : vector<2x8xf32>
    %561 = vector.multi_reduction <maximumf>, %560, %cst_156 [2] : vector<2x8x8xf32> to vector<2x8xf32>
    %562 = vector.shape_cast %561 : vector<2x8xf32> to vector<2x8x1xf32>
    %563 = vector.broadcast %562 : vector<2x8x1xf32> to vector<2x8x8xf32>
    %564 = arith.subf %560, %563 : vector<2x8x8xf32>
    %565 = math.exp %564 : vector<2x8x8xf32>
    %cst_157 = arith.constant dense<0.000000e+00> : vector<2x8xf32>
    %566 = vector.multi_reduction <add>, %565, %cst_157 [2] : vector<2x8x8xf32> to vector<2x8xf32>
    %567 = vector.shape_cast %566 : vector<2x8xf32> to vector<2x8x1xf32>
    %568 = vector.broadcast %567 : vector<2x8x1xf32> to vector<2x8x8xf32>
    %569 = arith.divf %565, %568 : vector<2x8x8xf32>
    %570 = tpu.concatenate %539, %549, %559, %569 in 2 : vector<2x8x8xf32>, vector<2x8x8xf32>, vector<2x8x8xf32>, vector<2x8x8xf32> -> vector<2x8x32xf32>
    %571 = arith.truncf %570 : vector<2x8x32xf32> to vector<2x8x32xbf16>
    "tpu.trace_start"() <{level = 10 : i32, message = "bqm,bmd->bqd"}> : () -> ()
    %cst_158 = arith.constant dense<0.000000e+00> : vector<2x8x32xf32>
    %572 = tpu.matmul %571, %526, %cst_158 {dimension_numbers = #tpu.dot_dimension_numbers<[2], [1], [1], [2], [0, 0, 0, 1, 1, 2], [0], [0]>} : vector<2x8x32xbf16>, vector<2x32x32xbf16>, vector<2x8x32xf32> -> vector<2x8x32xf32>
    "tpu.trace_stop"() : () -> ()
    %573 = vector.shape_cast %572 : vector<2x8x32xf32> to vector<16x32xf32>
    %574 = arith.truncf %573 : vector<16x32xf32> to vector<16x32xbf16>
    %c2_159 = arith.constant 2 : index
    %c0_160 = arith.constant 0 : index
    %c0_161 = arith.constant 0 : index
    %575 = vector.load %arg21[%c2_159, %c0_160, %c0_161] : memref<4x32x32xbf16, #tpu.memory_space<vmem>>, vector<1x32x32xbf16>
    %576 = vector.shape_cast %575 : vector<1x32x32xbf16> to vector<32x32xbf16>
    %cst_162 = arith.constant dense<0.000000e+00> : vector<16x32xf32>
    %577 = tpu.matmul %574, %576, %cst_162 {dimension_numbers = #tpu.dot_dimension_numbers<[1], [0], [0], [1], [0, 0, 1, 1], [], []>} : vector<16x32xbf16>, vector<32x32xbf16>, vector<16x32xf32> -> vector<16x32xf32>
    %578 = vector.shape_cast %457 : vector<32xf32> to vector<1x32xf32>
    %579 = vector.broadcast %578 : vector<1x32xf32> to vector<16x32xf32>
    %580 = arith.addf %577, %579 : vector<16x32xf32>
    %581 = arith.addf %453, %580 : vector<16x32xf32>
    %cst_163 = arith.constant dense<0.000000e+00> : vector<16xf32>
    %582 = vector.multi_reduction <add>, %581, %cst_163 [1] : vector<16x32xf32> to vector<16xf32>
    %583 = vector.shape_cast %582 : vector<16xf32> to vector<16x1xf32>
    %cst_164 = arith.constant 3.200000e+01 : f32
    %584 = vector.broadcast %cst_164 : f32 to vector<16x1xf32>
    %585 = arith.divf %583, %584 : vector<16x1xf32>
    %586 = vector.broadcast %585 : vector<16x1xf32> to vector<16x32xf32>
    %587 = arith.subf %581, %586 : vector<16x32xf32>
    %588 = arith.mulf %587, %587 : vector<16x32xf32>
    %cst_165 = arith.constant dense<0.000000e+00> : vector<16xf32>
    %589 = vector.multi_reduction <add>, %588, %cst_165 [1] : vector<16x32xf32> to vector<16xf32>
    %590 = vector.shape_cast %589 : vector<16xf32> to vector<16x1xf32>
    %cst_166 = arith.constant 3.200000e+01 : f32
    %591 = vector.broadcast %cst_166 : f32 to vector<16x1xf32>
    %592 = arith.divf %590, %591 : vector<16x1xf32>
    %593 = vector.broadcast %585 : vector<16x1xf32> to vector<16x32xf32>
    %594 = arith.subf %581, %593 : vector<16x32xf32>
    %cst_167 = arith.constant 9.99999974E-6 : f32
    %595 = vector.broadcast %cst_167 : f32 to vector<16x1xf32>
    %596 = arith.addf %592, %595 : vector<16x1xf32>
    %597 = math.rsqrt %596 : vector<16x1xf32>
    %598 = vector.broadcast %597 : vector<16x1xf32> to vector<16x32xf32>
    %599 = arith.mulf %594, %598 : vector<16x32xf32>
    %600 = vector.shape_cast %463 : vector<32xf32> to vector<1x32xf32>
    %601 = vector.broadcast %600 : vector<1x32xf32> to vector<16x32xf32>
    %602 = arith.mulf %599, %601 : vector<16x32xf32>
    %603 = vector.shape_cast %465 : vector<32xf32> to vector<1x32xf32>
    %604 = vector.broadcast %603 : vector<1x32xf32> to vector<16x32xf32>
    %605 = arith.addf %602, %604 : vector<16x32xf32>
    %606 = arith.truncf %605 : vector<16x32xf32> to vector<16x32xbf16>
    %c2_168 = arith.constant 2 : index
    %c0_169 = arith.constant 0 : index
    %c0_170 = arith.constant 0 : index
    %607 = vector.load %arg22[%c2_168, %c0_169, %c0_170] : memref<4x32x32xbf16, #tpu.memory_space<vmem>>, vector<1x32x32xbf16>
    %608 = vector.shape_cast %607 : vector<1x32x32xbf16> to vector<32x32xbf16>
    %cst_171 = arith.constant dense<0.000000e+00> : vector<16x32xf32>
    %609 = tpu.matmul %606, %608, %cst_171 {dimension_numbers = #tpu.dot_dimension_numbers<[1], [0], [0], [1], [0, 0, 1, 1], [], []>} : vector<16x32xbf16>, vector<32x32xbf16>, vector<16x32xf32> -> vector<16x32xf32>
    %610 = vector.shape_cast %459 : vector<32xf32> to vector<1x32xf32>
    %611 = vector.broadcast %610 : vector<1x32xf32> to vector<16x32xf32>
    %612 = arith.addf %609, %611 : vector<16x32xf32>
    %cst_172 = arith.constant 0.000000e+00 : f32
    %613 = vector.broadcast %cst_172 : f32 to vector<16x32xf32>
    %614 = arith.maximumf %612, %613 : vector<16x32xf32>
    %615 = arith.truncf %614 : vector<16x32xf32> to vector<16x32xbf16>
    %c2_173 = arith.constant 2 : index
    %c0_174 = arith.constant 0 : index
    %c0_175 = arith.constant 0 : index
    %616 = vector.load %arg23[%c2_173, %c0_174, %c0_175] : memref<4x32x32xbf16, #tpu.memory_space<vmem>>, vector<1x32x32xbf16>
    %617 = vector.shape_cast %616 : vector<1x32x32xbf16> to vector<32x32xbf16>
    %cst_176 = arith.constant dense<0.000000e+00> : vector<16x32xf32>
    %618 = tpu.matmul %615, %617, %cst_176 {dimension_numbers = #tpu.dot_dimension_numbers<[1], [0], [0], [1], [0, 0, 1, 1], [], []>} : vector<16x32xbf16>, vector<32x32xbf16>, vector<16x32xf32> -> vector<16x32xf32>
    %619 = vector.shape_cast %461 : vector<32xf32> to vector<1x32xf32>
    %620 = vector.broadcast %619 : vector<1x32xf32> to vector<16x32xf32>
    %621 = arith.addf %618, %620 : vector<16x32xf32>
    %622 = arith.addf %605, %621 : vector<16x32xf32>
    %cst_177 = arith.constant dense<0.000000e+00> : vector<16xf32>
    %623 = vector.multi_reduction <add>, %622, %cst_177 [1] : vector<16x32xf32> to vector<16xf32>
    %624 = vector.shape_cast %623 : vector<16xf32> to vector<16x1xf32>
    %cst_178 = arith.constant 3.200000e+01 : f32
    %625 = vector.broadcast %cst_178 : f32 to vector<16x1xf32>
    %626 = arith.divf %624, %625 : vector<16x1xf32>
    %627 = vector.broadcast %626 : vector<16x1xf32> to vector<16x32xf32>
    %628 = arith.subf %622, %627 : vector<16x32xf32>
    %629 = arith.mulf %628, %628 : vector<16x32xf32>
    %cst_179 = arith.constant dense<0.000000e+00> : vector<16xf32>
    %630 = vector.multi_reduction <add>, %629, %cst_179 [1] : vector<16x32xf32> to vector<16xf32>
    %631 = vector.shape_cast %630 : vector<16xf32> to vector<16x1xf32>
    %cst_180 = arith.constant 3.200000e+01 : f32
    %632 = vector.broadcast %cst_180 : f32 to vector<16x1xf32>
    %633 = arith.divf %631, %632 : vector<16x1xf32>
    %634 = vector.broadcast %626 : vector<16x1xf32> to vector<16x32xf32>
    %635 = arith.subf %622, %634 : vector<16x32xf32>
    %cst_181 = arith.constant 9.99999974E-6 : f32
    %636 = vector.broadcast %cst_181 : f32 to vector<16x1xf32>
    %637 = arith.addf %633, %636 : vector<16x1xf32>
    %638 = math.rsqrt %637 : vector<16x1xf32>
    %639 = vector.broadcast %638 : vector<16x1xf32> to vector<16x32xf32>
    %640 = arith.mulf %635, %639 : vector<16x32xf32>
    %641 = vector.shape_cast %467 : vector<32xf32> to vector<1x32xf32>
    %642 = vector.broadcast %641 : vector<1x32xf32> to vector<16x32xf32>
    %643 = arith.mulf %640, %642 : vector<16x32xf32>
    %644 = vector.shape_cast %469 : vector<32xf32> to vector<1x32xf32>
    %645 = vector.broadcast %644 : vector<1x32xf32> to vector<16x32xf32>
    %646 = arith.addf %643, %645 : vector<16x32xf32>
    %c24 = arith.constant 24 : index
    %c0_182 = arith.constant 0 : index
    %647 = vector.load %arg24[%c24, %c0_182] : memref<32x32xf32, #tpu.memory_space<vmem>>, vector<1x32xf32>
    %648 = vector.shape_cast %647 : vector<1x32xf32> to vector<32xf32>
    %c25 = arith.constant 25 : index
    %c0_183 = arith.constant 0 : index
    %649 = vector.load %arg24[%c25, %c0_183] : memref<32x32xf32, #tpu.memory_space<vmem>>, vector<1x32xf32>
    %650 = vector.shape_cast %649 : vector<1x32xf32> to vector<32xf32>
    %c26 = arith.constant 26 : index
    %c0_184 = arith.constant 0 : index
    %651 = vector.load %arg24[%c26, %c0_184] : memref<32x32xf32, #tpu.memory_space<vmem>>, vector<1x32xf32>
    %652 = vector.shape_cast %651 : vector<1x32xf32> to vector<32xf32>
    %c27 = arith.constant 27 : index
    %c0_185 = arith.constant 0 : index
    %653 = vector.load %arg24[%c27, %c0_185] : memref<32x32xf32, #tpu.memory_space<vmem>>, vector<1x32xf32>
    %654 = vector.shape_cast %653 : vector<1x32xf32> to vector<32xf32>
    %c28 = arith.constant 28 : index
    %c0_186 = arith.constant 0 : index
    %655 = vector.load %arg24[%c28, %c0_186] : memref<32x32xf32, #tpu.memory_space<vmem>>, vector<1x32xf32>
    %656 = vector.shape_cast %655 : vector<1x32xf32> to vector<32xf32>
    %c29 = arith.constant 29 : index
    %c0_187 = arith.constant 0 : index
    %657 = vector.load %arg24[%c29, %c0_187] : memref<32x32xf32, #tpu.memory_space<vmem>>, vector<1x32xf32>
    %658 = vector.shape_cast %657 : vector<1x32xf32> to vector<32xf32>
    %c30 = arith.constant 30 : index
    %c0_188 = arith.constant 0 : index
    %659 = vector.load %arg24[%c30, %c0_188] : memref<32x32xf32, #tpu.memory_space<vmem>>, vector<1x32xf32>
    %660 = vector.shape_cast %659 : vector<1x32xf32> to vector<32xf32>
    %c31 = arith.constant 31 : index
    %c0_189 = arith.constant 0 : index
    %661 = vector.load %arg24[%c31, %c0_189] : memref<32x32xf32, #tpu.memory_space<vmem>>, vector<1x32xf32>
    %662 = vector.shape_cast %661 : vector<1x32xf32> to vector<32xf32>
    %663 = arith.truncf %646 : vector<16x32xf32> to vector<16x32xbf16>
    %c3_190 = arith.constant 3 : index
    %c0_191 = arith.constant 0 : index
    %c0_192 = arith.constant 0 : index
    %664 = vector.load %arg16[%c3_190, %c0_191, %c0_192] : memref<4x32x32xbf16, #tpu.memory_space<vmem>>, vector<1x32x32xbf16>
    %665 = vector.shape_cast %664 : vector<1x32x32xbf16> to vector<32x32xbf16>
    %cst_193 = arith.constant dense<0.000000e+00> : vector<16x32xf32>
    %666 = tpu.matmul %663, %665, %cst_193 {dimension_numbers = #tpu.dot_dimension_numbers<[1], [0], [0], [1], [0, 0, 1, 1], [], []>} : vector<16x32xbf16>, vector<32x32xbf16>, vector<16x32xf32> -> vector<16x32xf32>
    %667 = vector.shape_cast %648 : vector<32xf32> to vector<1x32xf32>
    %668 = vector.broadcast %667 : vector<1x32xf32> to vector<16x32xf32>
    %669 = arith.addf %666, %668 : vector<16x32xf32>
    %670 = vector.shape_cast %669 : vector<16x32xf32> to vector<2x8x32xf32>
    %671 = arith.truncf %670 : vector<2x8x32xf32> to vector<2x8x32xbf16>
    %672 = vector.extract_strided_slice %59 {offsets = [0, 96], sizes = [16, 32], strides = [1, 1]} : vector<16x128xf32> to vector<16x32xf32>
    %673 = vector.shape_cast %672 : vector<16x32xf32> to vector<2x8x32xf32>
    %674 = arith.truncf %673 : vector<2x8x32xf32> to vector<2x8x32xbf16>
    %675 = vector.extract_strided_slice %64 {offsets = [0, 96], sizes = [16, 32], strides = [1, 1]} : vector<16x128xf32> to vector<16x32xf32>
    %676 = vector.shape_cast %675 : vector<16x32xf32> to vector<2x8x32xf32>
    %677 = arith.truncf %676 : vector<2x8x32xf32> to vector<2x8x32xbf16>
    %678 = vector.extract_strided_slice %65 {offsets = [0, 0], sizes = [1, 32], strides = [1, 1]} : vector<4x32xbf16> to vector<1x32xbf16>
    %679 = vector.shape_cast %678 : vector<1x32xbf16> to vector<32xbf16>
    %680 = vector.shape_cast %679 : vector<32xbf16> to vector<1x1x32xbf16>
    %681 = vector.broadcast %680 : vector<1x1x32xbf16> to vector<2x8x32xbf16>
    %682 = arith.mulf %674, %681 : vector<2x8x32xbf16>
    %683 = vector.extract_strided_slice %65 {offsets = [1, 0], sizes = [1, 32], strides = [1, 1]} : vector<4x32xbf16> to vector<1x32xbf16>
    %684 = vector.shape_cast %683 : vector<1x32xbf16> to vector<32xbf16>
    %685 = vector.shape_cast %684 : vector<32xbf16> to vector<1x1x32xbf16>
    %686 = vector.broadcast %685 : vector<1x1x32xbf16> to vector<2x8x32xbf16>
    %687 = arith.mulf %674, %686 : vector<2x8x32xbf16>
    %688 = vector.extract_strided_slice %65 {offsets = [2, 0], sizes = [1, 32], strides = [1, 1]} : vector<4x32xbf16> to vector<1x32xbf16>
    %689 = vector.shape_cast %688 : vector<1x32xbf16> to vector<32xbf16>
    %690 = vector.shape_cast %689 : vector<32xbf16> to vector<1x1x32xbf16>
    %691 = vector.broadcast %690 : vector<1x1x32xbf16> to vector<2x8x32xbf16>
    %692 = arith.mulf %674, %691 : vector<2x8x32xbf16>
    %693 = vector.extract_strided_slice %65 {offsets = [3, 0], sizes = [1, 32], strides = [1, 1]} : vector<4x32xbf16> to vector<1x32xbf16>
    %694 = vector.shape_cast %693 : vector<1x32xbf16> to vector<32xbf16>
    %695 = vector.shape_cast %694 : vector<32xbf16> to vector<1x1x32xbf16>
    %696 = vector.broadcast %695 : vector<1x1x32xbf16> to vector<2x8x32xbf16>
    %697 = arith.mulf %674, %696 : vector<2x8x32xbf16>
    %698 = tpu.concatenate %682, %687, %692, %697 in 1 : vector<2x8x32xbf16>, vector<2x8x32xbf16>, vector<2x8x32xbf16>, vector<2x8x32xbf16> -> vector<2x32x32xbf16>
    %699 = vector.extract_strided_slice %65 {offsets = [0, 0], sizes = [1, 32], strides = [1, 1]} : vector<4x32xbf16> to vector<1x32xbf16>
    %700 = vector.shape_cast %699 : vector<1x32xbf16> to vector<32xbf16>
    %701 = vector.shape_cast %700 : vector<32xbf16> to vector<1x1x32xbf16>
    %702 = vector.broadcast %701 : vector<1x1x32xbf16> to vector<2x8x32xbf16>
    %703 = arith.mulf %677, %702 : vector<2x8x32xbf16>
    %704 = vector.extract_strided_slice %65 {offsets = [1, 0], sizes = [1, 32], strides = [1, 1]} : vector<4x32xbf16> to vector<1x32xbf16>
    %705 = vector.shape_cast %704 : vector<1x32xbf16> to vector<32xbf16>
    %706 = vector.shape_cast %705 : vector<32xbf16> to vector<1x1x32xbf16>
    %707 = vector.broadcast %706 : vector<1x1x32xbf16> to vector<2x8x32xbf16>
    %708 = arith.mulf %677, %707 : vector<2x8x32xbf16>
    %709 = vector.extract_strided_slice %65 {offsets = [2, 0], sizes = [1, 32], strides = [1, 1]} : vector<4x32xbf16> to vector<1x32xbf16>
    %710 = vector.shape_cast %709 : vector<1x32xbf16> to vector<32xbf16>
    %711 = vector.shape_cast %710 : vector<32xbf16> to vector<1x1x32xbf16>
    %712 = vector.broadcast %711 : vector<1x1x32xbf16> to vector<2x8x32xbf16>
    %713 = arith.mulf %677, %712 : vector<2x8x32xbf16>
    %714 = vector.extract_strided_slice %65 {offsets = [3, 0], sizes = [1, 32], strides = [1, 1]} : vector<4x32xbf16> to vector<1x32xbf16>
    %715 = vector.shape_cast %714 : vector<1x32xbf16> to vector<32xbf16>
    %716 = vector.shape_cast %715 : vector<32xbf16> to vector<1x1x32xbf16>
    %717 = vector.broadcast %716 : vector<1x1x32xbf16> to vector<2x8x32xbf16>
    %718 = arith.mulf %677, %717 : vector<2x8x32xbf16>
    %719 = tpu.concatenate %703, %708, %713, %718 in 1 : vector<2x8x32xbf16>, vector<2x8x32xbf16>, vector<2x8x32xbf16>, vector<2x8x32xbf16> -> vector<2x32x32xbf16>
    "tpu.trace_start"() <{level = 10 : i32, message = "bqd,bmd->bqm"}> : () -> ()
    %cst_194 = arith.constant dense<0.000000e+00> : vector<2x8x32xf32>
    %720 = tpu.matmul %671, %698, %cst_194 {dimension_numbers = #tpu.dot_dimension_numbers<[2], [2], [1], [1], [0, 0, 0, 1, 1, 1], [0], [0]>} : vector<2x8x32xbf16>, vector<2x32x32xbf16>, vector<2x8x32xf32> -> vector<2x8x32xf32>
    "tpu.trace_stop"() : () -> ()
    %721 = vector.broadcast %67 : vector<1x1x32xf32> to vector<2x8x32xf32>
    %722 = arith.addf %720, %721 : vector<2x8x32xf32>
    %723 = vector.extract_strided_slice %722 {offsets = [0, 0, 0], sizes = [2, 8, 8], strides = [1, 1, 1]} : vector<2x8x32xf32> to vector<2x8x8xf32>
    %cst_195 = arith.constant dense<0xFF800000> : vector<2x8xf32>
    %724 = vector.multi_reduction <maximumf>, %723, %cst_195 [2] : vector<2x8x8xf32> to vector<2x8xf32>
    %725 = vector.shape_cast %724 : vector<2x8xf32> to vector<2x8x1xf32>
    %726 = vector.broadcast %725 : vector<2x8x1xf32> to vector<2x8x8xf32>
    %727 = arith.subf %723, %726 : vector<2x8x8xf32>
    %728 = math.exp %727 : vector<2x8x8xf32>
    %cst_196 = arith.constant dense<0.000000e+00> : vector<2x8xf32>
    %729 = vector.multi_reduction <add>, %728, %cst_196 [2] : vector<2x8x8xf32> to vector<2x8xf32>
    %730 = vector.shape_cast %729 : vector<2x8xf32> to vector<2x8x1xf32>
    %731 = vector.broadcast %730 : vector<2x8x1xf32> to vector<2x8x8xf32>
    %732 = arith.divf %728, %731 : vector<2x8x8xf32>
    %733 = vector.extract_strided_slice %722 {offsets = [0, 0, 8], sizes = [2, 8, 8], strides = [1, 1, 1]} : vector<2x8x32xf32> to vector<2x8x8xf32>
    %cst_197 = arith.constant dense<0xFF800000> : vector<2x8xf32>
    %734 = vector.multi_reduction <maximumf>, %733, %cst_197 [2] : vector<2x8x8xf32> to vector<2x8xf32>
    %735 = vector.shape_cast %734 : vector<2x8xf32> to vector<2x8x1xf32>
    %736 = vector.broadcast %735 : vector<2x8x1xf32> to vector<2x8x8xf32>
    %737 = arith.subf %733, %736 : vector<2x8x8xf32>
    %738 = math.exp %737 : vector<2x8x8xf32>
    %cst_198 = arith.constant dense<0.000000e+00> : vector<2x8xf32>
    %739 = vector.multi_reduction <add>, %738, %cst_198 [2] : vector<2x8x8xf32> to vector<2x8xf32>
    %740 = vector.shape_cast %739 : vector<2x8xf32> to vector<2x8x1xf32>
    %741 = vector.broadcast %740 : vector<2x8x1xf32> to vector<2x8x8xf32>
    %742 = arith.divf %738, %741 : vector<2x8x8xf32>
    %743 = vector.extract_strided_slice %722 {offsets = [0, 0, 16], sizes = [2, 8, 8], strides = [1, 1, 1]} : vector<2x8x32xf32> to vector<2x8x8xf32>
    %cst_199 = arith.constant dense<0xFF800000> : vector<2x8xf32>
    %744 = vector.multi_reduction <maximumf>, %743, %cst_199 [2] : vector<2x8x8xf32> to vector<2x8xf32>
    %745 = vector.shape_cast %744 : vector<2x8xf32> to vector<2x8x1xf32>
    %746 = vector.broadcast %745 : vector<2x8x1xf32> to vector<2x8x8xf32>
    %747 = arith.subf %743, %746 : vector<2x8x8xf32>
    %748 = math.exp %747 : vector<2x8x8xf32>
    %cst_200 = arith.constant dense<0.000000e+00> : vector<2x8xf32>
    %749 = vector.multi_reduction <add>, %748, %cst_200 [2] : vector<2x8x8xf32> to vector<2x8xf32>
    %750 = vector.shape_cast %749 : vector<2x8xf32> to vector<2x8x1xf32>
    %751 = vector.broadcast %750 : vector<2x8x1xf32> to vector<2x8x8xf32>
    %752 = arith.divf %748, %751 : vector<2x8x8xf32>
    %753 = vector.extract_strided_slice %722 {offsets = [0, 0, 24], sizes = [2, 8, 8], strides = [1, 1, 1]} : vector<2x8x32xf32> to vector<2x8x8xf32>
    %cst_201 = arith.constant dense<0xFF800000> : vector<2x8xf32>
    %754 = vector.multi_reduction <maximumf>, %753, %cst_201 [2] : vector<2x8x8xf32> to vector<2x8xf32>
    %755 = vector.shape_cast %754 : vector<2x8xf32> to vector<2x8x1xf32>
    %756 = vector.broadcast %755 : vector<2x8x1xf32> to vector<2x8x8xf32>
    %757 = arith.subf %753, %756 : vector<2x8x8xf32>
    %758 = math.exp %757 : vector<2x8x8xf32>
    %cst_202 = arith.constant dense<0.000000e+00> : vector<2x8xf32>
    %759 = vector.multi_reduction <add>, %758, %cst_202 [2] : vector<2x8x8xf32> to vector<2x8xf32>
    %760 = vector.shape_cast %759 : vector<2x8xf32> to vector<2x8x1xf32>
    %761 = vector.broadcast %760 : vector<2x8x1xf32> to vector<2x8x8xf32>
    %762 = arith.divf %758, %761 : vector<2x8x8xf32>
    %763 = tpu.concatenate %732, %742, %752, %762 in 2 : vector<2x8x8xf32>, vector<2x8x8xf32>, vector<2x8x8xf32>, vector<2x8x8xf32> -> vector<2x8x32xf32>
    %764 = arith.truncf %763 : vector<2x8x32xf32> to vector<2x8x32xbf16>
    "tpu.trace_start"() <{level = 10 : i32, message = "bqm,bmd->bqd"}> : () -> ()
    %cst_203 = arith.constant dense<0.000000e+00> : vector<2x8x32xf32>
    %765 = tpu.matmul %764, %719, %cst_203 {dimension_numbers = #tpu.dot_dimension_numbers<[2], [1], [1], [2], [0, 0, 0, 1, 1, 2], [0], [0]>} : vector<2x8x32xbf16>, vector<2x32x32xbf16>, vector<2x8x32xf32> -> vector<2x8x32xf32>
    "tpu.trace_stop"() : () -> ()
    %766 = vector.shape_cast %765 : vector<2x8x32xf32> to vector<16x32xf32>
    %767 = arith.truncf %766 : vector<16x32xf32> to vector<16x32xbf16>
    %c3_204 = arith.constant 3 : index
    %c0_205 = arith.constant 0 : index
    %c0_206 = arith.constant 0 : index
    %768 = vector.load %arg21[%c3_204, %c0_205, %c0_206] : memref<4x32x32xbf16, #tpu.memory_space<vmem>>, vector<1x32x32xbf16>
    %769 = vector.shape_cast %768 : vector<1x32x32xbf16> to vector<32x32xbf16>
    %cst_207 = arith.constant dense<0.000000e+00> : vector<16x32xf32>
    %770 = tpu.matmul %767, %769, %cst_207 {dimension_numbers = #tpu.dot_dimension_numbers<[1], [0], [0], [1], [0, 0, 1, 1], [], []>} : vector<16x32xbf16>, vector<32x32xbf16>, vector<16x32xf32> -> vector<16x32xf32>
    %771 = vector.shape_cast %650 : vector<32xf32> to vector<1x32xf32>
    %772 = vector.broadcast %771 : vector<1x32xf32> to vector<16x32xf32>
    %773 = arith.addf %770, %772 : vector<16x32xf32>
    %774 = arith.addf %646, %773 : vector<16x32xf32>
    %cst_208 = arith.constant dense<0.000000e+00> : vector<16xf32>
    %775 = vector.multi_reduction <add>, %774, %cst_208 [1] : vector<16x32xf32> to vector<16xf32>
    %776 = vector.shape_cast %775 : vector<16xf32> to vector<16x1xf32>
    %cst_209 = arith.constant 3.200000e+01 : f32
    %777 = vector.broadcast %cst_209 : f32 to vector<16x1xf32>
    %778 = arith.divf %776, %777 : vector<16x1xf32>
    %779 = vector.broadcast %778 : vector<16x1xf32> to vector<16x32xf32>
    %780 = arith.subf %774, %779 : vector<16x32xf32>
    %781 = arith.mulf %780, %780 : vector<16x32xf32>
    %cst_210 = arith.constant dense<0.000000e+00> : vector<16xf32>
    %782 = vector.multi_reduction <add>, %781, %cst_210 [1] : vector<16x32xf32> to vector<16xf32>
    %783 = vector.shape_cast %782 : vector<16xf32> to vector<16x1xf32>
    %cst_211 = arith.constant 3.200000e+01 : f32
    %784 = vector.broadcast %cst_211 : f32 to vector<16x1xf32>
    %785 = arith.divf %783, %784 : vector<16x1xf32>
    %786 = vector.broadcast %778 : vector<16x1xf32> to vector<16x32xf32>
    %787 = arith.subf %774, %786 : vector<16x32xf32>
    %cst_212 = arith.constant 9.99999974E-6 : f32
    %788 = vector.broadcast %cst_212 : f32 to vector<16x1xf32>
    %789 = arith.addf %785, %788 : vector<16x1xf32>
    %790 = math.rsqrt %789 : vector<16x1xf32>
    %791 = vector.broadcast %790 : vector<16x1xf32> to vector<16x32xf32>
    %792 = arith.mulf %787, %791 : vector<16x32xf32>
    %793 = vector.shape_cast %656 : vector<32xf32> to vector<1x32xf32>
    %794 = vector.broadcast %793 : vector<1x32xf32> to vector<16x32xf32>
    %795 = arith.mulf %792, %794 : vector<16x32xf32>
    %796 = vector.shape_cast %658 : vector<32xf32> to vector<1x32xf32>
    %797 = vector.broadcast %796 : vector<1x32xf32> to vector<16x32xf32>
    %798 = arith.addf %795, %797 : vector<16x32xf32>
    %799 = arith.truncf %798 : vector<16x32xf32> to vector<16x32xbf16>
    %c3_213 = arith.constant 3 : index
    %c0_214 = arith.constant 0 : index
    %c0_215 = arith.constant 0 : index
    %800 = vector.load %arg22[%c3_213, %c0_214, %c0_215] : memref<4x32x32xbf16, #tpu.memory_space<vmem>>, vector<1x32x32xbf16>
    %801 = vector.shape_cast %800 : vector<1x32x32xbf16> to vector<32x32xbf16>
    %cst_216 = arith.constant dense<0.000000e+00> : vector<16x32xf32>
    %802 = tpu.matmul %799, %801, %cst_216 {dimension_numbers = #tpu.dot_dimension_numbers<[1], [0], [0], [1], [0, 0, 1, 1], [], []>} : vector<16x32xbf16>, vector<32x32xbf16>, vector<16x32xf32> -> vector<16x32xf32>
    %803 = vector.shape_cast %652 : vector<32xf32> to vector<1x32xf32>
    %804 = vector.broadcast %803 : vector<1x32xf32> to vector<16x32xf32>
    %805 = arith.addf %802, %804 : vector<16x32xf32>
    %cst_217 = arith.constant 0.000000e+00 : f32
    %806 = vector.broadcast %cst_217 : f32 to vector<16x32xf32>
    %807 = arith.maximumf %805, %806 : vector<16x32xf32>
    %808 = arith.truncf %807 : vector<16x32xf32> to vector<16x32xbf16>
    %c3_218 = arith.constant 3 : index
    %c0_219 = arith.constant 0 : index
    %c0_220 = arith.constant 0 : index
    %809 = vector.load %arg23[%c3_218, %c0_219, %c0_220] : memref<4x32x32xbf16, #tpu.memory_space<vmem>>, vector<1x32x32xbf16>
    %810 = vector.shape_cast %809 : vector<1x32x32xbf16> to vector<32x32xbf16>
    %cst_221 = arith.constant dense<0.000000e+00> : vector<16x32xf32>
    %811 = tpu.matmul %808, %810, %cst_221 {dimension_numbers = #tpu.dot_dimension_numbers<[1], [0], [0], [1], [0, 0, 1, 1], [], []>} : vector<16x32xbf16>, vector<32x32xbf16>, vector<16x32xf32> -> vector<16x32xf32>
    %812 = vector.shape_cast %654 : vector<32xf32> to vector<1x32xf32>
    %813 = vector.broadcast %812 : vector<1x32xf32> to vector<16x32xf32>
    %814 = arith.addf %811, %813 : vector<16x32xf32>
    %815 = arith.addf %798, %814 : vector<16x32xf32>
    %cst_222 = arith.constant dense<0.000000e+00> : vector<16xf32>
    %816 = vector.multi_reduction <add>, %815, %cst_222 [1] : vector<16x32xf32> to vector<16xf32>
    %817 = vector.shape_cast %816 : vector<16xf32> to vector<16x1xf32>
    %cst_223 = arith.constant 3.200000e+01 : f32
    %818 = vector.broadcast %cst_223 : f32 to vector<16x1xf32>
    %819 = arith.divf %817, %818 : vector<16x1xf32>
    %820 = vector.broadcast %819 : vector<16x1xf32> to vector<16x32xf32>
    %821 = arith.subf %815, %820 : vector<16x32xf32>
    %822 = arith.mulf %821, %821 : vector<16x32xf32>
    %cst_224 = arith.constant dense<0.000000e+00> : vector<16xf32>
    %823 = vector.multi_reduction <add>, %822, %cst_224 [1] : vector<16x32xf32> to vector<16xf32>
    %824 = vector.shape_cast %823 : vector<16xf32> to vector<16x1xf32>
    %cst_225 = arith.constant 3.200000e+01 : f32
    %825 = vector.broadcast %cst_225 : f32 to vector<16x1xf32>
    %826 = arith.divf %824, %825 : vector<16x1xf32>
    %827 = vector.broadcast %819 : vector<16x1xf32> to vector<16x32xf32>
    %828 = arith.subf %815, %827 : vector<16x32xf32>
    %cst_226 = arith.constant 9.99999974E-6 : f32
    %829 = vector.broadcast %cst_226 : f32 to vector<16x1xf32>
    %830 = arith.addf %826, %829 : vector<16x1xf32>
    %831 = math.rsqrt %830 : vector<16x1xf32>
    %832 = vector.broadcast %831 : vector<16x1xf32> to vector<16x32xf32>
    %833 = arith.mulf %828, %832 : vector<16x32xf32>
    %834 = vector.shape_cast %660 : vector<32xf32> to vector<1x32xf32>
    %835 = vector.broadcast %834 : vector<1x32xf32> to vector<16x32xf32>
    %836 = arith.mulf %833, %835 : vector<16x32xf32>
    %837 = vector.shape_cast %662 : vector<32xf32> to vector<1x32xf32>
    %838 = vector.broadcast %837 : vector<1x32xf32> to vector<16x32xf32>
    %839 = arith.addf %836, %838 : vector<16x32xf32>
    %840 = arith.addf %37, %839 : vector<16x32xf32>
    %841 = vector.shape_cast %840 : vector<16x32xf32> to vector<2x8x32xf32>
    %c0_227 = arith.constant 0 : index
    %c0_228 = arith.constant 0 : index
    %842 = vector.load %arg25[%c0_227, %c0_228] : memref<1x32xf32, #tpu.memory_space<vmem>>, vector<1x32xf32>
    %843 = vector.shape_cast %842 : vector<1x32xf32> to vector<1x1x32xf32>
    %844 = vector.broadcast %843 : vector<1x1x32xf32> to vector<2x8x32xf32>
    %845 = arith.mulf %841, %844 : vector<2x8x32xf32>
    %cst_229 = arith.constant dense<0.000000e+00> : vector<2x8xf32>
    %846 = vector.multi_reduction <add>, %845, %cst_229 [2] : vector<2x8x32xf32> to vector<2x8xf32>
    %c0_230 = arith.constant 0 : index
    %c0_231 = arith.constant 0 : index
    %847 = vector.load %arg26[%c0_230, %c0_231] : memref<1x1xf32, #tpu.memory_space<vmem>>, vector<1x1xf32>
    %848 = vector.broadcast %847 : vector<1x1xf32> to vector<2x8xf32>
    %849 = arith.addf %846, %848 : vector<2x8xf32>
    %850 = vector.shape_cast %849 : vector<2x8xf32> to vector<1x2x8xf32>
    %c0_232 = arith.constant 0 : index
    %c0_233 = arith.constant 0 : index
    %c0_234 = arith.constant 0 : index
    %851 = vector.load %arg27[%c0_232, %c0_233, %c0_234] : memref<1x2x8xf32, #tpu.memory_space<vmem>>, vector<1x2x8xf32>
    tpu.vector_store %arg27[%c0_232, %c0_233, %c0_234], %850 {strides = array<i32>} : memref<1x2x8xf32, #tpu.memory_space<vmem>>, vector<1x2x8xf32>,
    return
  }
  func.func @transform_0(%arg0: i32) -> (i32, i32) {
    %c0_i32 = arith.constant 0 : i32
    %c0_i32_0 = arith.constant 0 : i32
    return %arg0, %c0_i32 : i32, i32
  }
  func.func @transform_1(%arg0: i32) -> (i32, i32) {
    %c0_i32 = arith.constant 0 : i32
    %c0_i32_0 = arith.constant 0 : i32
    return %arg0, %c0_i32 : i32, i32
  }
  func.func @transform_2(%arg0: i32) -> (i32, i32, i32) {
    %c0_i32 = arith.constant 0 : i32
    %c0_i32_0 = arith.constant 0 : i32
    %c0_i32_1 = arith.constant 0 : i32
    return %arg0, %c0_i32, %c0_i32_0 : i32, i32, i32
  }
  func.func @transform_3(%arg0: i32) -> (i32, i32) {
    %c0_i32 = arith.constant 0 : i32
    %c0_i32_0 = arith.constant 0 : i32
    %c0_i32_1 = arith.constant 0 : i32
    return %c0_i32, %c0_i32_0 : i32, i32
  }
  func.func @transform_4(%arg0: i32) -> (i32, i32) {
    %c0_i32 = arith.constant 0 : i32
    %c0_i32_0 = arith.constant 0 : i32
    %c0_i32_1 = arith.constant 0 : i32
    return %c0_i32, %c0_i32_0 : i32, i32
  }
  func.func @transform_5(%arg0: i32) -> (i32, i32) {
    %c0_i32 = arith.constant 0 : i32
    %c0_i32_0 = arith.constant 0 : i32
    %c0_i32_1 = arith.constant 0 : i32
    return %c0_i32, %c0_i32_0 : i32, i32
  }
  func.func @transform_6(%arg0: i32) -> (i32, i32) {
    %c0_i32 = arith.constant 0 : i32
    %c0_i32_0 = arith.constant 0 : i32
    %c0_i32_1 = arith.constant 0 : i32
    return %c0_i32, %c0_i32_0 : i32, i32
  }
  func.func @transform_7(%arg0: i32) -> (i32, i32) {
    %c0_i32 = arith.constant 0 : i32
    %c0_i32_0 = arith.constant 0 : i32
    %c0_i32_1 = arith.constant 0 : i32
    return %c0_i32, %c0_i32_0 : i32, i32
  }
  func.func @transform_8(%arg0: i32) -> (i32, i32) {
    %c0_i32 = arith.constant 0 : i32
    %c0_i32_0 = arith.constant 0 : i32
    %c0_i32_1 = arith.constant 0 : i32
    return %c0_i32, %c0_i32_0 : i32, i32
  }
  func.func @transform_9(%arg0: i32) -> (i32, i32) {
    %c0_i32 = arith.constant 0 : i32
    %c0_i32_0 = arith.constant 0 : i32
    %c0_i32_1 = arith.constant 0 : i32
    return %c0_i32, %c0_i32_0 : i32, i32
  }
  func.func @transform_10(%arg0: i32) -> (i32, i32) {
    %c0_i32 = arith.constant 0 : i32
    %c0_i32_0 = arith.constant 0 : i32
    %c0_i32_1 = arith.constant 0 : i32
    return %c0_i32, %c0_i32_0 : i32, i32
  }
  func.func @transform_11(%arg0: i32) -> (i32, i32) {
    %c0_i32 = arith.constant 0 : i32
    %c0_i32_0 = arith.constant 0 : i32
    %c0_i32_1 = arith.constant 0 : i32
    return %c0_i32, %c0_i32_0 : i32, i32
  }
  func.func @transform_12(%arg0: i32) -> (i32, i32) {
    %c0_i32 = arith.constant 0 : i32
    %c0_i32_0 = arith.constant 0 : i32
    %c0_i32_1 = arith.constant 0 : i32
    return %c0_i32, %c0_i32_0 : i32, i32
  }
  func.func @transform_13(%arg0: i32) -> (i32, i32) {
    %c0_i32 = arith.constant 0 : i32
    %c0_i32_0 = arith.constant 0 : i32
    %c0_i32_1 = arith.constant 0 : i32
    return %c0_i32, %c0_i32_0 : i32, i32
  }
  func.func @transform_14(%arg0: i32) -> (i32, i32) {
    %c0_i32 = arith.constant 0 : i32
    %c0_i32_0 = arith.constant 0 : i32
    %c0_i32_1 = arith.constant 0 : i32
    return %c0_i32, %c0_i32_0 : i32, i32
  }
  func.func @transform_15(%arg0: i32) -> (i32, i32, i32) {
    %c0_i32 = arith.constant 0 : i32
    %c0_i32_0 = arith.constant 0 : i32
    %c0_i32_1 = arith.constant 0 : i32
    %c0_i32_2 = arith.constant 0 : i32
    return %c0_i32, %c0_i32_0, %c0_i32_1 : i32, i32, i32
  }
  func.func @transform_16(%arg0: i32) -> (i32, i32) {
    %c0_i32 = arith.constant 0 : i32
    %c0_i32_0 = arith.constant 0 : i32
    %c0_i32_1 = arith.constant 0 : i32
    return %c0_i32, %c0_i32_0 : i32, i32
  }
  func.func @transform_17(%arg0: i32) -> (i32, i32) {
    %c0_i32 = arith.constant 0 : i32
    %c0_i32_0 = arith.constant 0 : i32
    %c0_i32_1 = arith.constant 0 : i32
    return %c0_i32, %c0_i32_0 : i32, i32
  }
  func.func @transform_18(%arg0: i32) -> (i32, i32) {
    %c0_i32 = arith.constant 0 : i32
    %c0_i32_0 = arith.constant 0 : i32
    %c0_i32_1 = arith.constant 0 : i32
    return %c0_i32, %c0_i32_0 : i32, i32
  }
  func.func @transform_19(%arg0: i32) -> (i32, i32) {
    %c0_i32 = arith.constant 0 : i32
    %c0_i32_0 = arith.constant 0 : i32
    %c0_i32_1 = arith.constant 0 : i32
    return %c0_i32, %c0_i32_0 : i32, i32
  }
  func.func @transform_20(%arg0: i32) -> (i32, i32, i32) {
    %c0_i32 = arith.constant 0 : i32
    %c0_i32_0 = arith.constant 0 : i32
    %c0_i32_1 = arith.constant 0 : i32
    %c0_i32_2 = arith.constant 0 : i32
    return %c0_i32, %c0_i32_0, %c0_i32_1 : i32, i32, i32
  }
  func.func @transform_21(%arg0: i32) -> (i32, i32, i32) {
    %c0_i32 = arith.constant 0 : i32
    %c0_i32_0 = arith.constant 0 : i32
    %c0_i32_1 = arith.constant 0 : i32
    %c0_i32_2 = arith.constant 0 : i32
    return %c0_i32, %c0_i32_0, %c0_i32_1 : i32, i32, i32
  }
  func.func @transform_22(%arg0: i32) -> (i32, i32, i32) {
    %c0_i32 = arith.constant 0 : i32
    %c0_i32_0 = arith.constant 0 : i32
    %c0_i32_1 = arith.constant 0 : i32
    %c0_i32_2 = arith.constant 0 : i32
    return %c0_i32, %c0_i32_0, %c0_i32_1 : i32, i32, i32
  }
  func.func @transform_23(%arg0: i32) -> (i32, i32) {
    %c0_i32 = arith.constant 0 : i32
    %c0_i32_0 = arith.constant 0 : i32
    %c0_i32_1 = arith.constant 0 : i32
    return %c0_i32, %c0_i32_0 : i32, i32
  }
  func.func @transform_24(%arg0: i32) -> (i32, i32) {
    %c0_i32 = arith.constant 0 : i32
    %c0_i32_0 = arith.constant 0 : i32
    %c0_i32_1 = arith.constant 0 : i32
    return %c0_i32, %c0_i32_0 : i32, i32
  }
  func.func @transform_25(%arg0: i32) -> (i32, i32) {
    %c0_i32 = arith.constant 0 : i32
    %c0_i32_0 = arith.constant 0 : i32
    %c0_i32_1 = arith.constant 0 : i32
    return %c0_i32, %c0_i32_0 : i32, i32
  }
  func.func @transform_26(%arg0: i32) -> (i32, i32, i32) {
    %c0_i32 = arith.constant 0 : i32
    %c0_i32_0 = arith.constant 0 : i32
    %c0_i32_1 = arith.constant 0 : i32
    return %arg0, %c0_i32, %c0_i32_0 : i32, i32, i32
  }
}

</mosaic_0001>

<llo_original>
// kernel: tpu_custom_call.1
$region0: #{tpu_custom_call.1}
  #allocation0 [shape = 'u32[]', space=smem, size = 0x4, offset = 0x4, fixed_abs, tag = 'smem constant byte address 0x4 - core index']
  #allocation1 [shape = 'u32[144,128]{1,0:T(1,128)}', space=vmem, size = 0x12000, scoped, tag = 'internal scratch']
  #allocation2 [shape = 'f32[1,1]{1,0:T(1,128)S(1)}', space=vmem, size = 0x200, scoped, tag = 'scoped memory for tpu_custom_call.1']
  %s0 = inlined_call_operand.hbm [shape: f32[2,8], index: 0, kind: input, shape index: {}]
  %s1 = inlined_call_operand.hbm [shape: s32[2,8], index: 1, kind: input, shape index: {}]
  %s2 = inlined_call_operand.hbm [shape: f32[2,8,16], index: 2, kind: input, shape index: {}]
  %s3 = inlined_call_operand.hbm [shape: f32[1,16], index: 3, kind: input, shape index: {}]
  %s4 = inlined_call_operand.hbm [shape: f32[1,32], index: 4, kind: input, shape index: {}]
  %s5 = inlined_call_operand.hbm [shape: bf16[4,32], index: 5, kind: input, shape index: {}]
  %s6 = inlined_call_operand.hbm [shape: bf16[8,32], index: 6, kind: input, shape index: {}]
  %s7 = inlined_call_operand.hbm [shape: bf16[32,32], index: 7, kind: input, shape index: {}]
  %s8 = inlined_call_operand.hbm [shape: f32[1,32], index: 8, kind: input, shape index: {}]
  %s9 = inlined_call_operand.hbm [shape: bf16[32,32], index: 9, kind: input, shape index: {}]
  %s10 = inlined_call_operand.hbm [shape: f32[1,32], index: 10, kind: input, shape index: {}]
  %s11 = inlined_call_operand.hbm [shape: bf16[16,32], index: 11, kind: input, shape index: {}]
  %s12 = inlined_call_operand.hbm [shape: f32[1,32], index: 12, kind: input, shape index: {}]
  %s13 = inlined_call_operand.hbm [shape: bf16[32,32], index: 13, kind: input, shape index: {}]
  %s14 = inlined_call_operand.hbm [shape: f32[1,32], index: 14, kind: input, shape index: {}]
  %s15 = inlined_call_operand.hbm [shape: bf16[4,32,32], index: 15, kind: input, shape index: {}]
  %s16 = inlined_call_operand.hbm [shape: bf16[32,128], index: 16, kind: input, shape index: {}]
  %s17 = inlined_call_operand.hbm [shape: f32[1,128], index: 17, kind: input, shape index: {}]
  %s18 = inlined_call_operand.hbm [shape: bf16[32,128], index: 18, kind: input, shape index: {}]
  %s19 = inlined_call_operand.hbm [shape: f32[1,128], index: 19, kind: input, shape index: {}]
  %s20 = inlined_call_operand.hbm [shape: bf16[4,32,32], index: 20, kind: input, shape index: {}]
  %s21 = inlined_call_operand.hbm [shape: bf16[4,32,32], index: 21, kind: input, shape index: {}]
  %s22 = inlined_call_operand.hbm [shape: bf16[4,32,32], index: 22, kind: input, shape index: {}]
  %s23 = inlined_call_operand.hbm [shape: f32[32,32], index: 23, kind: input, shape index: {}]
  %s24 = inlined_call_operand.hbm [shape: f32[1,32], index: 24, kind: input, shape index: {}]
  %s25 = inlined_call_operand.<no memory space> [shape: f32[1,1], index: 25, kind: input, shape index: {}]
  %s26 = inlined_call_operand.hbm [shape: f32[1,2,8], index: 26, kind: output, shape index: {}]
  %s27 = sld [smem:[#allocation0]]
  $region214: #{tpu_custom_call.1} parent=0
    _
  %s29 = ssub.s32 1, %s27
  %s30 = scalar_select 0, %s29, %s27
  %v31 = vstv %s25
  %32 = vst [vmem:[#allocation2] sm:$0x1] %v31
  $region1: #{tpu_custom_call.1} parent=0
    #allocation3 [shape = 'u8[1024]{0}', space=vmem, size = 0x400, scoped, tag = 'input window, operand 0, single buffered']
    #allocation4 [shape = 's32[1]{0}', space=sflag, size = 0x4, scoped, tag = 'scoped memory for tpu_custom_call.1']
    #allocation5 [shape = 's32[1]{0}', space=sflag, size = 0x4, scoped, tag = 'scoped memory for tpu_custom_call.1']
    #allocation6 [shape = 'u8[1024]{0}', space=vmem, size = 0x400, scoped, tag = 'input window, operand 1, single buffered']
    #allocation7 [shape = 's32[1]{0}', space=sflag, size = 0x4, scoped, tag = 'scoped memory for tpu_custom_call.1']
    #allocation8 [shape = 'u8[8192]{0}', space=vmem, size = 0x2000, scoped, tag = 'input window, operand 2, single buffered']
    #allocation9 [shape = 'u8[512]{0}', space=vmem, size = 0x400, scoped, tag = 'input window, operand 3, single buffered']
    #allocation10 [shape = 's32[1]{0}', space=sflag, size = 0x4, scoped, tag = 'scoped memory for tpu_custom_call.1']
    #allocation11 [shape = 'u8[512]{0}', space=vmem, size = 0x400, scoped, tag = 'input window, operand 4, single buffered']
    #allocation12 [shape = 'u8[1024]{0}', space=vmem, size = 0x400, scoped, tag = 'input window, operand 5, single buffered']
    #allocation13 [shape = 's32[1]{0}', space=sflag, size = 0x4, scoped, tag = 'scoped memory for tpu_custom_call.1']
    #allocation14 [shape = 'u8[2048]{0}', space=vmem, size = 0x800, scoped, tag = 'input window, operand 6, single buffered']
    #allocation15 [shape = 'u8[8192]{0}', space=vmem, size = 0x2000, scoped, tag = 'input window, operand 7, single buffered']
    #allocation16 [shape = 's32[1]{0}', space=sflag, size = 0x4, scoped, tag = 'scoped memory for tpu_custom_call.1']
    #allocation17 [shape = 'u8[512]{0}', space=vmem, size = 0x400, scoped, tag = 'input window, operand 8, single buffered']
    #allocation18 [shape = 'u8[8192]{0}', space=vmem, size = 0x2000, scoped, tag = 'input window, operand 9, single buffered']
    #allocation19 [shape = 's32[1]{0}', space=sflag, size = 0x4, scoped, tag = 'scoped memory for tpu_custom_call.1']
    #allocation20 [shape = 'u8[512]{0}', space=vmem, size = 0x400, scoped, tag = 'input window, operand 10, single buffered']
    #allocation21 [shape = 'u8[4096]{0}', space=vmem, size = 0x1000, scoped, tag = 'input window, operand 11, single buffered']
    #allocation22 [shape = 's32[1]{0}', space=sflag, size = 0x4, scoped, tag = 'scoped memory for tpu_custom_call.1']
    #allocation23 [shape = 'u8[512]{0}', space=vmem, size = 0x400, scoped, tag = 'input window, operand 12, single buffered']
    #allocation24 [shape = 'u8[8192]{0}', space=vmem, size = 0x2000, scoped, tag = 'input window, operand 13, single buffered']
    #allocation25 [shape = 's32[1]{0}', space=sflag, size = 0x4, scoped, tag = 'scoped memory for tpu_custom_call.1']
    #allocation26 [shape = 'u8[512]{0}', space=vmem, size = 0x400, scoped, tag = 'input window, operand 14, single buffered']
    #allocation27 [shape = 'u8[32768]{0}', space=vmem, size = 0x8000, scoped, tag = 'input window, operand 15, single buffered']
    #allocation28 [shape = 's32[1]{0}', space=sflag, size = 0x4, scoped, tag = 'scoped memory for tpu_custom_call.1']
    #allocation29 [shape = 'u8[8192]{0}', space=vmem, size = 0x2000, scoped, tag = 'input window, operand 16, single buffered']
    #allocation30 [shape = 'u8[512]{0}', space=vmem, size = 0x400, scoped, tag = 'input window, operand 17, single buffered']
    #allocation31 [shape = 's32[1]{0}', space=sflag, size = 0x4, scoped, tag = 'scoped memory for tpu_custom_call.1']
    #allocation32 [shape = 'u8[8192]{0}', space=vmem, size = 0x2000, scoped, tag = 'input window, operand 18, single buffered']
    #allocation33 [shape = 'u8[512]{0}', space=vmem, size = 0x400, scoped, tag = 'input window, operand 19, single buffered']
    #allocation34 [shape = 's32[1]{0}', space=sflag, size = 0x4, scoped, tag = 'scoped memory for tpu_custom_call.1']
    #allocation35 [shape = 'u8[32768]{0}', space=vmem, size = 0x8000, scoped, tag = 'input window, operand 20, single buffered']
    #allocation36 [shape = 'u8[32768]{0}', space=vmem, size = 0x8000, scoped, tag = 'input window, operand 21, single buffered']
    #allocation37 [shape = 's32[1]{0}', space=sflag, size = 0x4, scoped, tag = 'scoped memory for tpu_custom_call.1']
    #allocation38 [shape = 'u8[32768]{0}', space=vmem, size = 0x8000, scoped, tag = 'input window, operand 22, single buffered']
    #allocation39 [shape = 'u8[16384]{0}', space=vmem, size = 0x4000, scoped, tag = 'input window, operand 23, single buffered']
    #allocation40 [shape = 's32[1]{0}', space=sflag, size = 0x4, scoped, tag = 'scoped memory for tpu_custom_call.1']
    #allocation41 [shape = 'u8[512]{0}', space=vmem, size = 0x400, scoped, tag = 'input window, operand 24, single buffered']
    #allocation42 [shape = 'u8[1024]{0}', space=vmem, size = 0x400, scoped, tag = 'output window, operand 0, single buffered']
    %33 = vsyncpa [#allocation4], 0
    %34 = vsyncpa [#allocation7], 0
    %35 = vsyncpa [#allocation10], 0
    %36 = vsyncpa [#allocation13], 0
    %37 = vsyncpa [#allocation16], 0
    %38 = vsyncpa [#allocation19], 0
    %39 = vsyncpa [#allocation22], 0
    %40 = vsyncpa [#allocation25], 0
    %41 = vsyncpa [#allocation28], 0
    %42 = vsyncpa [#allocation31], 0
    %43 = vsyncpa [#allocation34], 0
    %44 = vsyncpa [#allocation37], 0
    %45 = vsyncpa [#allocation40], 0
    %46 = vsyncpa [#allocation5], 0
    // Predicated region
    $region2: #{tpu_custom_call.1} parent=1 // pred_check
      _
    $region3: #{tpu_custom_call.1} parent=1 // pred_check_branch
      %48 = sbr.rel (0) target = $region5
    $region4: #{tpu_custom_call.1} parent=1 // pred_region
      %s50 = ssub.s32 32, 32
      %51 = vsyncadd [#allocation4], %s50
      %s53 = sshll.u32 [#allocation3], 4
      %s54 = int_to_ptr.vmem [resolvable:$true] %s53
      %56 = dma.hbm_to_vmem [thread:$0]  %s0, 32, %s54, [#allocation4]
    $region5: #{tpu_custom_call.1} parent=1 // pred_fallthru
      _
    // Predicated region
    $region6: #{tpu_custom_call.1} parent=1 // pred_check
      _
    $region7: #{tpu_custom_call.1} parent=1 // pred_check_branch
      %58 = sbr.rel (0) target = $region9
    $region8: #{tpu_custom_call.1} parent=1 // pred_region
      %s60 = ssub.s32 32, 32
      %61 = vsyncadd [#allocation7], %s60
      %s63 = sshll.u32 [#allocation6], 4
      %s64 = int_to_ptr.vmem [resolvable:$true] %s63
      %66 = dma.hbm_to_vmem [thread:$0]  %s1, 32, %s64, [#allocation7]
    $region9: #{tpu_custom_call.1} parent=1 // pred_fallthru
      _
    // Predicated region
    $region10: #{tpu_custom_call.1} parent=1 // pred_check
      _
    $region11: #{tpu_custom_call.1} parent=1 // pred_check_branch
      %68 = sbr.rel (0) target = $region13
    $region12: #{tpu_custom_call.1} parent=1 // pred_region
      %s70 = ssub.s32 256, 256
      %71 = vsyncadd [#allocation7], %s70
      %s72 = sshll.u32 [#allocation8], 4
      %s73 = int_to_ptr.vmem [resolvable:$true] %s72
      %78 = dma.hbm_to_vmem [thread:$0]  %s2, 256, %s73, [#allocation7], 128, 128, 8
    $region13: #{tpu_custom_call.1} parent=1 // pred_fallthru
      _
    // Predicated region
    $region14: #{tpu_custom_call.1} parent=1 // pred_check
      _
    $region15: #{tpu_custom_call.1} parent=1 // pred_check_branch
      %80 = sbr.rel (0) target = $region17
    $region16: #{tpu_custom_call.1} parent=1 // pred_region
      %s82 = ssub.s32 16, 16
      %83 = vsyncadd [#allocation10], %s82
      %s85 = sshll.u32 [#allocation9], 4
      %s86 = int_to_ptr.vmem [resolvable:$true] %s85
      %88 = dma.hbm_to_vmem [thread:$0]  %s3, 16, %s86, [#allocation10]
    $region17: #{tpu_custom_call.1} parent=1 // pred_fallthru
      _
    // Predicated region
    $region18: #{tpu_custom_call.1} parent=1 // pred_check
      _
    $region19: #{tpu_custom_call.1} parent=1 // pred_check_branch
      %90 = sbr.rel (0) target = $region21
    $region20: #{tpu_custom_call.1} parent=1 // pred_region
      %s92 = ssub.s32 16, 16
      %93 = vsyncadd [#allocation10], %s92
      %s95 = sshll.u32 [#allocation11], 4
      %s96 = int_to_ptr.vmem [resolvable:$true] %s95
      %98 = dma.hbm_to_vmem [thread:$0]  %s4, 16, %s96, [#allocation10]
    $region21: #{tpu_custom_call.1} parent=1 // pred_fallthru
      _
    // Predicated region
    $region22: #{tpu_custom_call.1} parent=1 // pred_check
      _
    $region23: #{tpu_custom_call.1} parent=1 // pred_check_branch
      %100 = sbr.rel (0) target = $region25
    $region24: #{tpu_custom_call.1} parent=1 // pred_region
      %s102 = ssub.s32 32, 32
      %103 = vsyncadd [#allocation13], %s102
      %s105 = sshll.u32 [#allocation12], 4
      %s106 = int_to_ptr.vmem [resolvable:$true] %s105
      %108 = dma.hbm_to_vmem [thread:$0]  %s5, 32, %s106, [#allocation13]
    $region25: #{tpu_custom_call.1} parent=1 // pred_fallthru
      _
    // Predicated region
    $region26: #{tpu_custom_call.1} parent=1 // pred_check
      _
    $region27: #{tpu_custom_call.1} parent=1 // pred_check_branch
      %110 = sbr.rel (0) target = $region29
    $region28: #{tpu_custom_call.1} parent=1 // pred_region
      %s112 = ssub.s32 64, 64
      %113 = vsyncadd [#allocation13], %s112
      %s115 = sshll.u32 [#allocation14], 4
      %s116 = int_to_ptr.vmem [resolvable:$true] %s115
      %118 = dma.hbm_to_vmem [thread:$0]  %s6, 64, %s116, [#allocation13]
    $region29: #{tpu_custom_call.1} parent=1 // pred_fallthru
      _
    // Predicated region
    $region30: #{tpu_custom_call.1} parent=1 // pred_check
      _
    $region31: #{tpu_custom_call.1} parent=1 // pred_check_branch
      %120 = sbr.rel (0) target = $region33
    $region32: #{tpu_custom_call.1} parent=1 // pred_region
      %s122 = ssub.s32 256, 256
      %123 = vsyncadd [#allocation16], %s122
      %s124 = sshll.u32 [#allocation15], 4
      %s125 = int_to_ptr.vmem [resolvable:$true] %s124
      %130 = dma.hbm_to_vmem [thread:$0]  %s7, 256, %s125, [#allocation16], 64, 64, 4
    $region33: #{tpu_custom_call.1} parent=1 // pred_fallthru
      _
    // Predicated region
    $region34: #{tpu_custom_call.1} parent=1 // pred_check
      _
    $region35: #{tpu_custom_call.1} parent=1 // pred_check_branch
      %132 = sbr.rel (0) target = $region37
    $region36: #{tpu_custom_call.1} parent=1 // pred_region
      %s134 = ssub.s32 16, 16
      %135 = vsyncadd [#allocation16], %s134
      %s137 = sshll.u32 [#allocation17], 4
      %s138 = int_to_ptr.vmem [resolvable:$true] %s137
      %140 = dma.hbm_to_vmem [thread:$0]  %s8, 16, %s138, [#allocation16]
    $region37: #{tpu_custom_call.1} parent=1 // pred_fallthru
      _
    // Predicated region
    $region38: #{tpu_custom_call.1} parent=1 // pred_check
      _
    $region39: #{tpu_custom_call.1} parent=1 // pred_check_branch
      %142 = sbr.rel (0) target = $region41
    $region40: #{tpu_custom_call.1} parent=1 // pred_region
      %s144 = ssub.s32 256, 256
      %145 = vsyncadd [#allocation19], %s144
      %s146 = sshll.u32 [#allocation18], 4
      %s147 = int_to_ptr.vmem [resolvable:$true] %s146
      %152 = dma.hbm_to_vmem [thread:$0]  %s9, 256, %s147, [#allocation19], 64, 64, 4
    $region41: #{tpu_custom_call.1} parent=1 // pred_fallthru
      _
    // Predicated region
    $region42: #{tpu_custom_call.1} parent=1 // pred_check
      _
    $region43: #{tpu_custom_call.1} parent=1 // pred_check_branch
      %154 = sbr.rel (0) target = $region45
    $region44: #{tpu_custom_call.1} parent=1 // pred_region
      %s156 = ssub.s32 16, 16
      %157 = vsyncadd [#allocation19], %s156
      %s159 = sshll.u32 [#allocation20], 4
      %s160 = int_to_ptr.vmem [resolvable:$true] %s159
      %162 = dma.hbm_to_vmem [thread:$0]  %s10, 16, %s160, [#allocation19]
    $region45: #{tpu_custom_call.1} parent=1 // pred_fallthru
      _
    // Predicated region
    $region46: #{tpu_custom_call.1} parent=1 // pred_check
      _
    $region47: #{tpu_custom_call.1} parent=1 // pred_check_branch
      %164 = sbr.rel (0) target = $region49
    $region48: #{tpu_custom_call.1} parent=1 // pred_region
      %s166 = ssub.s32 128, 128
      %167 = vsyncadd [#allocation22], %s166
      %s168 = sshll.u32 [#allocation21], 4
      %s169 = int_to_ptr.vmem [resolvable:$true] %s168
      %174 = dma.hbm_to_vmem [thread:$0]  %s11, 128, %s169, [#allocation22], 64, 64, 4
    $region49: #{tpu_custom_call.1} parent=1 // pred_fallthru
      _
    // Predicated region
    $region50: #{tpu_custom_call.1} parent=1 // pred_check
      _
    $region51: #{tpu_custom_call.1} parent=1 // pred_check_branch
      %176 = sbr.rel (0) target = $region53
    $region52: #{tpu_custom_call.1} parent=1 // pred_region
      %s178 = ssub.s32 16, 16
      %179 = vsyncadd [#allocation22], %s178
      %s181 = sshll.u32 [#allocation23], 4
      %s182 = int_to_ptr.vmem [resolvable:$true] %s181
      %184 = dma.hbm_to_vmem [thread:$0]  %s12, 16, %s182, [#allocation22]
    $region53: #{tpu_custom_call.1} parent=1 // pred_fallthru
      _
    // Predicated region
    $region54: #{tpu_custom_call.1} parent=1 // pred_check
      _
    $region55: #{tpu_custom_call.1} parent=1 // pred_check_branch
      %186 = sbr.rel (0) target = $region57
    $region56: #{tpu_custom_call.1} parent=1 // pred_region
      %s188 = ssub.s32 256, 256
      %189 = vsyncadd [#allocation25], %s188
      %s190 = sshll.u32 [#allocation24], 4
      %s191 = int_to_ptr.vmem [resolvable:$true] %s190
      %196 = dma.hbm_to_vmem [thread:$0]  %s13, 256, %s191, [#allocation25], 64, 64, 4
    $region57: #{tpu_custom_call.1} parent=1 // pred_fallthru
      _
    // Predicated region
    $region58: #{tpu_custom_call.1} parent=1 // pred_check
      _
    $region59: #{tpu_custom_call.1} parent=1 // pred_check_branch
      %198 = sbr.rel (0) target = $region61
    $region60: #{tpu_custom_call.1} parent=1 // pred_region
      %s200 = ssub.s32 16, 16
      %201 = vsyncadd [#allocation25], %s200
      %s203 = sshll.u32 [#allocation26], 4
      %s204 = int_to_ptr.vmem [resolvable:$true] %s203
      %206 = dma.hbm_to_vmem [thread:$0]  %s14, 16, %s204, [#allocation25]
    $region61: #{tpu_custom_call.1} parent=1 // pred_fallthru
      _
    // Predicated region
    $region62: #{tpu_custom_call.1} parent=1 // pred_check
      _
    $region63: #{tpu_custom_call.1} parent=1 // pred_check_branch
      %208 = sbr.rel (0) target = $region65
    $region64: #{tpu_custom_call.1} parent=1 // pred_region
      %s210 = ssub.s32 1024, 1024
      %211 = vsyncadd [#allocation28], %s210
      %s212 = sshll.u32 [#allocation27], 4
      %s213 = int_to_ptr.vmem [resolvable:$true] %s212
      %218 = dma.hbm_to_vmem [thread:$0]  %s15, 1024, %s213, [#allocation28], 64, 64, 4
    $region65: #{tpu_custom_call.1} parent=1 // pred_fallthru
      _
    // Predicated region
    $region66: #{tpu_custom_call.1} parent=1 // pred_check
      _
    $region67: #{tpu_custom_call.1} parent=1 // pred_check_branch
      %220 = sbr.rel (0) target = $region69
    $region68: #{tpu_custom_call.1} parent=1 // pred_region
      %s222 = ssub.s32 256, 256
      %223 = vsyncadd [#allocation28], %s222
      %s224 = sshll.u32 [#allocation29], 4
      %s225 = int_to_ptr.vmem [resolvable:$true] %s224
      %230 = dma.hbm_to_vmem [thread:$0]  %s16, 256, %s225, [#allocation28], 64, 64, 4
    $region69: #{tpu_custom_call.1} parent=1 // pred_fallthru
      _
    // Predicated region
    $region70: #{tpu_custom_call.1} parent=1 // pred_check
      _
    $region71: #{tpu_custom_call.1} parent=1 // pred_check_branch
      %232 = sbr.rel (0) target = $region73
    $region72: #{tpu_custom_call.1} parent=1 // pred_region
      %s234 = ssub.s32 16, 16
      %235 = vsyncadd [#allocation31], %s234
      %s237 = sshll.u32 [#allocation30], 4
      %s238 = int_to_ptr.vmem [resolvable:$true] %s237
      %240 = dma.hbm_to_vmem [thread:$0]  %s17, 16, %s238, [#allocation31]
    $region73: #{tpu_custom_call.1} parent=1 // pred_fallthru
      _
    // Predicated region
    $region74: #{tpu_custom_call.1} parent=1 // pred_check
      _
    $region75: #{tpu_custom_call.1} parent=1 // pred_check_branch
      %242 = sbr.rel (0) target = $region77
    $region76: #{tpu_custom_call.1} parent=1 // pred_region
      %s244 = ssub.s32 256, 256
      %245 = vsyncadd [#allocation31], %s244
      %s246 = sshll.u32 [#allocation32], 4
      %s247 = int_to_ptr.vmem [resolvable:$true] %s246
      %252 = dma.hbm_to_vmem [thread:$0]  %s18, 256, %s247, [#allocation31], 64, 64, 4
    $region77: #{tpu_custom_call.1} parent=1 // pred_fallthru
      _
    // Predicated region
    $region78: #{tpu_custom_call.1} parent=1 // pred_check
      _
    $region79: #{tpu_custom_call.1} parent=1 // pred_check_branch
      %254 = sbr.rel (0) target = $region81
    $region80: #{tpu_custom_call.1} parent=1 // pred_region
      %s256 = ssub.s32 16, 16
      %257 = vsyncadd [#allocation34], %s256
      %s259 = sshll.u32 [#allocation33], 4
      %s260 = int_to_ptr.vmem [resolvable:$true] %s259
      %262 = dma.hbm_to_vmem [thread:$0]  %s19, 16, %s260, [#allocation34]
    $region81: #{tpu_custom_call.1} parent=1 // pred_fallthru
      _
    // Predicated region
    $region82: #{tpu_custom_call.1} parent=1 // pred_check
      _
    $region83: #{tpu_custom_call.1} parent=1 // pred_check_branch
      %264 = sbr.rel (0) target = $region85
    $region84: #{tpu_custom_call.1} parent=1 // pred_region
      %s266 = ssub.s32 1024, 1024
      %267 = vsyncadd [#allocation34], %s266
      %s268 = sshll.u32 [#allocation35], 4
      %s269 = int_to_ptr.vmem [resolvable:$true] %s268
      %274 = dma.hbm_to_vmem [thread:$0]  %s20, 1024, %s269, [#allocation34], 64, 64, 4
    $region85: #{tpu_custom_call.1} parent=1 // pred_fallthru
      _
    // Predicated region
    $region86: #{tpu_custom_call.1} parent=1 // pred_check
      _
    $region87: #{tpu_custom_call.1} parent=1 // pred_check_branch
      %276 = sbr.rel (0) target = $region89
    $region88: #{tpu_custom_call.1} parent=1 // pred_region
      %s278 = ssub.s32 1024, 1024
      %279 = vsyncadd [#allocation37], %s278
      %s280 = sshll.u32 [#allocation36], 4
      %s281 = int_to_ptr.vmem [resolvable:$true] %s280
      %286 = dma.hbm_to_vmem [thread:$0]  %s21, 1024, %s281, [#allocation37], 64, 64, 4
    $region89: #{tpu_custom_call.1} parent=1 // pred_fallthru
      _
    // Predicated region
    $region90: #{tpu_custom_call.1} parent=1 // pred_check
      _
    $region91: #{tpu_custom_call.1} parent=1 // pred_check_branch
      %288 = sbr.rel (0) target = $region93
    $region92: #{tpu_custom_call.1} parent=1 // pred_region
      %s290 = ssub.s32 1024, 1024
      %291 = vsyncadd [#allocation37], %s290
      %s292 = sshll.u32 [#allocation38], 4
      %s293 = int_to_ptr.vmem [resolvable:$true] %s292
      %298 = dma.hbm_to_vmem [thread:$0]  %s22, 1024, %s293, [#allocation37], 64, 64, 4
    $region93: #{tpu_custom_call.1} parent=1 // pred_fallthru
      _
    // Predicated region
    $region94: #{tpu_custom_call.1} parent=1 // pred_check
      _
    $region95: #{tpu_custom_call.1} parent=1 // pred_check_branch
      %300 = sbr.rel (0) target = $region97
    $region96: #{tpu_custom_call.1} parent=1 // pred_region
      %s302 = ssub.s32 512, 512
      %303 = vsyncadd [#allocation40], %s302
      %s304 = sshll.u32 [#allocation39], 4
      %s305 = int_to_ptr.vmem [resolvable:$true] %s304
      %310 = dma.hbm_to_vmem [thread:$0]  %s23, 512, %s305, [#allocation40], 128, 128, 8
    $region97: #{tpu_custom_call.1} parent=1 // pred_fallthru
      _
    // Predicated region
    $region98: #{tpu_custom_call.1} parent=1 // pred_check
      _
    $region99: #{tpu_custom_call.1} parent=1 // pred_check_branch
      %312 = sbr.rel (0) target = $region101
    $region100: #{tpu_custom_call.1} parent=1 // pred_region
      %s314 = ssub.s32 16, 16
      %315 = vsyncadd [#allocation40], %s314
      %s317 = sshll.u32 [#allocation41], 4
      %s318 = int_to_ptr.vmem [resolvable:$true] %s317
      %320 = dma.hbm_to_vmem [thread:$0]  %s24, 16, %s318, [#allocation40]
    $region101: #{tpu_custom_call.1} parent=1 // pred_fallthru
      _
    // Predicated region
    $region102: #{tpu_custom_call.1} parent=1 // pred_check
      _
    $region103: #{tpu_custom_call.1} parent=1 // pred_check_branch
      %322 = sbr.rel (0) target = $region105
    $region104: #{tpu_custom_call.1} parent=1 // pred_region
      _
    $region105: #{tpu_custom_call.1} parent=1 // pred_fallthru
      _
    // Predicated region
    $region106: #{tpu_custom_call.1} parent=1 // pred_check
      _
    $region107: #{tpu_custom_call.1} parent=1 // pred_check_branch
      %324 = sbr.rel (0) target = $region109
    $region108: #{tpu_custom_call.1} parent=1 // pred_region
      %325 = dma.done [#allocation4], 32
    $region109: #{tpu_custom_call.1} parent=1 // pred_fallthru
      _
    // Predicated region
    $region110: #{tpu_custom_call.1} parent=1 // pred_check
      _
    $region111: #{tpu_custom_call.1} parent=1 // pred_check_branch
      %327 = sbr.rel (0) target = $region113
    $region112: #{tpu_custom_call.1} parent=1 // pred_region
      %328 = dma.done [#allocation7], 32
    $region113: #{tpu_custom_call.1} parent=1 // pred_fallthru
      _
    // Predicated region
    $region114: #{tpu_custom_call.1} parent=1 // pred_check
      _
    $region115: #{tpu_custom_call.1} parent=1 // pred_check_branch
      %330 = sbr.rel (0) target = $region117
    $region116: #{tpu_custom_call.1} parent=1 // pred_region
      %331 = dma.done [#allocation7], 256
    $region117: #{tpu_custom_call.1} parent=1 // pred_fallthru
      _
    // Predicated region
    $region118: #{tpu_custom_call.1} parent=1 // pred_check
      _
    $region119: #{tpu_custom_call.1} parent=1 // pred_check_branch
      %333 = sbr.rel (0) target = $region121
    $region120: #{tpu_custom_call.1} parent=1 // pred_region
      %334 = dma.done [#allocation10], 16
    $region121: #{tpu_custom_call.1} parent=1 // pred_fallthru
      _
    // Predicated region
    $region122: #{tpu_custom_call.1} parent=1 // pred_check
      _
    $region123: #{tpu_custom_call.1} parent=1 // pred_check_branch
      %336 = sbr.rel (0) target = $region125
    $region124: #{tpu_custom_call.1} parent=1 // pred_region
      %337 = dma.done [#allocation10], 16
    $region125: #{tpu_custom_call.1} parent=1 // pred_fallthru
      _
    // Predicated region
    $region126: #{tpu_custom_call.1} parent=1 // pred_check
      _
    $region127: #{tpu_custom_call.1} parent=1 // pred_check_branch
      %339 = sbr.rel (0) target = $region129
    $region128: #{tpu_custom_call.1} parent=1 // pred_region
      %340 = dma.done [#allocation13], 32
    $region129: #{tpu_custom_call.1} parent=1 // pred_fallthru
      _
    // Predicated region
    $region130: #{tpu_custom_call.1} parent=1 // pred_check
      _
    $region131: #{tpu_custom_call.1} parent=1 // pred_check_branch
      %342 = sbr.rel (0) target = $region133
    $region132: #{tpu_custom_call.1} parent=1 // pred_region
      %343 = dma.done [#allocation13], 64
    $region133: #{tpu_custom_call.1} parent=1 // pred_fallthru
      _
    // Predicated region
    $region134: #{tpu_custom_call.1} parent=1 // pred_check
      _
    $region135: #{tpu_custom_call.1} parent=1 // pred_check_branch
      %345 = sbr.rel (0) target = $region137
    $region136: #{tpu_custom_call.1} parent=1 // pred_region
      %346 = dma.done [#allocation16], 256
    $region137: #{tpu_custom_call.1} parent=1 // pred_fallthru
      _
    // Predicated region
    $region138: #{tpu_custom_call.1} parent=1 // pred_check
      _
    $region139: #{tpu_custom_call.1} parent=1 // pred_check_branch
      %348 = sbr.rel (0) target = $region141
    $region140: #{tpu_custom_call.1} parent=1 // pred_region
      %349 = dma.done [#allocation16], 16
    $region141: #{tpu_custom_call.1} parent=1 // pred_fallthru
      _
    // Predicated region
    $region142: #{tpu_custom_call.1} parent=1 // pred_check
      _
    $region143: #{tpu_custom_call.1} parent=1 // pred_check_branch
      %351 = sbr.rel (0) target = $region145
    $region144: #{tpu_custom_call.1} parent=1 // pred_region
      %352 = dma.done [#allocation19], 256
    $region145: #{tpu_custom_call.1} parent=1 // pred_fallthru
      _
    // Predicated region
    $region146: #{tpu_custom_call.1} parent=1 // pred_check
      _
    $region147: #{tpu_custom_call.1} parent=1 // pred_check_branch
      %354 = sbr.rel (0) target = $region149
    $region148: #{tpu_custom_call.1} parent=1 // pred_region
      %355 = dma.done [#allocation19], 16
    $region149: #{tpu_custom_call.1} parent=1 // pred_fallthru
      _
    // Predicated region
    $region150: #{tpu_custom_call.1} parent=1 // pred_check
      _
    $region151: #{tpu_custom_call.1} parent=1 // pred_check_branch
      %357 = sbr.rel (0) target = $region153
    $region152: #{tpu_custom_call.1} parent=1 // pred_region
      %358 = dma.done [#allocation22], 128
    $region153: #{tpu_custom_call.1} parent=1 // pred_fallthru
      _
    // Predicated region
    $region154: #{tpu_custom_call.1} parent=1 // pred_check
      _
    $region155: #{tpu_custom_call.1} parent=1 // pred_check_branch
      %360 = sbr.rel (0) target = $region157
    $region156: #{tpu_custom_call.1} parent=1 // pred_region
      %361 = dma.done [#allocation22], 16
    $region157: #{tpu_custom_call.1} parent=1 // pred_fallthru
      _
    // Predicated region
    $region158: #{tpu_custom_call.1} parent=1 // pred_check
      _
    $region159: #{tpu_custom_call.1} parent=1 // pred_check_branch
      %363 = sbr.rel (0) target = $region161
    $region160: #{tpu_custom_call.1} parent=1 // pred_region
      %364 = dma.done [#allocation25], 256
    $region161: #{tpu_custom_call.1} parent=1 // pred_fallthru
      _
    // Predicated region
    $region162: #{tpu_custom_call.1} parent=1 // pred_check
      _
    $region163: #{tpu_custom_call.1} parent=1 // pred_check_branch
      %366 = sbr.rel (0) target = $region165
    $region164: #{tpu_custom_call.1} parent=1 // pred_region
      %367 = dma.done [#allocation25], 16
    $region165: #{tpu_custom_call.1} parent=1 // pred_fallthru
      _
    // Predicated region
    $region166: #{tpu_custom_call.1} parent=1 // pred_check
      _
    $region167: #{tpu_custom_call.1} parent=1 // pred_check_branch
      %369 = sbr.rel (0) target = $region169
    $region168: #{tpu_custom_call.1} parent=1 // pred_region
      %370 = dma.done [#allocation28], 1024
    $region169: #{tpu_custom_call.1} parent=1 // pred_fallthru
      _
    // Predicated region
    $region170: #{tpu_custom_call.1} parent=1 // pred_check
      _
    $region171: #{tpu_custom_call.1} parent=1 // pred_check_branch
      %372 = sbr.rel (0) target = $region173
    $region172: #{tpu_custom_call.1} parent=1 // pred_region
      %373 = dma.done [#allocation28], 256
    $region173: #{tpu_custom_call.1} parent=1 // pred_fallthru
      _
    // Predicated region
    $region174: #{tpu_custom_call.1} parent=1 // pred_check
      _
    $region175: #{tpu_custom_call.1} parent=1 // pred_check_branch
      %375 = sbr.rel (0) target = $region177
    $region176: #{tpu_custom_call.1} parent=1 // pred_region
      %376 = dma.done [#allocation31], 16
    $region177: #{tpu_custom_call.1} parent=1 // pred_fallthru
      _
    // Predicated region
    $region178: #{tpu_custom_call.1} parent=1 // pred_check
      _
    $region179: #{tpu_custom_call.1} parent=1 // pred_check_branch
      %378 = sbr.rel (0) target = $region181
    $region180: #{tpu_custom_call.1} parent=1 // pred_region
      %379 = dma.done [#allocation31], 256
    $region181: #{tpu_custom_call.1} parent=1 // pred_fallthru
      _
    // Predicated region
    $region182: #{tpu_custom_call.1} parent=1 // pred_check
      _
    $region183: #{tpu_custom_call.1} parent=1 // pred_check_branch
      %381 = sbr.rel (0) target = $region185
    $region184: #{tpu_custom_call.1} parent=1 // pred_region
      %382 = dma.done [#allocation34], 16
    $region185: #{tpu_custom_call.1} parent=1 // pred_fallthru
      _
    // Predicated region
    $region186: #{tpu_custom_call.1} parent=1 // pred_check
      _
    $region187: #{tpu_custom_call.1} parent=1 // pred_check_branch
      %384 = sbr.rel (0) target = $region189
    $region188: #{tpu_custom_call.1} parent=1 // pred_region
      %385 = dma.done [#allocation34], 1024
    $region189: #{tpu_custom_call.1} parent=1 // pred_fallthru
      _
    // Predicated region
    $region190: #{tpu_custom_call.1} parent=1 // pred_check
      _
    $region191: #{tpu_custom_call.1} parent=1 // pred_check_branch
      %387 = sbr.rel (0) target = $region193
    $region192: #{tpu_custom_call.1} parent=1 // pred_region
      %388 = dma.done [#allocation37], 1024
    $region193: #{tpu_custom_call.1} parent=1 // pred_fallthru
      _
    // Predicated region
    $region194: #{tpu_custom_call.1} parent=1 // pred_check
      _
    $region195: #{tpu_custom_call.1} parent=1 // pred_check_branch
      %390 = sbr.rel (0) target = $region197
    $region196: #{tpu_custom_call.1} parent=1 // pred_region
      %391 = dma.done [#allocation37], 1024
    $region197: #{tpu_custom_call.1} parent=1 // pred_fallthru
      _
    // Predicated region
    $region198: #{tpu_custom_call.1} parent=1 // pred_check
      _
    $region199: #{tpu_custom_call.1} parent=1 // pred_check_branch
      %393 = sbr.rel (0) target = $region201
    $region200: #{tpu_custom_call.1} parent=1 // pred_region
      %394 = dma.done [#allocation40], 512
    $region201: #{tpu_custom_call.1} parent=1 // pred_fallthru
      _
    // Predicated region
    $region202: #{tpu_custom_call.1} parent=1 // pred_check
      _
    $region203: #{tpu_custom_call.1} parent=1 // pred_check_branch
      %396 = sbr.rel (0) target = $region205
    $region204: #{tpu_custom_call.1} parent=1 // pred_region
      %397 = dma.done [#allocation40], 16
    $region205: #{tpu_custom_call.1} parent=1 // pred_fallthru
      _
    %v399 = vld [vmem:[#allocation3] sm:$0x3]
    %v400 = vld [vmem:[#allocation9] sm:$0x1]
    %v401 = vlaneseq
    %v402 = vshrl.u32 %v401, 7
    %v403 = vsub.s32 0, %v402
    %v404 = vrot.slane %v399, %v403
    %406 = vbcast.lane.b32.xlu0 %v404, 256
    %v407 = vpop.permute.xlu0 %406
    %v408 = vlaneseq
    %v409 = vshrl.u32 %v408, 7
    %v410 = vsub.s32 1, %v409
    %v411 = vrot.slane %v399, %v410
    %413 = vbcast.lane.b32.xlu0 %v411, 256
    %v414 = vpop.permute.xlu0 %413
    %v416 = vlaneseq
    %v417 = vshrl.u32 %v416, 7
    %v418 = vsub.s32 0, %v417
    %v419 = vrot.slane %v400, %v418
    %v421 = vmul.f32 %v407, %v419
    %v422 = vmul.f32 %v414, %v419
    %v423 = vand.u32 2147483647, %v421
    %vm424 = vcmp.le.f32.partialorder %v423, 0.7853982
    %vm425 = vcmp.lt.s32.totalorder %v421, 0
    %v426 = vand.u32 %v421, 2139095040
    %v427 = vshrl.u32 %v426, 23
    %v428 = vsub.s32 %v427, 127
    %v429 = vand.u32 2147483647, %v421
    %v430 = vand.u32 %v429, 8388607
    %v431 = vor.u32 %v430, 8388608
    %v432 = vsub.s32 0, %v431
    %v433 = vadd.s32 %v428, 1
    %vm434 = vcmp.gt.s32.totalorder %v433, 0
    %v435 = vsel %vm434, %v433, 0
    %v436 = vshrl.u32 %v435, 5
    %v437 = vand.u32 %v435, 31
    %v438 = vsub.s32 32, %v437
    %v439 = vshrl.u32 683565275, %v438
    %v440 = vshll.u32 683565275, %v437
    %v441 = vshrl.u32 2475754826, %v438
    %v442 = vor.u32 %v440, %v441
    %v443 = vshll.u32 2475754826, %v437
    %v444 = vshrl.u32 2131351028, %v438
    %v445 = vor.u32 %v443, %v444
    %v446 = vshll.u32 2131351028, %v437
    %v447 = vshrl.u32 2102212464, %v438
    %v448 = vor.u32 %v446, %v447
    %v449 = vshll.u32 2102212464, %v437
    %v450 = vshrl.u32 920167782, %v438
    %v451 = vor.u32 %v449, %v450
    %v452 = vshll.u32 920167782, %v437
    %v453 = vshrl.u32 1326507024, %v438
    %v454 = vor.u32 %v452, %v453
    %vm455 = vcmp.lt.s32.totalorder %v436, 1
    %vm456 = vcmp.lt.s32.totalorder %v436, 2
    %vm457 = vcmp.lt.s32.totalorder %v436, 3
    %vm458 = vcmp.lt.s32.totalorder %v436, 4
    %v459 = vsel %vm455, %v439, %v442
    %v460 = vsel %vm458, %v448, 2102212464
    %v461 = vsel %vm457, %v445, %v460
    %v462 = vsel %vm456, %v459, %v461
    %v463 = vsel %vm455, %v442, %v445
    %v464 = vsel %vm458, %v451, 920167782
    %v465 = vsel %vm457, %v448, %v464
    %v466 = vsel %vm456, %v463, %v465
    %v467 = vsel %vm455, %v445, %v448
    %v468 = vsel %vm458, %v454, 1326507024
    %v469 = vsel %vm457, %v451, %v468
    %v470 = vsel %vm456, %v467, %v469
    %v471 = vshll.u32 %v431, 8
    %v472 = vmul.u32.u64.compose %v471, %v470
    %v473 = vextract.low.u32 %v472
    %v474 = vextract.high.u32 %v472
    %v475 = vmul.u32.u64.compose %v471, %v466
    %v476 = vextract.low.u32 %v475
    %v477 = vextract.high.u32 %v475
    %v478 = vmul.u32 %v471, %v462
    %v479 = vadd.s32 %v474, %v476
    %vm480 = vc.u32 %v474, %v476
    %v481 = vadd.s32 %v477, 1
    %v482 = vsel %vm480, %v481, %v477
    %v483 = vadd.s32 %v478, %v482
    %v484 = vadd.s32 %v483, 536870912
    %v485 = vshrl.u32 %v484, 30
    %v486 = vshll.u32 %v485, 30
    %v487 = vsub.s32 %v483, %v486
    %vm488 = vcmp.lt.s32.totalorder %v487, 0
    %v489 = vsub.s32 0, %v487
    %v490 = vsel %vm488, %v489, %v487
    %v491 = vclz %v490
    %v492 = vsub.s32 %v491, 2
    %vm493 = vcmp.gt.s32.totalorder 0, %v492
    %v494 = vsel %vm493, 0, %v492
    %v495 = vsub.s32 32, %v494
    %v496 = vshll.u32 %v487, %v494
    %v497 = vshrl.u32 %v479, %v495
    %v498 = vor.u32 %v496, %v497
    %v499 = vsub.s32 4294967266, %v494
    %v500 = vadd.s32 %v499, 127
    %v501 = vshll.u32 %v500, 23
    %v502 = vor.u32 4788187, %v501
    %v503 = vand.u32 2147483647, %v502
    %v505 = vcvt.s32.f32 %v498
    %v506 = vmul.f32 %v505, %v503
    %v507 = vxor.u32 %v506, 2147483648
    %v508 = vsel %vm425, %v507, %v506
    %v509 = vsub.s32 4, %v485
    %v510 = vsel %vm425, %v509, %v485
    %v511 = vsel %vm424, %v421, %v508
    %v512 = vsel %vm424, 0, %v510
    %v513 = vcosq.f32.pop %v511
    %v514 = vsinq.f32.pop %v511
    %vm515 = vweird.f32 %v421
    %v516 = vadd.s32 %v512, 3
    %v517 = vand.u32 %v516, 3
    %vm518 = vcmp.lt.s32.totalorder %v517, 2
    %vm519 = vcmp.eq.s32.totalorder %v517, 0
    %v520 = vxor.u32 %v514, 2147483648
    %v521 = vsel %vm519, %v513, %v520
    %vm522 = vcmp.eq.s32.totalorder %v517, 2
    %v523 = vxor.u32 %v513, 2147483648
    %v524 = vsel %vm522, %v523, %v514
    %v525 = vsel %vm518, %v521, %v524
    %v526 = vsel %vm515, nan, %v525
    %v527 = vand.u32 2147483647, %v422
    %vm528 = vcmp.le.f32.partialorder %v527, 0.7853982
    %vm529 = vcmp.lt.s32.totalorder %v422, 0
    %v530 = vand.u32 %v422, 2139095040
    %v531 = vshrl.u32 %v530, 23
    %v532 = vsub.s32 %v531, 127
    %v533 = vand.u32 2147483647, %v422
    %v534 = vand.u32 %v533, 8388607
    %v535 = vor.u32 %v534, 8388608
    %v536 = vsub.s32 0, %v535
    %v537 = vadd.s32 %v532, 1
    %vm538 = vcmp.gt.s32.totalorder %v537, 0
    %v539 = vsel %vm538, %v537, 0
    %v540 = vshrl.u32 %v539, 5
    %v541 = vand.u32 %v539, 31
    %v542 = vsub.s32 32, %v541
    %v543 = vshrl.u32 683565275, %v542
    %v544 = vshll.u32 683565275, %v541
    %v545 = vshrl.u32 2475754826, %v542
    %v546 = vor.u32 %v544, %v545
    %v547 = vshll.u32 2475754826, %v541
    %v548 = vshrl.u32 2131351028, %v542
    %v549 = vor.u32 %v547, %v548
    %v550 = vshll.u32 2131351028, %v541
    %v551 = vshrl.u32 2102212464, %v542
    %v552 = vor.u32 %v550, %v551
    %v553 = vshll.u32 2102212464, %v541
    %v554 = vshrl.u32 920167782, %v542
    %v555 = vor.u32 %v553, %v554
    %v556 = vshll.u32 920167782, %v541
    %v557 = vshrl.u32 1326507024, %v542
    %v558 = vor.u32 %v556, %v557
    %vm559 = vcmp.lt.s32.totalorder %v540, 1
    %vm560 = vcmp.lt.s32.totalorder %v540, 2
    %vm561 = vcmp.lt.s32.totalorder %v540, 3
    %vm562 = vcmp.lt.s32.totalorder %v540, 4
    %v563 = vsel %vm559, %v543, %v546
    %v564 = vsel %vm562, %v552, 2102212464
    %v565 = vsel %vm561, %v549, %v564
    %v566 = vsel %vm560, %v563, %v565
    %v567 = vsel %vm559, %v546, %v549
    %v568 = vsel %vm562, %v555, 920167782
    %v569 = vsel %vm561, %v552, %v568
    %v570 = vsel %vm560, %v567, %v569
    %v571 = vsel %vm559, %v549, %v552
    %v572 = vsel %vm562, %v558, 1326507024
    %v573 = vsel %vm561, %v555, %v572
    %v574 = vsel %vm560, %v571, %v573
    %v575 = vshll.u32 %v535, 8
    %v576 = vmul.u32.u64.compose %v575, %v574
    %v577 = vextract.low.u32 %v576
    %v578 = vextract.high.u32 %v576
    %v579 = vmul.u32.u64.compose %v575, %v570
    %v580 = vextract.low.u32 %v579
    %v581 = vextract.high.u32 %v579
    %v582 = vmul.u32 %v575, %v566
    %v583 = vadd.s32 %v578, %v580
    %vm584 = vc.u32 %v578, %v580
    %v585 = vadd.s32 %v581, 1
    %v586 = vsel %vm584, %v585, %v581
    %v587 = vadd.s32 %v582, %v586
    %v588 = vadd.s32 %v587, 536870912
    %v589 = vshrl.u32 %v588, 30
    %v590 = vshll.u32 %v589, 30
    %v591 = vsub.s32 %v587, %v590
    %vm592 = vcmp.lt.s32.totalorder %v591, 0
    %v593 = vsub.s32 0, %v591
    %v594 = vsel %vm592, %v593, %v591
    %v595 = vclz %v594
    %v596 = vsub.s32 %v595, 2
    %vm597 = vcmp.gt.s32.totalorder 0, %v596
    %v598 = vsel %vm597, 0, %v596
    %v599 = vsub.s32 32, %v598
    %v600 = vshll.u32 %v591, %v598
    %v601 = vshrl.u32 %v583, %v599
    %v602 = vor.u32 %v600, %v601
    %v603 = vsub.s32 4294967266, %v598
    %v604 = vadd.s32 %v603, 127
    %v605 = vshll.u32 %v604, 23
    %v606 = vor.u32 4788187, %v605
    %v607 = vand.u32 2147483647, %v606
    %v609 = vcvt.s32.f32 %v602
    %v610 = vmul.f32 %v609, %v607
    %v611 = vxor.u32 %v610, 2147483648
    %v612 = vsel %vm529, %v611, %v610
    %v613 = vsub.s32 4, %v589
    %v614 = vsel %vm529, %v613, %v589
    %v615 = vsel %vm528, %v422, %v612
    %v616 = vsel %vm528, 0, %v614
    %v617 = vcosq.f32.pop %v615
    %v618 = vsinq.f32.pop %v615
    %vm619 = vweird.f32 %v422
    %v620 = vadd.s32 %v616, 3
    %v621 = vand.u32 %v620, 3
    %vm622 = vcmp.lt.s32.totalorder %v621, 2
    %vm623 = vcmp.eq.s32.totalorder %v621, 0
    %v624 = vxor.u32 %v618, 2147483648
    %v625 = vsel %vm623, %v617, %v624
    %vm626 = vcmp.eq.s32.totalorder %v621, 2
    %v627 = vxor.u32 %v617, 2147483648
    %v628 = vsel %vm626, %v627, %v618
    %v629 = vsel %vm622, %v625, %v628
    %v630 = vsel %vm619, nan, %v629
    %v631 = vand.u32 2147483647, %v421
    %vm632 = vcmp.le.f32.partialorder %v631, 0.7853982
    %vm633 = vcmp.lt.s32.totalorder %v421, 0
    %v634 = vand.u32 %v421, 2139095040
    %v635 = vshrl.u32 %v634, 23
    %v636 = vsub.s32 %v635, 127
    %v637 = vand.u32 2147483647, %v421
    %v638 = vand.u32 %v637, 8388607
    %v639 = vor.u32 %v638, 8388608
    %v640 = vsub.s32 0, %v639
    %v641 = vadd.s32 %v636, 1
    %vm642 = vcmp.gt.s32.totalorder %v641, 0
    %v643 = vsel %vm642, %v641, 0
    %v644 = vshrl.u32 %v643, 5
    %v645 = vand.u32 %v643, 31
    %v646 = vsub.s32 32, %v645
    %v647 = vshrl.u32 683565275, %v646
    %v648 = vshll.u32 683565275, %v645
    %v649 = vshrl.u32 2475754826, %v646
    %v650 = vor.u32 %v648, %v649
    %v651 = vshll.u32 2475754826, %v645
    %v652 = vshrl.u32 2131351028, %v646
    %v653 = vor.u32 %v651, %v652
    %v654 = vshll.u32 2131351028, %v645
    %v655 = vshrl.u32 2102212464, %v646
    %v656 = vor.u32 %v654, %v655
    %v657 = vshll.u32 2102212464, %v645
    %v658 = vshrl.u32 920167782, %v646
    %v659 = vor.u32 %v657, %v658
    %v660 = vshll.u32 920167782, %v645
    %v661 = vshrl.u32 1326507024, %v646
    %v662 = vor.u32 %v660, %v661
    %vm663 = vcmp.lt.s32.totalorder %v644, 1
    %vm664 = vcmp.lt.s32.totalorder %v644, 2
    %vm665 = vcmp.lt.s32.totalorder %v644, 3
    %vm666 = vcmp.lt.s32.totalorder %v644, 4
    %v667 = vsel %vm663, %v647, %v650
    %v668 = vsel %vm666, %v656, 2102212464
    %v669 = vsel %vm665, %v653, %v668
    %v670 = vsel %vm664, %v667, %v669
    %v671 = vsel %vm663, %v650, %v653
    %v672 = vsel %vm666, %v659, 920167782
    %v673 = vsel %vm665, %v656, %v672
    %v674 = vsel %vm664, %v671, %v673
    %v675 = vsel %vm663, %v653, %v656
    %v676 = vsel %vm666, %v662, 1326507024
    %v677 = vsel %vm665, %v659, %v676
    %v678 = vsel %vm664, %v675, %v677
    %v679 = vshll.u32 %v639, 8
    %v680 = vmul.u32.u64.compose %v679, %v678
    %v681 = vextract.low.u32 %v680
    %v682 = vextract.high.u32 %v680
    %v683 = vmul.u32.u64.compose %v679, %v674
    %v684 = vextract.low.u32 %v683
    %v685 = vextract.high.u32 %v683
    %v686 = vmul.u32 %v679, %v670
    %v687 = vadd.s32 %v682, %v684
    %vm688 = vc.u32 %v682, %v684
    %v689 = vadd.s32 %v685, 1
    %v690 = vsel %vm688, %v689, %v685
    %v691 = vadd.s32 %v686, %v690
    %v692 = vadd.s32 %v691, 536870912
    %v693 = vshrl.u32 %v692, 30
    %v694 = vshll.u32 %v693, 30
    %v695 = vsub.s32 %v691, %v694
    %vm696 = vcmp.lt.s32.totalorder %v695, 0
    %v697 = vsub.s32 0, %v695
    %v698 = vsel %vm696, %v697, %v695
    %v699 = vclz %v698
    %v700 = vsub.s32 %v699, 2
    %vm701 = vcmp.gt.s32.totalorder 0, %v700
    %v702 = vsel %vm701, 0, %v700
    %v703 = vsub.s32 32, %v702
    %v704 = vshll.u32 %v695, %v702
    %v705 = vshrl.u32 %v687, %v703
    %v706 = vor.u32 %v704, %v705
    %v707 = vsub.s32 4294967266, %v702
    %v708 = vadd.s32 %v707, 127
    %v709 = vshll.u32 %v708, 23
    %v710 = vor.u32 4788187, %v709
    %v711 = vand.u32 2147483647, %v710
    %v713 = vcvt.s32.f32 %v706
    %v714 = vmul.f32 %v713, %v711
    %v715 = vxor.u32 %v714, 2147483648
    %v716 = vsel %vm633, %v715, %v714
    %v717 = vsub.s32 4, %v693
    %v718 = vsel %vm633, %v717, %v693
    %v719 = vsel %vm632, %v421, %v716
    %v720 = vsel %vm632, 0, %v718
    %v721 = vcosq.f32.pop %v719
    %v722 = vsinq.f32.pop %v719
    %vm723 = vweird.f32 %v421
    %v724 = vand.u32 %v720, 3
    %vm725 = vcmp.lt.s32.totalorder %v724, 2
    %vm726 = vcmp.eq.s32.totalorder %v724, 0
    %v727 = vxor.u32 %v722, 2147483648
    %v728 = vsel %vm726, %v721, %v727
    %vm729 = vcmp.eq.s32.totalorder %v724, 2
    %v730 = vxor.u32 %v721, 2147483648
    %v731 = vsel %vm729, %v730, %v722
    %v732 = vsel %vm725, %v728, %v731
    %v733 = vsel %vm723, nan, %v732
    %v734 = vand.u32 2147483647, %v422
    %vm735 = vcmp.le.f32.partialorder %v734, 0.7853982
    %vm736 = vcmp.lt.s32.totalorder %v422, 0
    %v737 = vand.u32 %v422, 2139095040
    %v738 = vshrl.u32 %v737, 23
    %v739 = vsub.s32 %v738, 127
    %v740 = vand.u32 2147483647, %v422
    %v741 = vand.u32 %v740, 8388607
    %v742 = vor.u32 %v741, 8388608
    %v743 = vsub.s32 0, %v742
    %v744 = vadd.s32 %v739, 1
    %vm745 = vcmp.gt.s32.totalorder %v744, 0
    %v746 = vsel %vm745, %v744, 0
    %v747 = vshrl.u32 %v746, 5
    %v748 = vand.u32 %v746, 31
    %v749 = vsub.s32 32, %v748
    %v750 = vshrl.u32 683565275, %v749
    %v751 = vshll.u32 683565275, %v748
    %v752 = vshrl.u32 2475754826, %v749
    %v753 = vor.u32 %v751, %v752
    %v754 = vshll.u32 2475754826, %v748
    %v755 = vshrl.u32 2131351028, %v749
    %v756 = vor.u32 %v754, %v755
    %v757 = vshll.u32 2131351028, %v748
    %v758 = vshrl.u32 2102212464, %v749
    %v759 = vor.u32 %v757, %v758
    %v760 = vshll.u32 2102212464, %v748
    %v761 = vshrl.u32 920167782, %v749
    %v762 = vor.u32 %v760, %v761
    %v763 = vshll.u32 920167782, %v748
    %v764 = vshrl.u32 1326507024, %v749
    %v765 = vor.u32 %v763, %v764
    %vm766 = vcmp.lt.s32.totalorder %v747, 1
    %vm767 = vcmp.lt.s32.totalorder %v747, 2
    %vm768 = vcmp.lt.s32.totalorder %v747, 3
    %vm769 = vcmp.lt.s32.totalorder %v747, 4
    %v770 = vsel %vm766, %v750, %v753
    %v771 = vsel %vm769, %v759, 2102212464
    %v772 = vsel %vm768, %v756, %v771
    %v773 = vsel %vm767, %v770, %v772
    %v774 = vsel %vm766, %v753, %v756
    %v775 = vsel %vm769, %v762, 920167782
    %v776 = vsel %vm768, %v759, %v775
    %v777 = vsel %vm767, %v774, %v776
    %v778 = vsel %vm766, %v756, %v759
    %v779 = vsel %vm769, %v765, 1326507024
    %v780 = vsel %vm768, %v762, %v779
    %v781 = vsel %vm767, %v778, %v780
    %v782 = vshll.u32 %v742, 8
    %v783 = vmul.u32.u64.compose %v782, %v781
    %v784 = vextract.low.u32 %v783
    %v785 = vextract.high.u32 %v783
    %v786 = vmul.u32.u64.compose %v782, %v777
    %v787 = vextract.low.u32 %v786
    %v788 = vextract.high.u32 %v786
    %v789 = vmul.u32 %v782, %v773
    %v790 = vadd.s32 %v785, %v787
    %vm791 = vc.u32 %v785, %v787
    %v792 = vadd.s32 %v788, 1
    %v793 = vsel %vm791, %v792, %v788
    %v794 = vadd.s32 %v789, %v793
    %v795 = vadd.s32 %v794, 536870912
    %v796 = vshrl.u32 %v795, 30
    %v797 = vshll.u32 %v796, 30
    %v798 = vsub.s32 %v794, %v797
    %vm799 = vcmp.lt.s32.totalorder %v798, 0
    %v800 = vsub.s32 0, %v798
    %v801 = vsel %vm799, %v800, %v798
    %v802 = vclz %v801
    %v803 = vsub.s32 %v802, 2
    %vm804 = vcmp.gt.s32.totalorder 0, %v803
    %v805 = vsel %vm804, 0, %v803
    %v806 = vsub.s32 32, %v805
    %v807 = vshll.u32 %v798, %v805
    %v808 = vshrl.u32 %v790, %v806
    %v809 = vor.u32 %v807, %v808
    %v810 = vsub.s32 4294967266, %v805
    %v811 = vadd.s32 %v810, 127
    %v812 = vshll.u32 %v811, 23
    %v813 = vor.u32 4788187, %v812
    %v814 = vand.u32 2147483647, %v813
    %v816 = vcvt.s32.f32 %v809
    %v817 = vmul.f32 %v816, %v814
    %v818 = vxor.u32 %v817, 2147483648
    %v819 = vsel %vm736, %v818, %v817
    %v820 = vsub.s32 4, %v796
    %v821 = vsel %vm736, %v820, %v796
    %v822 = vsel %vm735, %v422, %v819
    %v823 = vsel %vm735, 0, %v821
    %v824 = vcosq.f32.pop %v822
    %v825 = vsinq.f32.pop %v822
    %vm826 = vweird.f32 %v422
    %v827 = vand.u32 %v823, 3
    %vm828 = vcmp.lt.s32.totalorder %v827, 2
    %vm829 = vcmp.eq.s32.totalorder %v827, 0
    %v830 = vxor.u32 %v825, 2147483648
    %v831 = vsel %vm829, %v824, %v830
    %vm832 = vcmp.eq.s32.totalorder %v827, 2
    %v833 = vxor.u32 %v824, 2147483648
    %v834 = vsel %vm832, %v833, %v825
    %v835 = vsel %vm828, %v831, %v834
    %v836 = vsel %vm826, nan, %v835
    %839 = vrot.lane.b32.xlu0 %v733, 16
    %v840 = vpop.permute.xlu0 %839
    %841 = vrot.lane.b32.xlu0 %v836, 16
    %v842 = vpop.permute.xlu0 %841
    %vm845 = vcmask 130048
    %v846 = vsel %vm845, %v526, %v840
    %v847 = vsel %vm845, %v630, %v842
    %v848 = vld [vmem:[#allocation6] sm:$0x3]
    %v849 = vlaneseq
    %v850 = vshrl.u32 %v849, 7
    %v851 = vsub.s32 0, %v850
    %v852 = vrot.slane %v848, %v851
    %854 = vbcast.lane.b32.xlu0 %v852, 256
    %v855 = vpop.permute.xlu0 %854
    %v856 = vlaneseq
    %v857 = vshrl.u32 %v856, 7
    %v858 = vsub.s32 1, %v857
    %v859 = vrot.slane %v848, %v858
    %861 = vbcast.lane.b32.xlu0 %v859, 256
    %v862 = vpop.permute.xlu0 %861
    %v863 = vlaneseq
    %v864 = vand.u32 %v863, 127
    %vm865 = vcmp.eq.s32.totalorder %v855, %v864
    %vm866 = vcmp.eq.s32.totalorder %v862, %v864
    %v867 = vsel %vm865, 1, 0
    %v868 = vsel %vm866, 1, 0
    %v869 = vcvt.s32.f32 %v867
    %v870 = vcvt.s32.f32 %v868
    %v871 = vpack.c.bf16 %v869, %v869
    %v872 = vpack.c.bf16 %v870, %v870
    %v873 = vld [vmem:[#allocation14] sm:$0xf]
    %v876 = vunpack.c.l.b16 %v871
    %v877 = vunpack.c.l.b16 %v872
    %v878 = vpack.c.b16 %v877, %v876
    %vm879 = vcmask 64512
    %v881 = vsel %vm879, %v878, 0
    %vm883 = vcmask 1043456
    %v885 = vsel %vm883, %v873, 0
    %887 = vmatprep.subr.bf16.mxu0 0
    %888 = vmatpush1.bf16.msra.mxu0 %v885
    %889 = vmatprep.subr.bf16.mxu0 0
    %890 = vmatpush1.bf16.msra.mxu0 0
    %891 = vmatprep.subr.bf16.mxu0 0
    %892 = vmatpush1.bf16.msra.mxu0 0
    %893 = vmatprep.subr.bf16.mxu0 0
    %894 = vmatpush1.bf16.msra.mxu0 0
    %895 = vmatprep.subr.bf16.mxu0 0
    %896 = vmatpush1.bf16.msra.mxu0 0
    %897 = vmatprep.subr.bf16.mxu0 0
    %898 = vmatpush1.bf16.msra.mxu0 0
    %899 = vmatprep.subr.bf16.mxu0 0
    %900 = vmatpush1.bf16.msra.mxu0 0
    %901 = vmatprep.subr.bf16.mxu0 0
    %902 = vmatpush1.bf16.msra.mxu0 0
    %903 = vmatprep.subr.bf16.mxu0 0
    %904 = vmatpush1.bf16.msra.mxu0 0
    %905 = vmatprep.subr.bf16.mxu0 0
    %906 = vmatpush1.bf16.msra.mxu0 0
    %907 = vmatprep.subr.bf16.mxu0 0
    %908 = vmatpush1.bf16.msra.mxu0 0
    %909 = vmatprep.subr.bf16.mxu0 0
    %910 = vmatpush1.bf16.msra.mxu0 0
    %911 = vmatprep.subr.bf16.mxu0 0
    %912 = vmatpush1.bf16.msra.mxu0 0
    %913 = vmatprep.subr.bf16.mxu0 0
    %914 = vmatpush1.bf16.msra.mxu0 0
    %915 = vmatprep.subr.bf16.mxu0 0
    %916 = vmatpush1.bf16.msra.mxu0 0
    %917 = vmatprep.subr.bf16.mxu0 0
    %918 = vmatpush1.bf16.msra.mxu0 0
    %919 = vmatprep.mubr.bf16.mxu0 0
    %920 = vmatmul.mubr.bf16.gmra.mrb[0].mxu0 %v881
    %v921 = vpop.f32.mrb[0].mxu0
    %v922 = vadd.f32 0.0, %v921
    %v923 = vpop.f32.mrb[0].mxu0
    %v924 = vpop.f32.mrb[0].mxu0
    %v925 = vadd.f32 0.0, %v924
    %v926 = vpop.f32.mrb[0].mxu0
    %927 = vdwg.mxu0
    %v928 = vpack.c.bf16 %v847, %v846
    %v929 = vld [vmem:[#allocation15] sm:$0xf]
    %v930 = vld [vmem:[#allocation15 + $0x4] sm:$0xf]
    %v931 = vld [vmem:[#allocation15 + $0x8] sm:$0xf]
    %v932 = vld [vmem:[#allocation15 + $0xc] sm:$0xf]
    %v933 = vld [vmem:[#allocation17] sm:$0x1]
    %v935 = vlaneseq
    %v936 = vshrl.u32 %v935, 7
    %v937 = vsub.s32 0, %v936
    %v938 = vrot.slane %v933, %v937
    %v944 = vunpack.c.l.b16 %v929
    %v945 = vunpack.c.l.b16 %v930
    %v946 = vunpack.c.l.b16 %v931
    %v947 = vunpack.c.l.b16 %v932
    %v948 = vpack.c.b16 %v945, %v944
    %v949 = vpack.c.b16 %v947, %v946
    %vm952 = vcmask 261120
    %v954 = vsel %vm952, %v928, 0
    %956 = vmatprep.subr.bf16.mxu0 0
    %957 = vmatpush1.bf16.msra.mxu0 %v948
    %958 = vmatprep.subr.bf16.mxu0 0
    %959 = vmatpush1.bf16.msra.mxu0 %v949
    %960 = vmatprep.subr.bf16.mxu0 0
    %961 = vmatpush1.bf16.msra.mxu0 0
    %962 = vmatprep.subr.bf16.mxu0 0
    %963 = vmatpush1.bf16.msra.mxu0 0
    %964 = vmatprep.subr.bf16.mxu0 0
    %965 = vmatpush1.bf16.msra.mxu0 0
    %966 = vmatprep.subr.bf16.mxu0 0
    %967 = vmatpush1.bf16.msra.mxu0 0
    %968 = vmatprep.subr.bf16.mxu0 0
    %969 = vmatpush1.bf16.msra.mxu0 0
    %970 = vmatprep.subr.bf16.mxu0 0
    %971 = vmatpush1.bf16.msra.mxu0 0
    %972 = vmatprep.subr.bf16.mxu0 0
    %973 = vmatpush1.bf16.msra.mxu0 0
    %974 = vmatprep.subr.bf16.mxu0 0
    %975 = vmatpush1.bf16.msra.mxu0 0
    %976 = vmatprep.subr.bf16.mxu0 0
    %977 = vmatpush1.bf16.msra.mxu0 0
    %978 = vmatprep.subr.bf16.mxu0 0
    %979 = vmatpush1.bf16.msra.mxu0 0
    %980 = vmatprep.subr.bf16.mxu0 0
    %981 = vmatpush1.bf16.msra.mxu0 0
    %982 = vmatprep.subr.bf16.mxu0 0
    %983 = vmatpush1.bf16.msra.mxu0 0
    %984 = vmatprep.subr.bf16.mxu0 0
    %985 = vmatpush1.bf16.msra.mxu0 0
    %986 = vmatprep.subr.bf16.mxu0 0
    %987 = vmatpush1.bf16.msra.mxu0 0
    %988 = vmatprep.mubr.bf16.mxu0 0
    %989 = vmatmul.mubr.bf16.gmra.mrb[0].mxu0 %v954
    %v990 = vpop.f32.mrb[0].mxu0
    %v991 = vadd.f32 %v938, %v990
    %v992 = vpop.f32.mrb[0].mxu0
    %v993 = vpop.f32.mrb[0].mxu0
    %v994 = vadd.f32 %v938, %v993
    %v995 = vpop.f32.mrb[0].mxu0
    %996 = vdwg.mxu0
    %v997 = vmax.f32 %v991, 0.0
    %v998 = vmax.f32 %v994, 0.0
    %v999 = vpack.c.bf16 %v998, %v997
    %v1000 = vld [vmem:[#allocation18] sm:$0xf]
    %v1001 = vld [vmem:[#allocation18 + $0x4] sm:$0xf]
    %v1002 = vld [vmem:[#allocation18 + $0x8] sm:$0xf]
    %v1003 = vld [vmem:[#allocation18 + $0xc] sm:$0xf]
    %v1004 = vld [vmem:[#allocation20] sm:$0x1]
    %v1006 = vlaneseq
    %v1007 = vshrl.u32 %v1006, 7
    %v1008 = vsub.s32 0, %v1007
    %v1009 = vrot.slane %v1004, %v1008
    %v1015 = vunpack.c.l.b16 %v1000
    %v1016 = vunpack.c.l.b16 %v1001
    %v1017 = vunpack.c.l.b16 %v1002
    %v1018 = vunpack.c.l.b16 %v1003
    %v1019 = vpack.c.b16 %v1016, %v1015
    %v1020 = vpack.c.b16 %v1018, %v1017
    %v1024 = vsel %vm952, %v999, 0
    %1026 = vmatprep.subr.bf16.mxu0 0
    %1027 = vmatpush1.bf16.msra.mxu0 %v1019
    %1028 = vmatprep.subr.bf16.mxu0 0
    %1029 = vmatpush1.bf16.msra.mxu0 %v1020
    %1030 = vmatprep.subr.bf16.mxu0 0
    %1031 = vmatpush1.bf16.msra.mxu0 0
    %1032 = vmatprep.subr.bf16.mxu0 0
    %1033 = vmatpush1.bf16.msra.mxu0 0
    %1034 = vmatprep.subr.bf16.mxu0 0
    %1035 = vmatpush1.bf16.msra.mxu0 0
    %1036 = vmatprep.subr.bf16.mxu0 0
    %1037 = vmatpush1.bf16.msra.mxu0 0
    %1038 = vmatprep.subr.bf16.mxu0 0
    %1039 = vmatpush1.bf16.msra.mxu0 0
    %1040 = vmatprep.subr.bf16.mxu0 0
    %1041 = vmatpush1.bf16.msra.mxu0 0
    %1042 = vmatprep.subr.bf16.mxu0 0
    %1043 = vmatpush1.bf16.msra.mxu0 0
    %1044 = vmatprep.subr.bf16.mxu0 0
    %1045 = vmatpush1.bf16.msra.mxu0 0
    %1046 = vmatprep.subr.bf16.mxu0 0
    %1047 = vmatpush1.bf16.msra.mxu0 0
    %1048 = vmatprep.subr.bf16.mxu0 0
    %1049 = vmatpush1.bf16.msra.mxu0 0
    %1050 = vmatprep.subr.bf16.mxu0 0
    %1051 = vmatpush1.bf16.msra.mxu0 0
    %1052 = vmatprep.subr.bf16.mxu0 0
    %1053 = vmatpush1.bf16.msra.mxu0 0
    %1054 = vmatprep.subr.bf16.mxu0 0
    %1055 = vmatpush1.bf16.msra.mxu0 0
    %1056 = vmatprep.subr.bf16.mxu0 0
    %1057 = vmatpush1.bf16.msra.mxu0 0
    %1058 = vmatprep.mubr.bf16.mxu0 0
    %1059 = vmatmul.mubr.bf16.gmra.mrb[0].mxu0 %v1024
    %v1060 = vpop.f32.mrb[0].mxu0
    %v1061 = vadd.f32 %v1009, %v1060
    %v1062 = vpop.f32.mrb[0].mxu0
    %v1063 = vpop.f32.mrb[0].mxu0
    %v1064 = vadd.f32 %v1009, %v1063
    %v1065 = vpop.f32.mrb[0].mxu0
    %1066 = vdwg.mxu0
    %v1067 = vadd.f32 %v1061, %v922
    %v1068 = vadd.f32 %v1064, %v925
    %v1069 = vld [vmem:[#allocation8] sm:$0xff]
    %v1070 = vld [vmem:[#allocation8 + $0x8] sm:$0xff]
    %v1071 = vpack.c.bf16 %v1070, %v1069
    %v1072 = vld [vmem:[#allocation21] sm:$0xf]
    %v1073 = vld [vmem:[#allocation21 + $0x4] sm:$0xf]
    %v1074 = vld [vmem:[#allocation23] sm:$0x1]
    %v1076 = vlaneseq
    %v1077 = vshrl.u32 %v1076, 7
    %v1078 = vsub.s32 0, %v1077
    %v1079 = vrot.slane %v1074, %v1078
    %v1083 = vunpack.c.l.b16 %v1072
    %v1084 = vunpack.c.l.b16 %v1073
    %v1085 = vpack.c.b16 %v1084, %v1083
    %v1088 = vsel %vm845, %v1071, 0
    %1090 = vmatprep.subr.bf16.mxu0 0
    %1091 = vmatpush1.bf16.msra.mxu0 %v1085
    %1092 = vmatprep.subr.bf16.mxu0 0
    %1093 = vmatpush1.bf16.msra.mxu0 0
    %1094 = vmatprep.subr.bf16.mxu0 0
    %1095 = vmatpush1.bf16.msra.mxu0 0
    %1096 = vmatprep.subr.bf16.mxu0 0
    %1097 = vmatpush1.bf16.msra.mxu0 0
    %1098 = vmatprep.subr.bf16.mxu0 0
    %1099 = vmatpush1.bf16.msra.mxu0 0
    %1100 = vmatprep.subr.bf16.mxu0 0
    %1101 = vmatpush1.bf16.msra.mxu0 0
    %1102 = vmatprep.subr.bf16.mxu0 0
    %1103 = vmatpush1.bf16.msra.mxu0 0
    %1104 = vmatprep.subr.bf16.mxu0 0
    %1105 = vmatpush1.bf16.msra.mxu0 0
    %1106 = vmatprep.subr.bf16.mxu0 0
    %1107 = vmatpush1.bf16.msra.mxu0 0
    %1108 = vmatprep.subr.bf16.mxu0 0
    %1109 = vmatpush1.bf16.msra.mxu0 0
    %1110 = vmatprep.subr.bf16.mxu0 0
    %1111 = vmatpush1.bf16.msra.mxu0 0
    %1112 = vmatprep.subr.bf16.mxu0 0
    %1113 = vmatpush1.bf16.msra.mxu0 0
    %1114 = vmatprep.subr.bf16.mxu0 0
    %1115 = vmatpush1.bf16.msra.mxu0 0
    %1116 = vmatprep.subr.bf16.mxu0 0
    %1117 = vmatpush1.bf16.msra.mxu0 0
    %1118 = vmatprep.subr.bf16.mxu0 0
    %1119 = vmatpush1.bf16.msra.mxu0 0
    %1120 = vmatprep.subr.bf16.mxu0 0
    %1121 = vmatpush1.bf16.msra.mxu0 0
    %1122 = vmatprep.mubr.bf16.mxu0 0
    %1123 = vmatmul.mubr.bf16.gmra.mrb[0].mxu0 %v1088
    %v1124 = vpop.f32.mrb[0].mxu0
    %v1125 = vadd.f32 %v1079, %v1124
    %v1126 = vpop.f32.mrb[0].mxu0
    %v1127 = vpop.f32.mrb[0].mxu0
    %v1128 = vadd.f32 %v1079, %v1127
    %v1129 = vpop.f32.mrb[0].mxu0
    %1130 = vdwg.mxu0
    %v1131 = vmax.f32 %v1125, 0.0
    %v1132 = vmax.f32 %v1128, 0.0
    %v1133 = vpack.c.bf16 %v1132, %v1131
    %v1134 = vld [vmem:[#allocation24] sm:$0xf]
    %v1135 = vld [vmem:[#allocation24 + $0x4] sm:$0xf]
    %v1136 = vld [vmem:[#allocation24 + $0x8] sm:$0xf]
    %v1137 = vld [vmem:[#allocation24 + $0xc] sm:$0xf]
    %v1138 = vld [vmem:[#allocation26] sm:$0x1]
    %v1140 = vlaneseq
    %v1141 = vshrl.u32 %v1140, 7
    %v1142 = vsub.s32 0, %v1141
    %v1143 = vrot.slane %v1138, %v1142
    %v1149 = vunpack.c.l.b16 %v1134
    %v1150 = vunpack.c.l.b16 %v1135
    %v1151 = vunpack.c.l.b16 %v1136
    %v1152 = vunpack.c.l.b16 %v1137
    %v1153 = vpack.c.b16 %v1150, %v1149
    %v1154 = vpack.c.b16 %v1152, %v1151
    %v1158 = vsel %vm952, %v1133, 0
    %1160 = vmatprep.subr.bf16.mxu0 0
    %1161 = vmatpush1.bf16.msra.mxu0 %v1153
    %1162 = vmatprep.subr.bf16.mxu0 0
    %1163 = vmatpush1.bf16.msra.mxu0 %v1154
    %1164 = vmatprep.subr.bf16.mxu0 0
    %1165 = vmatpush1.bf16.msra.mxu0 0
    %1166 = vmatprep.subr.bf16.mxu0 0
    %1167 = vmatpush1.bf16.msra.mxu0 0
    %1168 = vmatprep.subr.bf16.mxu0 0
    %1169 = vmatpush1.bf16.msra.mxu0 0
    %1170 = vmatprep.subr.bf16.mxu0 0
    %1171 = vmatpush1.bf16.msra.mxu0 0
    %1172 = vmatprep.subr.bf16.mxu0 0
    %1173 = vmatpush1.bf16.msra.mxu0 0
    %1174 = vmatprep.subr.bf16.mxu0 0
    %1175 = vmatpush1.bf16.msra.mxu0 0
    %1176 = vmatprep.subr.bf16.mxu0 0
    %1177 = vmatpush1.bf16.msra.mxu0 0
    %1178 = vmatprep.subr.bf16.mxu0 0
    %1179 = vmatpush1.bf16.msra.mxu0 0
    %1180 = vmatprep.subr.bf16.mxu0 0
    %1181 = vmatpush1.bf16.msra.mxu0 0
    %1182 = vmatprep.subr.bf16.mxu0 0
    %1183 = vmatpush1.bf16.msra.mxu0 0
    %1184 = vmatprep.subr.bf16.mxu0 0
    %1185 = vmatpush1.bf16.msra.mxu0 0
    %1186 = vmatprep.subr.bf16.mxu0 0
    %1187 = vmatpush1.bf16.msra.mxu0 0
    %1188 = vmatprep.subr.bf16.mxu0 0
    %1189 = vmatpush1.bf16.msra.mxu0 0
    %1190 = vmatprep.subr.bf16.mxu0 0
    %1191 = vmatpush1.bf16.msra.mxu0 0
    %1192 = vmatprep.mubr.bf16.mxu0 0
    %1193 = vmatmul.mubr.bf16.gmra.mrb[0].mxu0 %v1158
    %v1194 = vpop.f32.mrb[0].mxu0
    %v1195 = vadd.f32 %v1143, %v1194
    %v1196 = vpop.f32.mrb[0].mxu0
    %v1197 = vpop.f32.mrb[0].mxu0
    %v1198 = vadd.f32 %v1143, %v1197
    %v1199 = vpop.f32.mrb[0].mxu0
    %1200 = vdwg.mxu0
    %v1201 = vpack.c.bf16 %v1198, %v1195
    %v1202 = vld [vmem:[#allocation29] sm:$0xf]
    %v1203 = vld [vmem:[#allocation29 + $0x4] sm:$0xf]
    %v1204 = vld [vmem:[#allocation29 + $0x8] sm:$0xf]
    %v1205 = vld [vmem:[#allocation29 + $0xc] sm:$0xf]
    %v1206 = vld [vmem:[#allocation30] sm:$0x1]
    %v1208 = vlaneseq
    %v1209 = vshrl.u32 %v1208, 7
    %v1210 = vsub.s32 0, %v1209
    %v1211 = vrot.slane %v1206, %v1210
    %v1217 = vunpack.c.l.b16 %v1202
    %v1218 = vunpack.c.l.b16 %v1203
    %v1219 = vunpack.c.l.b16 %v1204
    %v1220 = vunpack.c.l.b16 %v1205
    %v1221 = vpack.c.b16 %v1218, %v1217
    %v1222 = vpack.c.b16 %v1220, %v1219
    %v1226 = vsel %vm952, %v1201, 0
    %1228 = vmatprep.subr.bf16.mxu0 0
    %1229 = vmatpush1.bf16.msra.mxu0 %v1221
    %1230 = vmatprep.subr.bf16.mxu0 0
    %1231 = vmatpush1.bf16.msra.mxu0 %v1222
    %1232 = vmatprep.subr.bf16.mxu0 0
    %1233 = vmatpush1.bf16.msra.mxu0 0
    %1234 = vmatprep.subr.bf16.mxu0 0
    %1235 = vmatpush1.bf16.msra.mxu0 0
    %1236 = vmatprep.subr.bf16.mxu0 0
    %1237 = vmatpush1.bf16.msra.mxu0 0
    %1238 = vmatprep.subr.bf16.mxu0 0
    %1239 = vmatpush1.bf16.msra.mxu0 0
    %1240 = vmatprep.subr.bf16.mxu0 0
    %1241 = vmatpush1.bf16.msra.mxu0 0
    %1242 = vmatprep.subr.bf16.mxu0 0
    %1243 = vmatpush1.bf16.msra.mxu0 0
    %1244 = vmatprep.subr.bf16.mxu0 0
    %1245 = vmatpush1.bf16.msra.mxu0 0
    %1246 = vmatprep.subr.bf16.mxu0 0
    %1247 = vmatpush1.bf16.msra.mxu0 0
    %1248 = vmatprep.subr.bf16.mxu0 0
    %1249 = vmatpush1.bf16.msra.mxu0 0
    %1250 = vmatprep.subr.bf16.mxu0 0
    %1251 = vmatpush1.bf16.msra.mxu0 0
    %1252 = vmatprep.subr.bf16.mxu0 0
    %1253 = vmatpush1.bf16.msra.mxu0 0
    %1254 = vmatprep.subr.bf16.mxu0 0
    %1255 = vmatpush1.bf16.msra.mxu0 0
    %1256 = vmatprep.subr.bf16.mxu0 0
    %1257 = vmatpush1.bf16.msra.mxu0 0
    %1258 = vmatprep.subr.bf16.mxu0 0
    %1259 = vmatpush1.bf16.msra.mxu0 0
    %1260 = vmatprep.mubr.bf16.mxu0 0
    %1261 = vmatmul.mubr.bf16.gmra.mrb[0].mxu0 %v1226
    %v1262 = vpop.f32.mrb[0].mxu0
    %v1263 = vadd.f32 %v1211, %v1262
    %v1264 = vpop.f32.mrb[0].mxu0
    %v1265 = vpop.f32.mrb[0].mxu0
    %v1266 = vadd.f32 %v1211, %v1265
    %v1267 = vpop.f32.mrb[0].mxu0
    %1268 = vdwg.mxu0
    %v1269 = vld [vmem:[#allocation32] sm:$0xf]
    %v1270 = vld [vmem:[#allocation32 + $0x4] sm:$0xf]
    %v1271 = vld [vmem:[#allocation32 + $0x8] sm:$0xf]
    %v1272 = vld [vmem:[#allocation32 + $0xc] sm:$0xf]
    %v1273 = vld [vmem:[#allocation33] sm:$0x1]
    %v1275 = vlaneseq
    %v1276 = vshrl.u32 %v1275, 7
    %v1277 = vsub.s32 0, %v1276
    %v1278 = vrot.slane %v1273, %v1277
    %v1284 = vunpack.c.l.b16 %v1269
    %v1285 = vunpack.c.l.b16 %v1270
    %v1286 = vunpack.c.l.b16 %v1271
    %v1287 = vunpack.c.l.b16 %v1272
    %v1288 = vpack.c.b16 %v1285, %v1284
    %v1289 = vpack.c.b16 %v1287, %v1286
    %1292 = vmatprep.subr.bf16.mxu0 0
    %1293 = vmatpush1.bf16.msra.mxu0 %v1288
    %1294 = vmatprep.subr.bf16.mxu0 0
    %1295 = vmatpush1.bf16.msra.mxu0 %v1289
    %1296 = vmatprep.subr.bf16.mxu0 0
    %1297 = vmatpush1.bf16.msra.mxu0 0
    %1298 = vmatprep.subr.bf16.mxu0 0
    %1299 = vmatpush1.bf16.msra.mxu0 0
    %1300 = vmatprep.subr.bf16.mxu0 0
    %1301 = vmatpush1.bf16.msra.mxu0 0
    %1302 = vmatprep.subr.bf16.mxu0 0
    %1303 = vmatpush1.bf16.msra.mxu0 0
    %1304 = vmatprep.subr.bf16.mxu0 0
    %1305 = vmatpush1.bf16.msra.mxu0 0
    %1306 = vmatprep.subr.bf16.mxu0 0
    %1307 = vmatpush1.bf16.msra.mxu0 0
    %1308 = vmatprep.subr.bf16.mxu0 0
    %1309 = vmatpush1.bf16.msra.mxu0 0
    %1310 = vmatprep.subr.bf16.mxu0 0
    %1311 = vmatpush1.bf16.msra.mxu0 0
    %1312 = vmatprep.subr.bf16.mxu0 0
    %1313 = vmatpush1.bf16.msra.mxu0 0
    %1314 = vmatprep.subr.bf16.mxu0 0
    %1315 = vmatpush1.bf16.msra.mxu0 0
    %1316 = vmatprep.subr.bf16.mxu0 0
    %1317 = vmatpush1.bf16.msra.mxu0 0
    %1318 = vmatprep.subr.bf16.mxu0 0
    %1319 = vmatpush1.bf16.msra.mxu0 0
    %1320 = vmatprep.subr.bf16.mxu0 0
    %1321 = vmatpush1.bf16.msra.mxu0 0
    %1322 = vmatprep.subr.bf16.mxu0 0
    %1323 = vmatpush1.bf16.msra.mxu0 0
    %1324 = vmatprep.mubr.bf16.mxu0 0
    %1325 = vmatmul.mubr.bf16.gmra.mrb[0].mxu0 %v1226
    %v1326 = vpop.f32.mrb[0].mxu0
    %v1327 = vadd.f32 %v1278, %v1326
    %v1328 = vpop.f32.mrb[0].mxu0
    %v1329 = vpop.f32.mrb[0].mxu0
    %v1330 = vadd.f32 %v1278, %v1329
    %v1331 = vpop.f32.mrb[0].mxu0
    %1332 = vdwg.mxu0
    %v1333 = vld [vmem:[#allocation12] sm:$0x3]
    %v1334 = vld [vmem:[#allocation11] sm:$0x1]
    %v1335 = vld [vmem:[#allocation39] sm:$0x1]
    %v1336 = vld [vmem:[#allocation39 + $0x1] sm:$0x1]
    %v1337 = vld [vmem:[#allocation39 + $0x2] sm:$0x1]
    %v1338 = vld [vmem:[#allocation39 + $0x3] sm:$0x1]
    %v1339 = vld [vmem:[#allocation39 + $0x4] sm:$0x1]
    %v1340 = vld [vmem:[#allocation39 + $0x5] sm:$0x1]
    %v1341 = vld [vmem:[#allocation39 + $0x6] sm:$0x1]
    %v1342 = vld [vmem:[#allocation39 + $0x7] sm:$0x1]
    %v1343 = vpack.c.bf16 %v1068, %v1067
    %v1344 = vld [vmem:[#allocation27] sm:$0xf]
    %v1345 = vld [vmem:[#allocation27 + $0x4] sm:$0xf]
    %v1346 = vld [vmem:[#allocation27 + $0x8] sm:$0xf]
    %v1347 = vld [vmem:[#allocation27 + $0xc] sm:$0xf]
    %v1348 = vlaneseq
    %v1349 = vshrl.u32 %v1348, 7
    %v1350 = vsub.s32 0, %v1349
    %v1351 = vrot.slane %v1335, %v1350
    %v1356 = vunpack.c.l.b16 %v1344
    %v1357 = vunpack.c.l.b16 %v1345
    %v1358 = vunpack.c.l.b16 %v1346
    %v1359 = vunpack.c.l.b16 %v1347
    %v1360 = vpack.c.b16 %v1357, %v1356
    %v1361 = vpack.c.b16 %v1359, %v1358
    %v1365 = vsel %vm952, %v1343, 0
    %1367 = vmatprep.subr.bf16.mxu0 0
    %1368 = vmatpush1.bf16.msra.mxu0 %v1360
    %1369 = vmatprep.subr.bf16.mxu0 0
    %1370 = vmatpush1.bf16.msra.mxu0 %v1361
    %1371 = vmatprep.subr.bf16.mxu0 0
    %1372 = vmatpush1.bf16.msra.mxu0 0
    %1373 = vmatprep.subr.bf16.mxu0 0
    %1374 = vmatpush1.bf16.msra.mxu0 0
    %1375 = vmatprep.subr.bf16.mxu0 0
    %1376 = vmatpush1.bf16.msra.mxu0 0
    %1377 = vmatprep.subr.bf16.mxu0 0
    %1378 = vmatpush1.bf16.msra.mxu0 0
    %1379 = vmatprep.subr.bf16.mxu0 0
    %1380 = vmatpush1.bf16.msra.mxu0 0
    %1381 = vmatprep.subr.bf16.mxu0 0
    %1382 = vmatpush1.bf16.msra.mxu0 0
    %1383 = vmatprep.subr.bf16.mxu0 0
    %1384 = vmatpush1.bf16.msra.mxu0 0
    %1385 = vmatprep.subr.bf16.mxu0 0
    %1386 = vmatpush1.bf16.msra.mxu0 0
    %1387 = vmatprep.subr.bf16.mxu0 0
    %1388 = vmatpush1.bf16.msra.mxu0 0
    %1389 = vmatprep.subr.bf16.mxu0 0
    %1390 = vmatpush1.bf16.msra.mxu0 0
    %1391 = vmatprep.subr.bf16.mxu0 0
    %1392 = vmatpush1.bf16.msra.mxu0 0
    %1393 = vmatprep.subr.bf16.mxu0 0
    %1394 = vmatpush1.bf16.msra.mxu0 0
    %1395 = vmatprep.subr.bf16.mxu0 0
    %1396 = vmatpush1.bf16.msra.mxu0 0
    %1397 = vmatprep.subr.bf16.mxu0 0
    %1398 = vmatpush1.bf16.msra.mxu0 0
    %1399 = vmatprep.mubr.bf16.mxu0 0
    %1400 = vmatmul.mubr.bf16.gmra.mrb[0].mxu0 %v1365
    %v1401 = vpop.f32.mrb[0].mxu0
    %v1402 = vadd.f32 %v1351, %v1401
    %v1403 = vpop.f32.mrb[0].mxu0
    %v1404 = vpop.f32.mrb[0].mxu0
    %v1405 = vadd.f32 %v1351, %v1404
    %v1406 = vpop.f32.mrb[0].mxu0
    %1407 = vdwg.mxu0
    %v1408 = vpack.c.bf16 %v1402, %v1402
    %v1409 = vpack.c.bf16 %v1405, %v1405
    %v1410 = vpack.c.bf16 %v1263, %v1263
    %v1411 = vpack.c.bf16 %v1266, %v1266
    %v1412 = vpack.c.bf16 %v1327, %v1327
    %v1413 = vpack.c.bf16 %v1330, %v1330
    %v1415 = vpack.i.b16 %v1333, %v1333
    %v1417 = vlaneseq
    %v1418 = vshrl.u32 %v1417, 7
    %v1419 = vsub.s32 0, %v1418
    %v1420 = vrot.slane %v1415, %v1419
    %v1421 = vmul.bf16 %v1410, %v1420
    %v1422 = vmul.bf16 %v1411, %v1420
    %v1423 = vshrl.u32 %v1333, 16
    %v1424 = vpack.i.b16 %v1423, %v1423
    %v1426 = vlaneseq
    %v1427 = vshrl.u32 %v1426, 7
    %v1428 = vsub.s32 0, %v1427
    %v1429 = vrot.slane %v1424, %v1428
    %v1430 = vmul.bf16 %v1410, %v1429
    %v1431 = vmul.bf16 %v1411, %v1429
    %v1432 = vlaneseq
    %v1433 = vshrl.u32 %v1432, 7
    %v1434 = vsub.s32 1, %v1433
    %v1435 = vrot.slane %v1415, %v1434
    %v1436 = vmul.bf16 %v1410, %v1435
    %v1437 = vmul.bf16 %v1411, %v1435
    %v1438 = vlaneseq
    %v1439 = vshrl.u32 %v1438, 7
    %v1440 = vsub.s32 1, %v1439
    %v1441 = vrot.slane %v1424, %v1440
    %v1442 = vmul.bf16 %v1410, %v1441
    %v1443 = vmul.bf16 %v1411, %v1441
    %v1446 = vrot.slane %v1430, 4
    %v1447 = vrot.slane %v1431, 4
    %v1450 = vrot.slane %v1442, 4
    %v1451 = vrot.slane %v1443, 4
    %v1454 = vsel %vm883, %v1421, %v1446
    %v1457 = vsel %vm883, %v1422, %v1447
    %v1460 = vsel %vm883, %v1436, %v1450
    %v1463 = vsel %vm883, %v1437, %v1451
    %v1464 = vmul.bf16 %v1412, %v1420
    %v1465 = vmul.bf16 %v1413, %v1420
    %v1466 = vmul.bf16 %v1412, %v1429
    %v1467 = vmul.bf16 %v1413, %v1429
    %v1468 = vmul.bf16 %v1412, %v1435
    %v1469 = vmul.bf16 %v1413, %v1435
    %v1470 = vmul.bf16 %v1412, %v1441
    %v1471 = vmul.bf16 %v1413, %v1441
    %v1474 = vrot.slane %v1466, 4
    %v1475 = vrot.slane %v1467, 4
    %v1478 = vrot.slane %v1470, 4
    %v1479 = vrot.slane %v1471, 4
    %v1482 = vsel %vm883, %v1464, %v1474
    %v1486 = vsel %vm883, %v1465, %v1475
    %v1490 = vsel %vm883, %v1468, %v1478
    %v1494 = vsel %vm883, %v1469, %v1479
    %v1497 = vlaneseq
    %v1498 = vshrl.u32 %v1497, 7
    %v1499 = vsub.s32 0, %v1498
    %v1500 = vrot.slane %v1334, %v1499
    %v1503 = vsel %vm952, %v1408, 0
    %v1505 = vsel %vm952, %v1454, 0
    %v1507 = vsel %vm952, %v1460, 0
    %1509 = vmatprep.subr.bf16.mxu0 0
    %1510 = vmatpush1.bf16.xpose.msra.mxu0 %v1505
    %1511 = vmatprep.subr.bf16.mxu0 0
    %1512 = vmatpush1.bf16.xpose.msra.mxu0 %v1507
    %1513 = vmatprep.subr.bf16.mxu0 0
    %1514 = vmatpush1.bf16.xpose.msra.mxu0 0
    %1515 = vmatprep.subr.bf16.mxu0 0
    %1516 = vmatpush1.bf16.xpose.msra.mxu0 0
    %1517 = vmatprep.subr.bf16.mxu0 0
    %1518 = vmatpush1.bf16.xpose.msra.mxu0 0
    %1519 = vmatprep.subr.bf16.mxu0 0
    %1520 = vmatpush1.bf16.xpose.msra.mxu0 0
    %1521 = vmatprep.subr.bf16.mxu0 0
    %1522 = vmatpush1.bf16.xpose.msra.mxu0 0
    %1523 = vmatprep.subr.bf16.mxu0 0
    %1524 = vmatpush1.bf16.xpose.msra.mxu0 0
    %1525 = vmatprep.subr.bf16.mxu0 0
    %1526 = vmatpush1.bf16.xpose.msra.mxu0 0
    %1527 = vmatprep.subr.bf16.mxu0 0
    %1528 = vmatpush1.bf16.xpose.msra.mxu0 0
    %1529 = vmatprep.subr.bf16.mxu0 0
    %1530 = vmatpush1.bf16.xpose.msra.mxu0 0
    %1531 = vmatprep.subr.bf16.mxu0 0
    %1532 = vmatpush1.bf16.xpose.msra.mxu0 0
    %1533 = vmatprep.subr.bf16.mxu0 0
    %1534 = vmatpush1.bf16.xpose.msra.mxu0 0
    %1535 = vmatprep.subr.bf16.mxu0 0
    %1536 = vmatpush1.bf16.xpose.msra.mxu0 0
    %1537 = vmatprep.subr.bf16.mxu0 0
    %1538 = vmatpush1.bf16.xpose.msra.mxu0 0
    %1539 = vmatprep.subr.bf16.mxu0 0
    %1540 = vmatpush1.bf16.xpose.msra.mxu0 0
    %1541 = vmatprep.mubr.bf16.mxu0 0
    %1542 = vmatmul.mubr.bf16.gmra.mrb[0].mxu0 %v1503
    %v1543 = vpop.f32.mrb[0].mxu0
    %v1544 = vadd.f32 %v1500, %v1543
    %v1545 = vpop.f32.mrb[0].mxu0
    %v1546 = vpop.f32.mrb[0].mxu0
    %v1547 = vpop.f32.mrb[0].mxu0
    %1548 = vdwg.mxu0
    %v1550 = vsel %vm952, %v1409, 0
    %v1552 = vsel %vm952, %v1457, 0
    %v1554 = vsel %vm952, %v1463, 0
    %1556 = vmatprep.subr.bf16.mxu0 0
    %1557 = vmatpush1.bf16.xpose.msra.mxu0 %v1552
    %1558 = vmatprep.subr.bf16.mxu0 0
    %1559 = vmatpush1.bf16.xpose.msra.mxu0 %v1554
    %1560 = vmatprep.subr.bf16.mxu0 0
    %1561 = vmatpush1.bf16.xpose.msra.mxu0 0
    %1562 = vmatprep.subr.bf16.mxu0 0
    %1563 = vmatpush1.bf16.xpose.msra.mxu0 0
    %1564 = vmatprep.subr.bf16.mxu0 0
    %1565 = vmatpush1.bf16.xpose.msra.mxu0 0
    %1566 = vmatprep.subr.bf16.mxu0 0
    %1567 = vmatpush1.bf16.xpose.msra.mxu0 0
    %1568 = vmatprep.subr.bf16.mxu0 0
    %1569 = vmatpush1.bf16.xpose.msra.mxu0 0
    %1570 = vmatprep.subr.bf16.mxu0 0
    %1571 = vmatpush1.bf16.xpose.msra.mxu0 0
    %1572 = vmatprep.subr.bf16.mxu0 0
    %1573 = vmatpush1.bf16.xpose.msra.mxu0 0
    %1574 = vmatprep.subr.bf16.mxu0 0
    %1575 = vmatpush1.bf16.xpose.msra.mxu0 0
    %1576 = vmatprep.subr.bf16.mxu0 0
    %1577 = vmatpush1.bf16.xpose.msra.mxu0 0
    %1578 = vmatprep.subr.bf16.mxu0 0
    %1579 = vmatpush1.bf16.xpose.msra.mxu0 0
    %1580 = vmatprep.subr.bf16.mxu0 0
    %1581 = vmatpush1.bf16.xpose.msra.mxu0 0
    %1582 = vmatprep.subr.bf16.mxu0 0
    %1583 = vmatpush1.bf16.xpose.msra.mxu0 0
    %1584 = vmatprep.subr.bf16.mxu0 0
    %1585 = vmatpush1.bf16.xpose.msra.mxu0 0
    %1586 = vmatprep.subr.bf16.mxu0 0
    %1587 = vmatpush1.bf16.xpose.msra.mxu0 0
    %1588 = vmatprep.mubr.bf16.mxu0 0
    %1589 = vmatmul.mubr.bf16.gmra.mrb[0].mxu0 %v1550
    %v1590 = vpop.f32.mrb[0].mxu0
    %v1591 = vadd.f32 %v1500, %v1590
    %v1592 = vpop.f32.mrb[0].mxu0
    %v1593 = vpop.f32.mrb[0].mxu0
    %v1594 = vpop.f32.mrb[0].mxu0
    %1595 = vdwg.mxu0
    %v1596 = vsel %vm879, %v1544, -inf
    %1597 = vmax.xlane.f32.xlu0 %v1596
    %v1598 = vpop.xlane.xlu0 %1597
    %v1599 = vsel %vm879, %v1591, -inf
    %1600 = vmax.xlane.f32.xlu0 %v1599
    %v1601 = vpop.xlane.xlu0 %1600
    %v1602 = vsub.f32 %v1544, %v1598
    %v1603 = vsub.f32 %v1591, %v1601
    %v1604 = vmul.f32 %v1602, 1.442695
    %v1605 = vpow.pop %v1604
    %v1606 = vmul.f32 %v1603, 1.442695
    %v1607 = vpow.pop %v1606
    %v1608 = vsel %vm879, %v1605, 0.0
    %1609 = vadd.xlane.f32.xlu0 %v1608
    %v1610 = vpop.xlane.xlu0 %1609
    %v1611 = vsel %vm879, %v1607, 0.0
    %1612 = vadd.xlane.f32.xlu0 %v1611
    %v1613 = vpop.xlane.xlu0 %1612
    %v1614 = vrcp.pop %v1610
    %v1615 = vmul.f32 %v1605, %v1614
    %v1616 = vrcp.pop %v1613
    %v1617 = vmul.f32 %v1607, %v1616
    %vm1618 = vcmask 130112
    %v1619 = vsel %vm1618, %v1544, -inf
    %1620 = vmax.xlane.f32.xlu0 %v1619
    %v1621 = vpop.xlane.xlu0 %1620
    %v1622 = vsel %vm1618, %v1591, -inf
    %1623 = vmax.xlane.f32.xlu0 %v1622
    %v1624 = vpop.xlane.xlu0 %1623
    %v1625 = vsub.f32 %v1544, %v1621
    %v1626 = vsub.f32 %v1591, %v1624
    %v1627 = vmul.f32 %v1625, 1.442695
    %v1628 = vpow.pop %v1627
    %v1629 = vmul.f32 %v1626, 1.442695
    %v1630 = vpow.pop %v1629
    %1633 = vrot.lane.b32.xlu0 %v1628, 120
    %v1634 = vpop.permute.xlu0 %1633
    %1635 = vrot.lane.b32.xlu0 %v1630, 120
    %v1636 = vpop.permute.xlu0 %1635
    %v1639 = vsel %vm879, %v1634, 0.0
    %1640 = vadd.xlane.f32.xlu0 %v1639
    %v1641 = vpop.xlane.xlu0 %1640
    %v1642 = vsel %vm879, %v1636, 0.0
    %1643 = vadd.xlane.f32.xlu0 %v1642
    %v1644 = vpop.xlane.xlu0 %1643
    %v1645 = vrcp.pop %v1641
    %v1646 = vmul.f32 %v1628, %v1645
    %v1647 = vrcp.pop %v1644
    %v1648 = vmul.f32 %v1630, %v1647
    %vm1649 = vcmask 195712
    %v1650 = vsel %vm1649, %v1544, -inf
    %1651 = vmax.xlane.f32.xlu0 %v1650
    %v1652 = vpop.xlane.xlu0 %1651
    %v1653 = vsel %vm1649, %v1591, -inf
    %1654 = vmax.xlane.f32.xlu0 %v1653
    %v1655 = vpop.xlane.xlu0 %1654
    %v1656 = vsub.f32 %v1544, %v1652
    %v1657 = vsub.f32 %v1591, %v1655
    %v1658 = vmul.f32 %v1656, 1.442695
    %v1659 = vpow.pop %v1658
    %v1660 = vmul.f32 %v1657, 1.442695
    %v1661 = vpow.pop %v1660
    %1664 = vrot.lane.b32.xlu0 %v1659, 112
    %v1665 = vpop.permute.xlu0 %1664
    %1666 = vrot.lane.b32.xlu0 %v1661, 112
    %v1667 = vpop.permute.xlu0 %1666
    %v1670 = vsel %vm879, %v1665, 0.0
    %1671 = vadd.xlane.f32.xlu0 %v1670
    %v1672 = vpop.xlane.xlu0 %1671
    %v1673 = vsel %vm879, %v1667, 0.0
    %1674 = vadd.xlane.f32.xlu0 %v1673
    %v1675 = vpop.xlane.xlu0 %1674
    %v1676 = vrcp.pop %v1672
    %v1677 = vmul.f32 %v1659, %v1676
    %v1678 = vrcp.pop %v1675
    %v1679 = vmul.f32 %v1661, %v1678
    %vm1680 = vcmask 261312
    %v1681 = vsel %vm1680, %v1544, -inf
    %1682 = vmax.xlane.f32.xlu0 %v1681
    %v1683 = vpop.xlane.xlu0 %1682
    %v1684 = vsel %vm1680, %v1591, -inf
    %1685 = vmax.xlane.f32.xlu0 %v1684
    %v1686 = vpop.xlane.xlu0 %1685
    %v1687 = vsub.f32 %v1544, %v1683
    %v1688 = vsub.f32 %v1591, %v1686
    %v1689 = vmul.f32 %v1687, 1.442695
    %v1690 = vpow.pop %v1689
    %v1691 = vmul.f32 %v1688, 1.442695
    %v1692 = vpow.pop %v1691
    %1695 = vrot.lane.b32.xlu0 %v1690, 104
    %v1696 = vpop.permute.xlu0 %1695
    %1697 = vrot.lane.b32.xlu0 %v1692, 104
    %v1698 = vpop.permute.xlu0 %1697
    %v1701 = vsel %vm879, %v1696, 0.0
    %1702 = vadd.xlane.f32.xlu0 %v1701
    %v1703 = vpop.xlane.xlu0 %1702
    %v1704 = vsel %vm879, %v1698, 0.0
    %1705 = vadd.xlane.f32.xlu0 %v1704
    %v1706 = vpop.xlane.xlu0 %1705
    %v1707 = vrcp.pop %v1703
    %v1708 = vmul.f32 %v1690, %v1707
    %v1709 = vrcp.pop %v1706
    %v1710 = vmul.f32 %v1692, %v1709
    %v1711 = vsel %vm879, %v1615, %v1646
    %v1712 = vsel %vm879, %v1617, %v1648
    %v1713 = vsel %vm845, %v1711, %v1677
    %v1714 = vsel %vm845, %v1712, %v1679
    %vm1715 = vcmask 195584
    %v1716 = vsel %vm1715, %v1713, %v1708
    %v1717 = vsel %vm1715, %v1714, %v1710
    %v1718 = vpack.c.bf16 %v1716, %v1716
    %v1719 = vpack.c.bf16 %v1717, %v1717
    %v1721 = vsel %vm952, %v1718, 0
    %1723 = vmatprep.subr.bf16.mxu0 0
    %1724 = vmatpush1.bf16.msra.mxu0 %v1482
    %1725 = vmatprep.subr.bf16.mxu0 0
    %1726 = vmatpush1.bf16.msra.mxu0 %v1490
    %1727 = vmatprep.subr.bf16.mxu0 0
    %1728 = vmatpush1.bf16.msra.mxu0 0
    %1729 = vmatprep.subr.bf16.mxu0 0
    %1730 = vmatpush1.bf16.msra.mxu0 0
    %1731 = vmatprep.subr.bf16.mxu0 0
    %1732 = vmatpush1.bf16.msra.mxu0 0
    %1733 = vmatprep.subr.bf16.mxu0 0
    %1734 = vmatpush1.bf16.msra.mxu0 0
    %1735 = vmatprep.subr.bf16.mxu0 0
    %1736 = vmatpush1.bf16.msra.mxu0 0
    %1737 = vmatprep.subr.bf16.mxu0 0
    %1738 = vmatpush1.bf16.msra.mxu0 0
    %1739 = vmatprep.subr.bf16.mxu0 0
    %1740 = vmatpush1.bf16.msra.mxu0 0
    %1741 = vmatprep.subr.bf16.mxu0 0
    %1742 = vmatpush1.bf16.msra.mxu0 0
    %1743 = vmatprep.subr.bf16.mxu0 0
    %1744 = vmatpush1.bf16.msra.mxu0 0
    %1745 = vmatprep.subr.bf16.mxu0 0
    %1746 = vmatpush1.bf16.msra.mxu0 0
    %1747 = vmatprep.subr.bf16.mxu0 0
    %1748 = vmatpush1.bf16.msra.mxu0 0
    %1749 = vmatprep.subr.bf16.mxu0 0
    %1750 = vmatpush1.bf16.msra.mxu0 0
    %1751 = vmatprep.subr.bf16.mxu0 0
    %1752 = vmatpush1.bf16.msra.mxu0 0
    %1753 = vmatprep.subr.bf16.mxu0 0
    %1754 = vmatpush1.bf16.msra.mxu0 0
    %1755 = vmatprep.mubr.bf16.mxu0 0
    %1756 = vmatmul.mubr.bf16.gmra.mrb[0].mxu0 %v1721
    %v1757 = vpop.f32.mrb[0].mxu0
    %v1758 = vadd.f32 0.0, %v1757
    %v1759 = vpop.f32.mrb[0].mxu0
    %v1760 = vpop.f32.mrb[0].mxu0
    %v1761 = vpop.f32.mrb[0].mxu0
    %1762 = vdwg.mxu0
    %v1764 = vsel %vm952, %v1719, 0
    %1766 = vmatprep.subr.bf16.mxu0 0
    %1767 = vmatpush1.bf16.msra.mxu0 %v1486
    %1768 = vmatprep.subr.bf16.mxu0 0
    %1769 = vmatpush1.bf16.msra.mxu0 %v1494
    %1770 = vmatprep.subr.bf16.mxu0 0
    %1771 = vmatpush1.bf16.msra.mxu0 0
    %1772 = vmatprep.subr.bf16.mxu0 0
    %1773 = vmatpush1.bf16.msra.mxu0 0
    %1774 = vmatprep.subr.bf16.mxu0 0
    %1775 = vmatpush1.bf16.msra.mxu0 0
    %1776 = vmatprep.subr.bf16.mxu0 0
    %1777 = vmatpush1.bf16.msra.mxu0 0
    %1778 = vmatprep.subr.bf16.mxu0 0
    %1779 = vmatpush1.bf16.msra.mxu0 0
    %1780 = vmatprep.subr.bf16.mxu0 0
    %1781 = vmatpush1.bf16.msra.mxu0 0
    %1782 = vmatprep.subr.bf16.mxu0 0
    %1783 = vmatpush1.bf16.msra.mxu0 0
    %1784 = vmatprep.subr.bf16.mxu0 0
    %1785 = vmatpush1.bf16.msra.mxu0 0
    %1786 = vmatprep.subr.bf16.mxu0 0
    %1787 = vmatpush1.bf16.msra.mxu0 0
    %1788 = vmatprep.subr.bf16.mxu0 0
    %1789 = vmatpush1.bf16.msra.mxu0 0
    %1790 = vmatprep.subr.bf16.mxu0 0
    %1791 = vmatpush1.bf16.msra.mxu0 0
    %1792 = vmatprep.subr.bf16.mxu0 0
    %1793 = vmatpush1.bf16.msra.mxu0 0
    %1794 = vmatprep.subr.bf16.mxu0 0
    %1795 = vmatpush1.bf16.msra.mxu0 0
    %1796 = vmatprep.subr.bf16.mxu0 0
    %1797 = vmatpush1.bf16.msra.mxu0 0
    %1798 = vmatprep.mubr.bf16.mxu0 0
    %1799 = vmatmul.mubr.bf16.gmra.mrb[0].mxu0 %v1764
    %v1800 = vpop.f32.mrb[0].mxu0
    %v1801 = vadd.f32 0.0, %v1800
    %v1802 = vpop.f32.mrb[0].mxu0
    %v1803 = vpop.f32.mrb[0].mxu0
    %v1804 = vpop.f32.mrb[0].mxu0
    %1805 = vdwg.mxu0
    %v1806 = vpack.c.bf16 %v1801, %v1758
    %v1807 = vld [vmem:[#allocation35] sm:$0xf]
    %v1808 = vld [vmem:[#allocation35 + $0x4] sm:$0xf]
    %v1809 = vld [vmem:[#allocation35 + $0x8] sm:$0xf]
    %v1810 = vld [vmem:[#allocation35 + $0xc] sm:$0xf]
    %v1811 = vlaneseq
    %v1812 = vshrl.u32 %v1811, 7
    %v1813 = vsub.s32 0, %v1812
    %v1814 = vrot.slane %v1336, %v1813
    %v1819 = vunpack.c.l.b16 %v1807
    %v1820 = vunpack.c.l.b16 %v1808
    %v1821 = vunpack.c.l.b16 %v1809
    %v1822 = vunpack.c.l.b16 %v1810
    %v1823 = vpack.c.b16 %v1820, %v1819
    %v1824 = vpack.c.b16 %v1822, %v1821
    %v1828 = vsel %vm952, %v1806, 0
    %1830 = vmatprep.subr.bf16.mxu0 0
    %1831 = vmatpush1.bf16.msra.mxu0 %v1823
    %1832 = vmatprep.subr.bf16.mxu0 0
    %1833 = vmatpush1.bf16.msra.mxu0 %v1824
    %1834 = vmatprep.subr.bf16.mxu0 0
    %1835 = vmatpush1.bf16.msra.mxu0 0
    %1836 = vmatprep.subr.bf16.mxu0 0
    %1837 = vmatpush1.bf16.msra.mxu0 0
    %1838 = vmatprep.subr.bf16.mxu0 0
    %1839 = vmatpush1.bf16.msra.mxu0 0
    %1840 = vmatprep.subr.bf16.mxu0 0
    %1841 = vmatpush1.bf16.msra.mxu0 0
    %1842 = vmatprep.subr.bf16.mxu0 0
    %1843 = vmatpush1.bf16.msra.mxu0 0
    %1844 = vmatprep.subr.bf16.mxu0 0
    %1845 = vmatpush1.bf16.msra.mxu0 0
    %1846 = vmatprep.subr.bf16.mxu0 0
    %1847 = vmatpush1.bf16.msra.mxu0 0
    %1848 = vmatprep.subr.bf16.mxu0 0
    %1849 = vmatpush1.bf16.msra.mxu0 0
    %1850 = vmatprep.subr.bf16.mxu0 0
    %1851 = vmatpush1.bf16.msra.mxu0 0
    %1852 = vmatprep.subr.bf16.mxu0 0
    %1853 = vmatpush1.bf16.msra.mxu0 0
    %1854 = vmatprep.subr.bf16.mxu0 0
    %1855 = vmatpush1.bf16.msra.mxu0 0
    %1856 = vmatprep.subr.bf16.mxu0 0
    %1857 = vmatpush1.bf16.msra.mxu0 0
    %1858 = vmatprep.subr.bf16.mxu0 0
    %1859 = vmatpush1.bf16.msra.mxu0 0
    %1860 = vmatprep.subr.bf16.mxu0 0
    %1861 = vmatpush1.bf16.msra.mxu0 0
    %1862 = vmatprep.mubr.bf16.mxu0 0
    %1863 = vmatmul.mubr.bf16.gmra.mrb[0].mxu0 %v1828
    %v1864 = vpop.f32.mrb[0].mxu0
    %v1865 = vadd.f32 %v1814, %v1864
    %v1866 = vpop.f32.mrb[0].mxu0
    %v1867 = vpop.f32.mrb[0].mxu0
    %v1868 = vadd.f32 %v1814, %v1867
    %v1869 = vpop.f32.mrb[0].mxu0
    %1870 = vdwg.mxu0
    %v1871 = vadd.f32 %v1067, %v1865
    %v1872 = vadd.f32 %v1068, %v1868
    %v1873 = vsel %vm952, %v1871, 0.0
    %1874 = vadd.xlane.f32.xlu0 %v1873
    %v1875 = vpop.xlane.xlu0 %1874
    %v1876 = vsel %vm952, %v1872, 0.0
    %1877 = vadd.xlane.f32.xlu0 %v1876
    %v1878 = vpop.xlane.xlu0 %1877
    %v1879 = vrcp.pop 32.0
    %v1880 = vmul.f32 %v1875, %v1879
    %v1881 = vmul.f32 %v1878, %v1879
    %v1882 = vsub.f32 %v1871, %v1880
    %v1883 = vsub.f32 %v1872, %v1881
    %v1884 = vmul.f32 %v1882, %v1882
    %v1885 = vmul.f32 %v1883, %v1883
    %v1886 = vsel %vm952, %v1884, 0.0
    %1887 = vadd.xlane.f32.xlu0 %v1886
    %v1888 = vpop.xlane.xlu0 %1887
    %v1889 = vsel %vm952, %v1885, 0.0
    %1890 = vadd.xlane.f32.xlu0 %v1889
    %v1891 = vpop.xlane.xlu0 %1890
    %v1892 = vmul.f32 %v1888, %v1879
    %v1893 = vmul.f32 %v1891, %v1879
    %v1894 = vadd.f32 %v1892, 1e-05
    %v1895 = vadd.f32 %v1893, 1e-05
    %v1896 = vrsqrt.pop %v1894
    %v1897 = vrsqrt.pop %v1895
    %v1898 = vmul.f32 %v1882, %v1896
    %v1899 = vmul.f32 %v1883, %v1897
    %v1900 = vlaneseq
    %v1901 = vshrl.u32 %v1900, 7
    %v1902 = vsub.s32 0, %v1901
    %v1903 = vrot.slane %v1339, %v1902
    %v1904 = vmul.f32 %v1898, %v1903
    %v1905 = vmul.f32 %v1899, %v1903
    %v1906 = vlaneseq
    %v1907 = vshrl.u32 %v1906, 7
    %v1908 = vsub.s32 0, %v1907
    %v1909 = vrot.slane %v1340, %v1908
    %v1910 = vadd.f32 %v1904, %v1909
    %v1911 = vadd.f32 %v1905, %v1909
    %v1912 = vpack.c.bf16 %v1911, %v1910
    %v1913 = vld [vmem:[#allocation36] sm:$0xf]
    %v1914 = vld [vmem:[#allocation36 + $0x4] sm:$0xf]
    %v1915 = vld [vmem:[#allocation36 + $0x8] sm:$0xf]
    %v1916 = vld [vmem:[#allocation36 + $0xc] sm:$0xf]
    %v1917 = vlaneseq
    %v1918 = vshrl.u32 %v1917, 7
    %v1919 = vsub.s32 0, %v1918
    %v1920 = vrot.slane %v1337, %v1919
    %v1925 = vunpack.c.l.b16 %v1913
    %v1926 = vunpack.c.l.b16 %v1914
    %v1927 = vunpack.c.l.b16 %v1915
    %v1928 = vunpack.c.l.b16 %v1916
    %v1929 = vpack.c.b16 %v1926, %v1925
    %v1930 = vpack.c.b16 %v1928, %v1927
    %v1934 = vsel %vm952, %v1912, 0
    %1936 = vmatprep.subr.bf16.mxu0 0
    %1937 = vmatpush1.bf16.msra.mxu0 %v1929
    %1938 = vmatprep.subr.bf16.mxu0 0
    %1939 = vmatpush1.bf16.msra.mxu0 %v1930
    %1940 = vmatprep.subr.bf16.mxu0 0
    %1941 = vmatpush1.bf16.msra.mxu0 0
    %1942 = vmatprep.subr.bf16.mxu0 0
    %1943 = vmatpush1.bf16.msra.mxu0 0
    %1944 = vmatprep.subr.bf16.mxu0 0
    %1945 = vmatpush1.bf16.msra.mxu0 0
    %1946 = vmatprep.subr.bf16.mxu0 0
    %1947 = vmatpush1.bf16.msra.mxu0 0
    %1948 = vmatprep.subr.bf16.mxu0 0
    %1949 = vmatpush1.bf16.msra.mxu0 0
    %1950 = vmatprep.subr.bf16.mxu0 0
    %1951 = vmatpush1.bf16.msra.mxu0 0
    %1952 = vmatprep.subr.bf16.mxu0 0
    %1953 = vmatpush1.bf16.msra.mxu0 0
    %1954 = vmatprep.subr.bf16.mxu0 0
    %1955 = vmatpush1.bf16.msra.mxu0 0
    %1956 = vmatprep.subr.bf16.mxu0 0
    %1957 = vmatpush1.bf16.msra.mxu0 0
    %1958 = vmatprep.subr.bf16.mxu0 0
    %1959 = vmatpush1.bf16.msra.mxu0 0
    %1960 = vmatprep.subr.bf16.mxu0 0
    %1961 = vmatpush1.bf16.msra.mxu0 0
    %1962 = vmatprep.subr.bf16.mxu0 0
    %1963 = vmatpush1.bf16.msra.mxu0 0
    %1964 = vmatprep.subr.bf16.mxu0 0
    %1965 = vmatpush1.bf16.msra.mxu0 0
    %1966 = vmatprep.subr.bf16.mxu0 0
    %1967 = vmatpush1.bf16.msra.mxu0 0
    %1968 = vmatprep.mubr.bf16.mxu0 0
    %1969 = vmatmul.mubr.bf16.gmra.mrb[0].mxu0 %v1934
    %v1970 = vpop.f32.mrb[0].mxu0
    %v1971 = vadd.f32 %v1920, %v1970
    %v1972 = vpop.f32.mrb[0].mxu0
    %v1973 = vpop.f32.mrb[0].mxu0
    %v1974 = vadd.f32 %v1920, %v1973
    %v1975 = vpop.f32.mrb[0].mxu0
    %1976 = vdwg.mxu0
    %v1977 = vmax.f32 %v1971, 0.0
    %v1978 = vmax.f32 %v1974, 0.0
    %v1979 = vpack.c.bf16 %v1978, %v1977
    %v1980 = vld [vmem:[#allocation38] sm:$0xf]
    %v1981 = vld [vmem:[#allocation38 + $0x4] sm:$0xf]
    %v1982 = vld [vmem:[#allocation38 + $0x8] sm:$0xf]
    %v1983 = vld [vmem:[#allocation38 + $0xc] sm:$0xf]
    %v1984 = vlaneseq
    %v1985 = vshrl.u32 %v1984, 7
    %v1986 = vsub.s32 0, %v1985
    %v1987 = vrot.slane %v1338, %v1986
    %v1992 = vunpack.c.l.b16 %v1980
    %v1993 = vunpack.c.l.b16 %v1981
    %v1994 = vunpack.c.l.b16 %v1982
    %v1995 = vunpack.c.l.b16 %v1983
    %v1996 = vpack.c.b16 %v1993, %v1992
    %v1997 = vpack.c.b16 %v1995, %v1994
    %v2001 = vsel %vm952, %v1979, 0
    %2003 = vmatprep.subr.bf16.mxu0 0
    %2004 = vmatpush1.bf16.msra.mxu0 %v1996
    %2005 = vmatprep.subr.bf16.mxu0 0
    %2006 = vmatpush1.bf16.msra.mxu0 %v1997
    %2007 = vmatprep.subr.bf16.mxu0 0
    %2008 = vmatpush1.bf16.msra.mxu0 0
    %2009 = vmatprep.subr.bf16.mxu0 0
    %2010 = vmatpush1.bf16.msra.mxu0 0
    %2011 = vmatprep.subr.bf16.mxu0 0
    %2012 = vmatpush1.bf16.msra.mxu0 0
    %2013 = vmatprep.subr.bf16.mxu0 0
    %2014 = vmatpush1.bf16.msra.mxu0 0
    %2015 = vmatprep.subr.bf16.mxu0 0
    %2016 = vmatpush1.bf16.msra.mxu0 0
    %2017 = vmatprep.subr.bf16.mxu0 0
    %2018 = vmatpush1.bf16.msra.mxu0 0
    %2019 = vmatprep.subr.bf16.mxu0 0
    %2020 = vmatpush1.bf16.msra.mxu0 0
    %2021 = vmatprep.subr.bf16.mxu0 0
    %2022 = vmatpush1.bf16.msra.mxu0 0
    %2023 = vmatprep.subr.bf16.mxu0 0
    %2024 = vmatpush1.bf16.msra.mxu0 0
    %2025 = vmatprep.subr.bf16.mxu0 0
    %2026 = vmatpush1.bf16.msra.mxu0 0
    %2027 = vmatprep.subr.bf16.mxu0 0
    %2028 = vmatpush1.bf16.msra.mxu0 0
    %2029 = vmatprep.subr.bf16.mxu0 0
    %2030 = vmatpush1.bf16.msra.mxu0 0
    %2031 = vmatprep.subr.bf16.mxu0 0
    %2032 = vmatpush1.bf16.msra.mxu0 0
    %2033 = vmatprep.subr.bf16.mxu0 0
    %2034 = vmatpush1.bf16.msra.mxu0 0
    %2035 = vmatprep.mubr.bf16.mxu0 0
    %2036 = vmatmul.mubr.bf16.gmra.mrb[0].mxu0 %v2001
    %v2037 = vpop.f32.mrb[0].mxu0
    %v2038 = vadd.f32 %v1987, %v2037
    %v2039 = vpop.f32.mrb[0].mxu0
    %v2040 = vpop.f32.mrb[0].mxu0
    %v2041 = vadd.f32 %v1987, %v2040
    %v2042 = vpop.f32.mrb[0].mxu0
    %2043 = vdwg.mxu0
    %v2044 = vadd.f32 %v1910, %v2038
    %v2045 = vadd.f32 %v1911, %v2041
    %v2046 = vsel %vm952, %v2044, 0.0
    %2047 = vadd.xlane.f32.xlu0 %v2046
    %v2048 = vpop.xlane.xlu0 %2047
    %v2049 = vsel %vm952, %v2045, 0.0
    %2050 = vadd.xlane.f32.xlu0 %v2049
    %v2051 = vpop.xlane.xlu0 %2050
    %v2052 = vmul.f32 %v2048, %v1879
    %v2053 = vmul.f32 %v2051, %v1879
    %v2054 = vsub.f32 %v2044, %v2052
    %v2055 = vsub.f32 %v2045, %v2053
    %v2056 = vmul.f32 %v2054, %v2054
    %v2057 = vmul.f32 %v2055, %v2055
    %v2058 = vsel %vm952, %v2056, 0.0
    %2059 = vadd.xlane.f32.xlu0 %v2058
    %v2060 = vpop.xlane.xlu0 %2059
    %v2061 = vsel %vm952, %v2057, 0.0
    %2062 = vadd.xlane.f32.xlu0 %v2061
    %v2063 = vpop.xlane.xlu0 %2062
    %v2064 = vmul.f32 %v2060, %v1879
    %v2065 = vmul.f32 %v2063, %v1879
    %v2066 = vadd.f32 %v2064, 1e-05
    %v2067 = vadd.f32 %v2065, 1e-05
    %v2068 = vrsqrt.pop %v2066
    %v2069 = vrsqrt.pop %v2067
    %v2070 = vmul.f32 %v2054, %v2068
    %v2071 = vmul.f32 %v2055, %v2069
    %v2072 = vlaneseq
    %v2073 = vshrl.u32 %v2072, 7
    %v2074 = vsub.s32 0, %v2073
    %v2075 = vrot.slane %v1341, %v2074
    %v2076 = vmul.f32 %v2070, %v2075
    %v2077 = vmul.f32 %v2071, %v2075
    %v2078 = vlaneseq
    %v2079 = vshrl.u32 %v2078, 7
    %v2080 = vsub.s32 0, %v2079
    %v2081 = vrot.slane %v1342, %v2080
    %v2082 = vadd.f32 %v2076, %v2081
    %v2083 = vadd.f32 %v2077, %v2081
    %v2084 = vld [vmem:[#allocation39 + $0x8] sm:$0x1]
    %v2085 = vld [vmem:[#allocation39 + $0x9] sm:$0x1]
    %v2086 = vld [vmem:[#allocation39 + $0xa] sm:$0x1]
    %v2087 = vld [vmem:[#allocation39 + $0xb] sm:$0x1]
    %v2088 = vld [vmem:[#allocation39 + $0xc] sm:$0x1]
    %v2089 = vld [vmem:[#allocation39 + $0xd] sm:$0x1]
    %v2090 = vld [vmem:[#allocation39 + $0xe] sm:$0x1]
    %v2091 = vld [vmem:[#allocation39 + $0xf] sm:$0x1]
    %v2092 = vpack.c.bf16 %v2083, %v2082
    %s2093 = scalar_lea.vmem [#allocation27], 16
    %v2094 = vld [vmem:[%s2093] sm:$0xf]
    %v2095 = vld [vmem:[%s2093 + $0x4] sm:$0xf]
    %v2096 = vld [vmem:[%s2093 + $0x8] sm:$0xf]
    %v2097 = vld [vmem:[%s2093 + $0xc] sm:$0xf]
    %v2098 = vlaneseq
    %v2099 = vshrl.u32 %v2098, 7
    %v2100 = vsub.s32 0, %v2099
    %v2101 = vrot.slane %v2084, %v2100
    %v2106 = vunpack.c.l.b16 %v2094
    %v2107 = vunpack.c.l.b16 %v2095
    %v2108 = vunpack.c.l.b16 %v2096
    %v2109 = vunpack.c.l.b16 %v2097
    %v2110 = vpack.c.b16 %v2107, %v2106
    %v2111 = vpack.c.b16 %v2109, %v2108
    %v2115 = vsel %vm952, %v2092, 0
    %2117 = vmatprep.subr.bf16.mxu0 0
    %2118 = vmatpush1.bf16.msra.mxu0 %v2110
    %2119 = vmatprep.subr.bf16.mxu0 0
    %2120 = vmatpush1.bf16.msra.mxu0 %v2111
    %2121 = vmatprep.subr.bf16.mxu0 0
    %2122 = vmatpush1.bf16.msra.mxu0 0
    %2123 = vmatprep.subr.bf16.mxu0 0
    %2124 = vmatpush1.bf16.msra.mxu0 0
    %2125 = vmatprep.subr.bf16.mxu0 0
    %2126 = vmatpush1.bf16.msra.mxu0 0
    %2127 = vmatprep.subr.bf16.mxu0 0
    %2128 = vmatpush1.bf16.msra.mxu0 0
    %2129 = vmatprep.subr.bf16.mxu0 0
    %2130 = vmatpush1.bf16.msra.mxu0 0
    %2131 = vmatprep.subr.bf16.mxu0 0
    %2132 = vmatpush1.bf16.msra.mxu0 0
    %2133 = vmatprep.subr.bf16.mxu0 0
    %2134 = vmatpush1.bf16.msra.mxu0 0
    %2135 = vmatprep.subr.bf16.mxu0 0
    %2136 = vmatpush1.bf16.msra.mxu0 0
    %2137 = vmatprep.subr.bf16.mxu0 0
    %2138 = vmatpush1.bf16.msra.mxu0 0
    %2139 = vmatprep.subr.bf16.mxu0 0
    %2140 = vmatpush1.bf16.msra.mxu0 0
    %2141 = vmatprep.subr.bf16.mxu0 0
    %2142 = vmatpush1.bf16.msra.mxu0 0
    %2143 = vmatprep.subr.bf16.mxu0 0
    %2144 = vmatpush1.bf16.msra.mxu0 0
    %2145 = vmatprep.subr.bf16.mxu0 0
    %2146 = vmatpush1.bf16.msra.mxu0 0
    %2147 = vmatprep.subr.bf16.mxu0 0
    %2148 = vmatpush1.bf16.msra.mxu0 0
    %2149 = vmatprep.mubr.bf16.mxu0 0
    %2150 = vmatmul.mubr.bf16.gmra.mrb[0].mxu0 %v2115
    %v2151 = vpop.f32.mrb[0].mxu0
    %v2152 = vadd.f32 %v2101, %v2151
    %v2153 = vpop.f32.mrb[0].mxu0
    %v2154 = vpop.f32.mrb[0].mxu0
    %v2155 = vadd.f32 %v2101, %v2154
    %v2156 = vpop.f32.mrb[0].mxu0
    %2157 = vdwg.mxu0
    %v2158 = vpack.c.bf16 %v2152, %v2152
    %v2159 = vpack.c.bf16 %v2155, %v2155
    %2161 = vrot.lane.b32.xlu0 %v1420, 32
    %v2162 = vpop.permute.xlu0 %2161
    %v2164 = vmul.bf16 %v1410, %v2162
    %v2165 = vmul.bf16 %v1411, %v2162
    %2167 = vrot.lane.b32.xlu0 %v1429, 32
    %v2168 = vpop.permute.xlu0 %2167
    %v2170 = vmul.bf16 %v1410, %v2168
    %v2171 = vmul.bf16 %v1411, %v2168
    %2173 = vrot.lane.b32.xlu0 %v1435, 32
    %v2174 = vpop.permute.xlu0 %2173
    %v2176 = vmul.bf16 %v1410, %v2174
    %v2177 = vmul.bf16 %v1411, %v2174
    %2179 = vrot.lane.b32.xlu0 %v1441, 32
    %v2180 = vpop.permute.xlu0 %2179
    %v2182 = vmul.bf16 %v1410, %v2180
    %v2183 = vmul.bf16 %v1411, %v2180
    %v2186 = vrot.slane %v2170, 4
    %v2187 = vrot.slane %v2171, 4
    %v2190 = vrot.slane %v2182, 4
    %v2191 = vrot.slane %v2183, 4
    %v2194 = vsel %vm883, %v2164, %v2186
    %v2197 = vsel %vm883, %v2165, %v2187
    %v2200 = vsel %vm883, %v2176, %v2190
    %v2203 = vsel %vm883, %v2177, %v2191
    %v2204 = vmul.bf16 %v1412, %v2162
    %v2205 = vmul.bf16 %v1413, %v2162
    %v2206 = vmul.bf16 %v1412, %v2168
    %v2207 = vmul.bf16 %v1413, %v2168
    %v2208 = vmul.bf16 %v1412, %v2174
    %v2209 = vmul.bf16 %v1413, %v2174
    %v2210 = vmul.bf16 %v1412, %v2180
    %v2211 = vmul.bf16 %v1413, %v2180
    %v2214 = vrot.slane %v2206, 4
    %v2215 = vrot.slane %v2207, 4
    %v2218 = vrot.slane %v2210, 4
    %v2219 = vrot.slane %v2211, 4
    %v2222 = vsel %vm883, %v2204, %v2214
    %v2225 = vsel %vm883, %v2205, %v2215
    %v2228 = vsel %vm883, %v2208, %v2218
    %v2231 = vsel %vm883, %v2209, %v2219
    %2234 = vrot.lane.b32.xlu0 %v2194, 96
    %v2235 = vpop.permute.xlu0 %2234
    %2236 = vrot.lane.b32.xlu0 %v2200, 96
    %v2237 = vpop.permute.xlu0 %2236
    %v2239 = vsel %vm952, %v2158, 0
    %v2242 = vsel %vm952, %v2235, 0
    %v2245 = vsel %vm952, %v2237, 0
    %2247 = vmatprep.subr.bf16.mxu0 0
    %2248 = vmatpush1.bf16.xpose.msra.mxu0 %v2242
    %2249 = vmatprep.subr.bf16.mxu0 0
    %2250 = vmatpush1.bf16.xpose.msra.mxu0 %v2245
    %2251 = vmatprep.subr.bf16.mxu0 0
    %2252 = vmatpush1.bf16.xpose.msra.mxu0 0
    %2253 = vmatprep.subr.bf16.mxu0 0
    %2254 = vmatpush1.bf16.xpose.msra.mxu0 0
    %2255 = vmatprep.subr.bf16.mxu0 0
    %2256 = vmatpush1.bf16.xpose.msra.mxu0 0
    %2257 = vmatprep.subr.bf16.mxu0 0
    %2258 = vmatpush1.bf16.xpose.msra.mxu0 0
    %2259 = vmatprep.subr.bf16.mxu0 0
    %2260 = vmatpush1.bf16.xpose.msra.mxu0 0
    %2261 = vmatprep.subr.bf16.mxu0 0
    %2262 = vmatpush1.bf16.xpose.msra.mxu0 0
    %2263 = vmatprep.subr.bf16.mxu0 0
    %2264 = vmatpush1.bf16.xpose.msra.mxu0 0
    %2265 = vmatprep.subr.bf16.mxu0 0
    %2266 = vmatpush1.bf16.xpose.msra.mxu0 0
    %2267 = vmatprep.subr.bf16.mxu0 0
    %2268 = vmatpush1.bf16.xpose.msra.mxu0 0
    %2269 = vmatprep.subr.bf16.mxu0 0
    %2270 = vmatpush1.bf16.xpose.msra.mxu0 0
    %2271 = vmatprep.subr.bf16.mxu0 0
    %2272 = vmatpush1.bf16.xpose.msra.mxu0 0
    %2273 = vmatprep.subr.bf16.mxu0 0
    %2274 = vmatpush1.bf16.xpose.msra.mxu0 0
    %2275 = vmatprep.subr.bf16.mxu0 0
    %2276 = vmatpush1.bf16.xpose.msra.mxu0 0
    %2277 = vmatprep.subr.bf16.mxu0 0
    %2278 = vmatpush1.bf16.xpose.msra.mxu0 0
    %2279 = vmatprep.mubr.bf16.mxu0 0
    %2280 = vmatmul.mubr.bf16.gmra.mrb[0].mxu0 %v2239
    %v2281 = vpop.f32.mrb[0].mxu0
    %v2282 = vadd.f32 %v1500, %v2281
    %v2283 = vpop.f32.mrb[0].mxu0
    %v2284 = vpop.f32.mrb[0].mxu0
    %v2285 = vpop.f32.mrb[0].mxu0
    %2286 = vdwg.mxu0
    %2289 = vrot.lane.b32.xlu0 %v2197, 96
    %v2290 = vpop.permute.xlu0 %2289
    %2291 = vrot.lane.b32.xlu0 %v2203, 96
    %v2292 = vpop.permute.xlu0 %2291
    %v2294 = vsel %vm952, %v2159, 0
    %v2297 = vsel %vm952, %v2290, 0
    %v2300 = vsel %vm952, %v2292, 0
    %2302 = vmatprep.subr.bf16.mxu0 0
    %2303 = vmatpush1.bf16.xpose.msra.mxu0 %v2297
    %2304 = vmatprep.subr.bf16.mxu0 0
    %2305 = vmatpush1.bf16.xpose.msra.mxu0 %v2300
    %2306 = vmatprep.subr.bf16.mxu0 0
    %2307 = vmatpush1.bf16.xpose.msra.mxu0 0
    %2308 = vmatprep.subr.bf16.mxu0 0
    %2309 = vmatpush1.bf16.xpose.msra.mxu0 0
    %2310 = vmatprep.subr.bf16.mxu0 0
    %2311 = vmatpush1.bf16.xpose.msra.mxu0 0
    %2312 = vmatprep.subr.bf16.mxu0 0
    %2313 = vmatpush1.bf16.xpose.msra.mxu0 0
    %2314 = vmatprep.subr.bf16.mxu0 0
    %2315 = vmatpush1.bf16.xpose.msra.mxu0 0
    %2316 = vmatprep.subr.bf16.mxu0 0
    %2317 = vmatpush1.bf16.xpose.msra.mxu0 0
    %2318 = vmatprep.subr.bf16.mxu0 0
    %2319 = vmatpush1.bf16.xpose.msra.mxu0 0
    %2320 = vmatprep.subr.bf16.mxu0 0
    %2321 = vmatpush1.bf16.xpose.msra.mxu0 0
    %2322 = vmatprep.subr.bf16.mxu0 0
    %2323 = vmatpush1.bf16.xpose.msra.mxu0 0
    %2324 = vmatprep.subr.bf16.mxu0 0
    %2325 = vmatpush1.bf16.xpose.msra.mxu0 0
    %2326 = vmatprep.subr.bf16.mxu0 0
    %2327 = vmatpush1.bf16.xpose.msra.mxu0 0
    %2328 = vmatprep.subr.bf16.mxu0 0
    %2329 = vmatpush1.bf16.xpose.msra.mxu0 0
    %2330 = vmatprep.subr.bf16.mxu0 0
    %2331 = vmatpush1.bf16.xpose.msra.mxu0 0
    %2332 = vmatprep.subr.bf16.mxu0 0
    %2333 = vmatpush1.bf16.xpose.msra.mxu0 0
    %2334 = vmatprep.mubr.bf16.mxu0 0
    %2335 = vmatmul.mubr.bf16.gmra.mrb[0].mxu0 %v2294
    %v2336 = vpop.f32.mrb[0].mxu0
    %v2337 = vadd.f32 %v1500, %v2336
    %v2338 = vpop.f32.mrb[0].mxu0
    %v2339 = vpop.f32.mrb[0].mxu0
    %v2340 = vpop.f32.mrb[0].mxu0
    %2341 = vdwg.mxu0
    %v2342 = vsel %vm879, %v2282, -inf
    %2343 = vmax.xlane.f32.xlu0 %v2342
    %v2344 = vpop.xlane.xlu0 %2343
    %v2345 = vsel %vm879, %v2337, -inf
    %2346 = vmax.xlane.f32.xlu0 %v2345
    %v2347 = vpop.xlane.xlu0 %2346
    %v2348 = vsub.f32 %v2282, %v2344
    %v2349 = vsub.f32 %v2337, %v2347
    %v2350 = vmul.f32 %v2348, 1.442695
    %v2351 = vpow.pop %v2350
    %v2352 = vmul.f32 %v2349, 1.442695
    %v2353 = vpow.pop %v2352
    %v2354 = vsel %vm879, %v2351, 0.0
    %2355 = vadd.xlane.f32.xlu0 %v2354
    %v2356 = vpop.xlane.xlu0 %2355
    %v2357 = vsel %vm879, %v2353, 0.0
    %2358 = vadd.xlane.f32.xlu0 %v2357
    %v2359 = vpop.xlane.xlu0 %2358
    %v2360 = vrcp.pop %v2356
    %v2361 = vmul.f32 %v2351, %v2360
    %v2362 = vrcp.pop %v2359
    %v2363 = vmul.f32 %v2353, %v2362
    %v2364 = vsel %vm1618, %v2282, -inf
    %2365 = vmax.xlane.f32.xlu0 %v2364
    %v2366 = vpop.xlane.xlu0 %2365
    %v2367 = vsel %vm1618, %v2337, -inf
    %2368 = vmax.xlane.f32.xlu0 %v2367
    %v2369 = vpop.xlane.xlu0 %2368
    %v2370 = vsub.f32 %v2282, %v2366
    %v2371 = vsub.f32 %v2337, %v2369
    %v2372 = vmul.f32 %v2370, 1.442695
    %v2373 = vpow.pop %v2372
    %v2374 = vmul.f32 %v2371, 1.442695
    %v2375 = vpow.pop %v2374
    %2378 = vrot.lane.b32.xlu0 %v2373, 120
    %v2379 = vpop.permute.xlu0 %2378
    %2380 = vrot.lane.b32.xlu0 %v2375, 120
    %v2381 = vpop.permute.xlu0 %2380
    %v2384 = vsel %vm879, %v2379, 0.0
    %2385 = vadd.xlane.f32.xlu0 %v2384
    %v2386 = vpop.xlane.xlu0 %2385
    %v2387 = vsel %vm879, %v2381, 0.0
    %2388 = vadd.xlane.f32.xlu0 %v2387
    %v2389 = vpop.xlane.xlu0 %2388
    %v2390 = vrcp.pop %v2386
    %v2391 = vmul.f32 %v2373, %v2390
    %v2392 = vrcp.pop %v2389
    %v2393 = vmul.f32 %v2375, %v2392
    %v2394 = vsel %vm1649, %v2282, -inf
    %2395 = vmax.xlane.f32.xlu0 %v2394
    %v2396 = vpop.xlane.xlu0 %2395
    %v2397 = vsel %vm1649, %v2337, -inf
    %2398 = vmax.xlane.f32.xlu0 %v2397
    %v2399 = vpop.xlane.xlu0 %2398
    %v2400 = vsub.f32 %v2282, %v2396
    %v2401 = vsub.f32 %v2337, %v2399
    %v2402 = vmul.f32 %v2400, 1.442695
    %v2403 = vpow.pop %v2402
    %v2404 = vmul.f32 %v2401, 1.442695
    %v2405 = vpow.pop %v2404
    %2408 = vrot.lane.b32.xlu0 %v2403, 112
    %v2409 = vpop.permute.xlu0 %2408
    %2410 = vrot.lane.b32.xlu0 %v2405, 112
    %v2411 = vpop.permute.xlu0 %2410
    %v2414 = vsel %vm879, %v2409, 0.0
    %2415 = vadd.xlane.f32.xlu0 %v2414
    %v2416 = vpop.xlane.xlu0 %2415
    %v2417 = vsel %vm879, %v2411, 0.0
    %2418 = vadd.xlane.f32.xlu0 %v2417
    %v2419 = vpop.xlane.xlu0 %2418
    %v2420 = vrcp.pop %v2416
    %v2421 = vmul.f32 %v2403, %v2420
    %v2422 = vrcp.pop %v2419
    %v2423 = vmul.f32 %v2405, %v2422
    %v2424 = vsel %vm1680, %v2282, -inf
    %2425 = vmax.xlane.f32.xlu0 %v2424
    %v2426 = vpop.xlane.xlu0 %2425
    %v2427 = vsel %vm1680, %v2337, -inf
    %2428 = vmax.xlane.f32.xlu0 %v2427
    %v2429 = vpop.xlane.xlu0 %2428
    %v2430 = vsub.f32 %v2282, %v2426
    %v2431 = vsub.f32 %v2337, %v2429
    %v2432 = vmul.f32 %v2430, 1.442695
    %v2433 = vpow.pop %v2432
    %v2434 = vmul.f32 %v2431, 1.442695
    %v2435 = vpow.pop %v2434
    %2438 = vrot.lane.b32.xlu0 %v2433, 104
    %v2439 = vpop.permute.xlu0 %2438
    %2440 = vrot.lane.b32.xlu0 %v2435, 104
    %v2441 = vpop.permute.xlu0 %2440
    %v2444 = vsel %vm879, %v2439, 0.0
    %2445 = vadd.xlane.f32.xlu0 %v2444
    %v2446 = vpop.xlane.xlu0 %2445
    %v2447 = vsel %vm879, %v2441, 0.0
    %2448 = vadd.xlane.f32.xlu0 %v2447
    %v2449 = vpop.xlane.xlu0 %2448
    %v2450 = vrcp.pop %v2446
    %v2451 = vmul.f32 %v2433, %v2450
    %v2452 = vrcp.pop %v2449
    %v2453 = vmul.f32 %v2435, %v2452
    %v2454 = vsel %vm879, %v2361, %v2391
    %v2455 = vsel %vm879, %v2363, %v2393
    %v2456 = vsel %vm845, %v2454, %v2421
    %v2457 = vsel %vm845, %v2455, %v2423
    %v2458 = vsel %vm1715, %v2456, %v2451
    %v2459 = vsel %vm1715, %v2457, %v2453
    %v2460 = vpack.c.bf16 %v2458, %v2458
    %v2461 = vpack.c.bf16 %v2459, %v2459
    %2464 = vrot.lane.b32.xlu0 %v2222, 96
    %v2465 = vpop.permute.xlu0 %2464
    %2466 = vrot.lane.b32.xlu0 %v2228, 96
    %v2467 = vpop.permute.xlu0 %2466
    %v2471 = vsel %vm952, %v2460, 0
    %2473 = vmatprep.subr.bf16.mxu0 0
    %2474 = vmatpush1.bf16.msra.mxu0 %v2465
    %2475 = vmatprep.subr.bf16.mxu0 0
    %2476 = vmatpush1.bf16.msra.mxu0 %v2467
    %2477 = vmatprep.subr.bf16.mxu0 0
    %2478 = vmatpush1.bf16.msra.mxu0 0
    %2479 = vmatprep.subr.bf16.mxu0 0
    %2480 = vmatpush1.bf16.msra.mxu0 0
    %2481 = vmatprep.subr.bf16.mxu0 0
    %2482 = vmatpush1.bf16.msra.mxu0 0
    %2483 = vmatprep.subr.bf16.mxu0 0
    %2484 = vmatpush1.bf16.msra.mxu0 0
    %2485 = vmatprep.subr.bf16.mxu0 0
    %2486 = vmatpush1.bf16.msra.mxu0 0
    %2487 = vmatprep.subr.bf16.mxu0 0
    %2488 = vmatpush1.bf16.msra.mxu0 0
    %2489 = vmatprep.subr.bf16.mxu0 0
    %2490 = vmatpush1.bf16.msra.mxu0 0
    %2491 = vmatprep.subr.bf16.mxu0 0
    %2492 = vmatpush1.bf16.msra.mxu0 0
    %2493 = vmatprep.subr.bf16.mxu0 0
    %2494 = vmatpush1.bf16.msra.mxu0 0
    %2495 = vmatprep.subr.bf16.mxu0 0
    %2496 = vmatpush1.bf16.msra.mxu0 0
    %2497 = vmatprep.subr.bf16.mxu0 0
    %2498 = vmatpush1.bf16.msra.mxu0 0
    %2499 = vmatprep.subr.bf16.mxu0 0
    %2500 = vmatpush1.bf16.msra.mxu0 0
    %2501 = vmatprep.subr.bf16.mxu0 0
    %2502 = vmatpush1.bf16.msra.mxu0 0
    %2503 = vmatprep.subr.bf16.mxu0 0
    %2504 = vmatpush1.bf16.msra.mxu0 0
    %2505 = vmatprep.mubr.bf16.mxu0 0
    %2506 = vmatmul.mubr.bf16.gmra.mrb[0].mxu0 %v2471
    %v2507 = vpop.f32.mrb[0].mxu0
    %v2508 = vadd.f32 0.0, %v2507
    %v2509 = vpop.f32.mrb[0].mxu0
    %v2510 = vpop.f32.mrb[0].mxu0
    %v2511 = vpop.f32.mrb[0].mxu0
    %2512 = vdwg.mxu0
    %2515 = vrot.lane.b32.xlu0 %v2225, 96
    %v2516 = vpop.permute.xlu0 %2515
    %2517 = vrot.lane.b32.xlu0 %v2231, 96
    %v2518 = vpop.permute.xlu0 %2517
    %v2522 = vsel %vm952, %v2461, 0
    %2524 = vmatprep.subr.bf16.mxu0 0
    %2525 = vmatpush1.bf16.msra.mxu0 %v2516
    %2526 = vmatprep.subr.bf16.mxu0 0
    %2527 = vmatpush1.bf16.msra.mxu0 %v2518
    %2528 = vmatprep.subr.bf16.mxu0 0
    %2529 = vmatpush1.bf16.msra.mxu0 0
    %2530 = vmatprep.subr.bf16.mxu0 0
    %2531 = vmatpush1.bf16.msra.mxu0 0
    %2532 = vmatprep.subr.bf16.mxu0 0
    %2533 = vmatpush1.bf16.msra.mxu0 0
    %2534 = vmatprep.subr.bf16.mxu0 0
    %2535 = vmatpush1.bf16.msra.mxu0 0
    %2536 = vmatprep.subr.bf16.mxu0 0
    %2537 = vmatpush1.bf16.msra.mxu0 0
    %2538 = vmatprep.subr.bf16.mxu0 0
    %2539 = vmatpush1.bf16.msra.mxu0 0
    %2540 = vmatprep.subr.bf16.mxu0 0
    %2541 = vmatpush1.bf16.msra.mxu0 0
    %2542 = vmatprep.subr.bf16.mxu0 0
    %2543 = vmatpush1.bf16.msra.mxu0 0
    %2544 = vmatprep.subr.bf16.mxu0 0
    %2545 = vmatpush1.bf16.msra.mxu0 0
    %2546 = vmatprep.subr.bf16.mxu0 0
    %2547 = vmatpush1.bf16.msra.mxu0 0
    %2548 = vmatprep.subr.bf16.mxu0 0
    %2549 = vmatpush1.bf16.msra.mxu0 0
    %2550 = vmatprep.subr.bf16.mxu0 0
    %2551 = vmatpush1.bf16.msra.mxu0 0
    %2552 = vmatprep.subr.bf16.mxu0 0
    %2553 = vmatpush1.bf16.msra.mxu0 0
    %2554 = vmatprep.subr.bf16.mxu0 0
    %2555 = vmatpush1.bf16.msra.mxu0 0
    %2556 = vmatprep.mubr.bf16.mxu0 0
    %2557 = vmatmul.mubr.bf16.gmra.mrb[0].mxu0 %v2522
    %v2558 = vpop.f32.mrb[0].mxu0
    %v2559 = vadd.f32 0.0, %v2558
    %v2560 = vpop.f32.mrb[0].mxu0
    %v2561 = vpop.f32.mrb[0].mxu0
    %v2562 = vpop.f32.mrb[0].mxu0
    %2563 = vdwg.mxu0
    %v2564 = vpack.c.bf16 %v2559, %v2508
    %s2565 = scalar_lea.vmem [#allocation35], 16
    %v2566 = vld [vmem:[%s2565] sm:$0xf]
    %v2567 = vld [vmem:[%s2565 + $0x4] sm:$0xf]
    %v2568 = vld [vmem:[%s2565 + $0x8] sm:$0xf]
    %v2569 = vld [vmem:[%s2565 + $0xc] sm:$0xf]
    %v2570 = vlaneseq
    %v2571 = vshrl.u32 %v2570, 7
    %v2572 = vsub.s32 0, %v2571
    %v2573 = vrot.slane %v2085, %v2572
    %v2578 = vunpack.c.l.b16 %v2566
    %v2579 = vunpack.c.l.b16 %v2567
    %v2580 = vunpack.c.l.b16 %v2568
    %v2581 = vunpack.c.l.b16 %v2569
    %v2582 = vpack.c.b16 %v2579, %v2578
    %v2583 = vpack.c.b16 %v2581, %v2580
    %v2587 = vsel %vm952, %v2564, 0
    %2589 = vmatprep.subr.bf16.mxu0 0
    %2590 = vmatpush1.bf16.msra.mxu0 %v2582
    %2591 = vmatprep.subr.bf16.mxu0 0
    %2592 = vmatpush1.bf16.msra.mxu0 %v2583
    %2593 = vmatprep.subr.bf16.mxu0 0
    %2594 = vmatpush1.bf16.msra.mxu0 0
    %2595 = vmatprep.subr.bf16.mxu0 0
    %2596 = vmatpush1.bf16.msra.mxu0 0
    %2597 = vmatprep.subr.bf16.mxu0 0
    %2598 = vmatpush1.bf16.msra.mxu0 0
    %2599 = vmatprep.subr.bf16.mxu0 0
    %2600 = vmatpush1.bf16.msra.mxu0 0
    %2601 = vmatprep.subr.bf16.mxu0 0
    %2602 = vmatpush1.bf16.msra.mxu0 0
    %2603 = vmatprep.subr.bf16.mxu0 0
    %2604 = vmatpush1.bf16.msra.mxu0 0
    %2605 = vmatprep.subr.bf16.mxu0 0
    %2606 = vmatpush1.bf16.msra.mxu0 0
    %2607 = vmatprep.subr.bf16.mxu0 0
    %2608 = vmatpush1.bf16.msra.mxu0 0
    %2609 = vmatprep.subr.bf16.mxu0 0
    %2610 = vmatpush1.bf16.msra.mxu0 0
    %2611 = vmatprep.subr.bf16.mxu0 0
    %2612 = vmatpush1.bf16.msra.mxu0 0
    %2613 = vmatprep.subr.bf16.mxu0 0
    %2614 = vmatpush1.bf16.msra.mxu0 0
    %2615 = vmatprep.subr.bf16.mxu0 0
    %2616 = vmatpush1.bf16.msra.mxu0 0
    %2617 = vmatprep.subr.bf16.mxu0 0
    %2618 = vmatpush1.bf16.msra.mxu0 0
    %2619 = vmatprep.subr.bf16.mxu0 0
    %2620 = vmatpush1.bf16.msra.mxu0 0
    %2621 = vmatprep.mubr.bf16.mxu0 0
    %2622 = vmatmul.mubr.bf16.gmra.mrb[0].mxu0 %v2587
    %v2623 = vpop.f32.mrb[0].mxu0
    %v2624 = vadd.f32 %v2573, %v2623
    %v2625 = vpop.f32.mrb[0].mxu0
    %v2626 = vpop.f32.mrb[0].mxu0
    %v2627 = vadd.f32 %v2573, %v2626
    %v2628 = vpop.f32.mrb[0].mxu0
    %2629 = vdwg.mxu0
    %v2630 = vadd.f32 %v2082, %v2624
    %v2631 = vadd.f32 %v2083, %v2627
    %v2632 = vsel %vm952, %v2630, 0.0
    %2633 = vadd.xlane.f32.xlu0 %v2632
    %v2634 = vpop.xlane.xlu0 %2633
    %v2635 = vsel %vm952, %v2631, 0.0
    %2636 = vadd.xlane.f32.xlu0 %v2635
    %v2637 = vpop.xlane.xlu0 %2636
    %v2638 = vmul.f32 %v2634, %v1879
    %v2639 = vmul.f32 %v2637, %v1879
    %v2640 = vsub.f32 %v2630, %v2638
    %v2641 = vsub.f32 %v2631, %v2639
    %v2642 = vmul.f32 %v2640, %v2640
    %v2643 = vmul.f32 %v2641, %v2641
    %v2644 = vsel %vm952, %v2642, 0.0
    %2645 = vadd.xlane.f32.xlu0 %v2644
    %v2646 = vpop.xlane.xlu0 %2645
    %v2647 = vsel %vm952, %v2643, 0.0
    %2648 = vadd.xlane.f32.xlu0 %v2647
    %v2649 = vpop.xlane.xlu0 %2648
    %v2650 = vmul.f32 %v2646, %v1879
    %v2651 = vmul.f32 %v2649, %v1879
    %v2652 = vadd.f32 %v2650, 1e-05
    %v2653 = vadd.f32 %v2651, 1e-05
    %v2654 = vrsqrt.pop %v2652
    %v2655 = vrsqrt.pop %v2653
    %v2656 = vmul.f32 %v2640, %v2654
    %v2657 = vmul.f32 %v2641, %v2655
    %v2658 = vlaneseq
    %v2659 = vshrl.u32 %v2658, 7
    %v2660 = vsub.s32 0, %v2659
    %v2661 = vrot.slane %v2088, %v2660
    %v2662 = vmul.f32 %v2656, %v2661
    %v2663 = vmul.f32 %v2657, %v2661
    %v2664 = vlaneseq
    %v2665 = vshrl.u32 %v2664, 7
    %v2666 = vsub.s32 0, %v2665
    %v2667 = vrot.slane %v2089, %v2666
    %v2668 = vadd.f32 %v2662, %v2667
    %v2669 = vadd.f32 %v2663, %v2667
    %v2670 = vpack.c.bf16 %v2669, %v2668
    %s2671 = scalar_lea.vmem [#allocation36], 16
    %v2672 = vld [vmem:[%s2671] sm:$0xf]
    %v2673 = vld [vmem:[%s2671 + $0x4] sm:$0xf]
    %v2674 = vld [vmem:[%s2671 + $0x8] sm:$0xf]
    %v2675 = vld [vmem:[%s2671 + $0xc] sm:$0xf]
    %v2676 = vlaneseq
    %v2677 = vshrl.u32 %v2676, 7
    %v2678 = vsub.s32 0, %v2677
    %v2679 = vrot.slane %v2086, %v2678
    %v2684 = vunpack.c.l.b16 %v2672
    %v2685 = vunpack.c.l.b16 %v2673
    %v2686 = vunpack.c.l.b16 %v2674
    %v2687 = vunpack.c.l.b16 %v2675
    %v2688 = vpack.c.b16 %v2685, %v2684
    %v2689 = vpack.c.b16 %v2687, %v2686
    %v2693 = vsel %vm952, %v2670, 0
    %2695 = vmatprep.subr.bf16.mxu0 0
    %2696 = vmatpush1.bf16.msra.mxu0 %v2688
    %2697 = vmatprep.subr.bf16.mxu0 0
    %2698 = vmatpush1.bf16.msra.mxu0 %v2689
    %2699 = vmatprep.subr.bf16.mxu0 0
    %2700 = vmatpush1.bf16.msra.mxu0 0
    %2701 = vmatprep.subr.bf16.mxu0 0
    %2702 = vmatpush1.bf16.msra.mxu0 0
    %2703 = vmatprep.subr.bf16.mxu0 0
    %2704 = vmatpush1.bf16.msra.mxu0 0
    %2705 = vmatprep.subr.bf16.mxu0 0
    %2706 = vmatpush1.bf16.msra.mxu0 0
    %2707 = vmatprep.subr.bf16.mxu0 0
    %2708 = vmatpush1.bf16.msra.mxu0 0
    %2709 = vmatprep.subr.bf16.mxu0 0
    %2710 = vmatpush1.bf16.msra.mxu0 0
    %2711 = vmatprep.subr.bf16.mxu0 0
    %2712 = vmatpush1.bf16.msra.mxu0 0
    %2713 = vmatprep.subr.bf16.mxu0 0
    %2714 = vmatpush1.bf16.msra.mxu0 0
    %2715 = vmatprep.subr.bf16.mxu0 0
    %2716 = vmatpush1.bf16.msra.mxu0 0
    %2717 = vmatprep.subr.bf16.mxu0 0
    %2718 = vmatpush1.bf16.msra.mxu0 0
    %2719 = vmatprep.subr.bf16.mxu0 0
    %2720 = vmatpush1.bf16.msra.mxu0 0
    %2721 = vmatprep.subr.bf16.mxu0 0
    %2722 = vmatpush1.bf16.msra.mxu0 0
    %2723 = vmatprep.subr.bf16.mxu0 0
    %2724 = vmatpush1.bf16.msra.mxu0 0
    %2725 = vmatprep.subr.bf16.mxu0 0
    %2726 = vmatpush1.bf16.msra.mxu0 0
    %2727 = vmatprep.mubr.bf16.mxu0 0
    %2728 = vmatmul.mubr.bf16.gmra.mrb[0].mxu0 %v2693
    %v2729 = vpop.f32.mrb[0].mxu0
    %v2730 = vadd.f32 %v2679, %v2729
    %v2731 = vpop.f32.mrb[0].mxu0
    %v2732 = vpop.f32.mrb[0].mxu0
    %v2733 = vadd.f32 %v2679, %v2732
    %v2734 = vpop.f32.mrb[0].mxu0
    %2735 = vdwg.mxu0
    %v2736 = vmax.f32 %v2730, 0.0
    %v2737 = vmax.f32 %v2733, 0.0
    %v2738 = vpack.c.bf16 %v2737, %v2736
    %s2739 = scalar_lea.vmem [#allocation38], 16
    %v2740 = vld [vmem:[%s2739] sm:$0xf]
    %v2741 = vld [vmem:[%s2739 + $0x4] sm:$0xf]
    %v2742 = vld [vmem:[%s2739 + $0x8] sm:$0xf]
    %v2743 = vld [vmem:[%s2739 + $0xc] sm:$0xf]
    %v2744 = vlaneseq
    %v2745 = vshrl.u32 %v2744, 7
    %v2746 = vsub.s32 0, %v2745
    %v2747 = vrot.slane %v2087, %v2746
    %v2752 = vunpack.c.l.b16 %v2740
    %v2753 = vunpack.c.l.b16 %v2741
    %v2754 = vunpack.c.l.b16 %v2742
    %v2755 = vunpack.c.l.b16 %v2743
    %v2756 = vpack.c.b16 %v2753, %v2752
    %v2757 = vpack.c.b16 %v2755, %v2754
    %v2761 = vsel %vm952, %v2738, 0
    %2763 = vmatprep.subr.bf16.mxu0 0
    %2764 = vmatpush1.bf16.msra.mxu0 %v2756
    %2765 = vmatprep.subr.bf16.mxu0 0
    %2766 = vmatpush1.bf16.msra.mxu0 %v2757
    %2767 = vmatprep.subr.bf16.mxu0 0
    %2768 = vmatpush1.bf16.msra.mxu0 0
    %2769 = vmatprep.subr.bf16.mxu0 0
    %2770 = vmatpush1.bf16.msra.mxu0 0
    %2771 = vmatprep.subr.bf16.mxu0 0
    %2772 = vmatpush1.bf16.msra.mxu0 0
    %2773 = vmatprep.subr.bf16.mxu0 0
    %2774 = vmatpush1.bf16.msra.mxu0 0
    %2775 = vmatprep.subr.bf16.mxu0 0
    %2776 = vmatpush1.bf16.msra.mxu0 0
    %2777 = vmatprep.subr.bf16.mxu0 0
    %2778 = vmatpush1.bf16.msra.mxu0 0
    %2779 = vmatprep.subr.bf16.mxu0 0
    %2780 = vmatpush1.bf16.msra.mxu0 0
    %2781 = vmatprep.subr.bf16.mxu0 0
    %2782 = vmatpush1.bf16.msra.mxu0 0
    %2783 = vmatprep.subr.bf16.mxu0 0
    %2784 = vmatpush1.bf16.msra.mxu0 0
    %2785 = vmatprep.subr.bf16.mxu0 0
    %2786 = vmatpush1.bf16.msra.mxu0 0
    %2787 = vmatprep.subr.bf16.mxu0 0
    %2788 = vmatpush1.bf16.msra.mxu0 0
    %2789 = vmatprep.subr.bf16.mxu0 0
    %2790 = vmatpush1.bf16.msra.mxu0 0
    %2791 = vmatprep.subr.bf16.mxu0 0
    %2792 = vmatpush1.bf16.msra.mxu0 0
    %2793 = vmatprep.subr.bf16.mxu0 0
    %2794 = vmatpush1.bf16.msra.mxu0 0
    %2795 = vmatprep.mubr.bf16.mxu0 0
    %2796 = vmatmul.mubr.bf16.gmra.mrb[0].mxu0 %v2761
    %v2797 = vpop.f32.mrb[0].mxu0
    %v2798 = vadd.f32 %v2747, %v2797
    %v2799 = vpop.f32.mrb[0].mxu0
    %v2800 = vpop.f32.mrb[0].mxu0
    %v2801 = vadd.f32 %v2747, %v2800
    %v2802 = vpop.f32.mrb[0].mxu0
    %2803 = vdwg.mxu0
    %v2804 = vadd.f32 %v2668, %v2798
    %v2805 = vadd.f32 %v2669, %v2801
    %v2806 = vsel %vm952, %v2804, 0.0
    %2807 = vadd.xlane.f32.xlu0 %v2806
    %v2808 = vpop.xlane.xlu0 %2807
    %v2809 = vsel %vm952, %v2805, 0.0
    %2810 = vadd.xlane.f32.xlu0 %v2809
    %v2811 = vpop.xlane.xlu0 %2810
    %v2812 = vmul.f32 %v2808, %v1879
    %v2813 = vmul.f32 %v2811, %v1879
    %v2814 = vsub.f32 %v2804, %v2812
    %v2815 = vsub.f32 %v2805, %v2813
    %v2816 = vmul.f32 %v2814, %v2814
    %v2817 = vmul.f32 %v2815, %v2815
    %v2818 = vsel %vm952, %v2816, 0.0
    %2819 = vadd.xlane.f32.xlu0 %v2818
    %v2820 = vpop.xlane.xlu0 %2819
    %v2821 = vsel %vm952, %v2817, 0.0
    %2822 = vadd.xlane.f32.xlu0 %v2821
    %v2823 = vpop.xlane.xlu0 %2822
    %v2824 = vmul.f32 %v2820, %v1879
    %v2825 = vmul.f32 %v2823, %v1879
    %v2826 = vadd.f32 %v2824, 1e-05
    %v2827 = vadd.f32 %v2825, 1e-05
    %v2828 = vrsqrt.pop %v2826
    %v2829 = vrsqrt.pop %v2827
    %v2830 = vmul.f32 %v2814, %v2828
    %v2831 = vmul.f32 %v2815, %v2829
    %v2832 = vlaneseq
    %v2833 = vshrl.u32 %v2832, 7
    %v2834 = vsub.s32 0, %v2833
    %v2835 = vrot.slane %v2090, %v2834
    %v2836 = vmul.f32 %v2830, %v2835
    %v2837 = vmul.f32 %v2831, %v2835
    %v2838 = vlaneseq
    %v2839 = vshrl.u32 %v2838, 7
    %v2840 = vsub.s32 0, %v2839
    %v2841 = vrot.slane %v2091, %v2840
    %v2842 = vadd.f32 %v2836, %v2841
    %v2843 = vadd.f32 %v2837, %v2841
    %v2844 = vld [vmem:[#allocation39 + $0x10] sm:$0x1]
    %v2845 = vld [vmem:[#allocation39 + $0x11] sm:$0x1]
    %v2846 = vld [vmem:[#allocation39 + $0x12] sm:$0x1]
    %v2847 = vld [vmem:[#allocation39 + $0x13] sm:$0x1]
    %v2848 = vld [vmem:[#allocation39 + $0x14] sm:$0x1]
    %v2849 = vld [vmem:[#allocation39 + $0x15] sm:$0x1]
    %v2850 = vld [vmem:[#allocation39 + $0x16] sm:$0x1]
    %v2851 = vld [vmem:[#allocation39 + $0x17] sm:$0x1]
    %v2852 = vpack.c.bf16 %v2843, %v2842
    %s2853 = scalar_lea.vmem [#allocation27], 32
    %v2854 = vld [vmem:[%s2853] sm:$0xf]
    %v2855 = vld [vmem:[%s2853 + $0x4] sm:$0xf]
    %v2856 = vld [vmem:[%s2853 + $0x8] sm:$0xf]
    %v2857 = vld [vmem:[%s2853 + $0xc] sm:$0xf]
    %v2858 = vlaneseq
    %v2859 = vshrl.u32 %v2858, 7
    %v2860 = vsub.s32 0, %v2859
    %v2861 = vrot.slane %v2844, %v2860
    %v2866 = vunpack.c.l.b16 %v2854
    %v2867 = vunpack.c.l.b16 %v2855
    %v2868 = vunpack.c.l.b16 %v2856
    %v2869 = vunpack.c.l.b16 %v2857
    %v2870 = vpack.c.b16 %v2867, %v2866
    %v2871 = vpack.c.b16 %v2869, %v2868
    %v2875 = vsel %vm952, %v2852, 0
    %2877 = vmatprep.subr.bf16.mxu0 0
    %2878 = vmatpush1.bf16.msra.mxu0 %v2870
    %2879 = vmatprep.subr.bf16.mxu0 0
    %2880 = vmatpush1.bf16.msra.mxu0 %v2871
    %2881 = vmatprep.subr.bf16.mxu0 0
    %2882 = vmatpush1.bf16.msra.mxu0 0
    %2883 = vmatprep.subr.bf16.mxu0 0
    %2884 = vmatpush1.bf16.msra.mxu0 0
    %2885 = vmatprep.subr.bf16.mxu0 0
    %2886 = vmatpush1.bf16.msra.mxu0 0
    %2887 = vmatprep.subr.bf16.mxu0 0
    %2888 = vmatpush1.bf16.msra.mxu0 0
    %2889 = vmatprep.subr.bf16.mxu0 0
    %2890 = vmatpush1.bf16.msra.mxu0 0
    %2891 = vmatprep.subr.bf16.mxu0 0
    %2892 = vmatpush1.bf16.msra.mxu0 0
    %2893 = vmatprep.subr.bf16.mxu0 0
    %2894 = vmatpush1.bf16.msra.mxu0 0
    %2895 = vmatprep.subr.bf16.mxu0 0
    %2896 = vmatpush1.bf16.msra.mxu0 0
    %2897 = vmatprep.subr.bf16.mxu0 0
    %2898 = vmatpush1.bf16.msra.mxu0 0
    %2899 = vmatprep.subr.bf16.mxu0 0
    %2900 = vmatpush1.bf16.msra.mxu0 0
    %2901 = vmatprep.subr.bf16.mxu0 0
    %2902 = vmatpush1.bf16.msra.mxu0 0
    %2903 = vmatprep.subr.bf16.mxu0 0
    %2904 = vmatpush1.bf16.msra.mxu0 0
    %2905 = vmatprep.subr.bf16.mxu0 0
    %2906 = vmatpush1.bf16.msra.mxu0 0
    %2907 = vmatprep.subr.bf16.mxu0 0
    %2908 = vmatpush1.bf16.msra.mxu0 0
    %2909 = vmatprep.mubr.bf16.mxu0 0
    %2910 = vmatmul.mubr.bf16.gmra.mrb[0].mxu0 %v2875
    %v2911 = vpop.f32.mrb[0].mxu0
    %v2912 = vadd.f32 %v2861, %v2911
    %v2913 = vpop.f32.mrb[0].mxu0
    %v2914 = vpop.f32.mrb[0].mxu0
    %v2915 = vadd.f32 %v2861, %v2914
    %v2916 = vpop.f32.mrb[0].mxu0
    %2917 = vdwg.mxu0
    %v2918 = vpack.c.bf16 %v2912, %v2912
    %v2919 = vpack.c.bf16 %v2915, %v2915
    %2920 = vrot.lane.b32.xlu0 %v1420, 64
    %v2921 = vpop.permute.xlu0 %2920
    %v2923 = vmul.bf16 %v1410, %v2921
    %v2924 = vmul.bf16 %v1411, %v2921
    %2925 = vrot.lane.b32.xlu0 %v1429, 64
    %v2926 = vpop.permute.xlu0 %2925
    %v2928 = vmul.bf16 %v1410, %v2926
    %v2929 = vmul.bf16 %v1411, %v2926
    %2930 = vrot.lane.b32.xlu0 %v1435, 64
    %v2931 = vpop.permute.xlu0 %2930
    %v2933 = vmul.bf16 %v1410, %v2931
    %v2934 = vmul.bf16 %v1411, %v2931
    %2935 = vrot.lane.b32.xlu0 %v1441, 64
    %v2936 = vpop.permute.xlu0 %2935
    %v2938 = vmul.bf16 %v1410, %v2936
    %v2939 = vmul.bf16 %v1411, %v2936
    %v2942 = vrot.slane %v2928, 4
    %v2943 = vrot.slane %v2929, 4
    %v2946 = vrot.slane %v2938, 4
    %v2947 = vrot.slane %v2939, 4
    %v2950 = vsel %vm883, %v2923, %v2942
    %v2953 = vsel %vm883, %v2924, %v2943
    %v2956 = vsel %vm883, %v2933, %v2946
    %v2959 = vsel %vm883, %v2934, %v2947
    %v2960 = vmul.bf16 %v1412, %v2921
    %v2961 = vmul.bf16 %v1413, %v2921
    %v2962 = vmul.bf16 %v1412, %v2926
    %v2963 = vmul.bf16 %v1413, %v2926
    %v2964 = vmul.bf16 %v1412, %v2931
    %v2965 = vmul.bf16 %v1413, %v2931
    %v2966 = vmul.bf16 %v1412, %v2936
    %v2967 = vmul.bf16 %v1413, %v2936
    %v2970 = vrot.slane %v2962, 4
    %v2971 = vrot.slane %v2963, 4
    %v2974 = vrot.slane %v2966, 4
    %v2975 = vrot.slane %v2967, 4
    %v2978 = vsel %vm883, %v2960, %v2970
    %v2981 = vsel %vm883, %v2961, %v2971
    %v2984 = vsel %vm883, %v2964, %v2974
    %v2987 = vsel %vm883, %v2965, %v2975
    %2990 = vrot.lane.b32.xlu0 %v2950, 64
    %v2991 = vpop.permute.xlu0 %2990
    %2992 = vrot.lane.b32.xlu0 %v2956, 64
    %v2993 = vpop.permute.xlu0 %2992
    %v2995 = vsel %vm952, %v2918, 0
    %v2998 = vsel %vm952, %v2991, 0
    %v3001 = vsel %vm952, %v2993, 0
    %3003 = vmatprep.subr.bf16.mxu0 0
    %3004 = vmatpush1.bf16.xpose.msra.mxu0 %v2998
    %3005 = vmatprep.subr.bf16.mxu0 0
    %3006 = vmatpush1.bf16.xpose.msra.mxu0 %v3001
    %3007 = vmatprep.subr.bf16.mxu0 0
    %3008 = vmatpush1.bf16.xpose.msra.mxu0 0
    %3009 = vmatprep.subr.bf16.mxu0 0
    %3010 = vmatpush1.bf16.xpose.msra.mxu0 0
    %3011 = vmatprep.subr.bf16.mxu0 0
    %3012 = vmatpush1.bf16.xpose.msra.mxu0 0
    %3013 = vmatprep.subr.bf16.mxu0 0
    %3014 = vmatpush1.bf16.xpose.msra.mxu0 0
    %3015 = vmatprep.subr.bf16.mxu0 0
    %3016 = vmatpush1.bf16.xpose.msra.mxu0 0
    %3017 = vmatprep.subr.bf16.mxu0 0
    %3018 = vmatpush1.bf16.xpose.msra.mxu0 0
    %3019 = vmatprep.subr.bf16.mxu0 0
    %3020 = vmatpush1.bf16.xpose.msra.mxu0 0
    %3021 = vmatprep.subr.bf16.mxu0 0
    %3022 = vmatpush1.bf16.xpose.msra.mxu0 0
    %3023 = vmatprep.subr.bf16.mxu0 0
    %3024 = vmatpush1.bf16.xpose.msra.mxu0 0
    %3025 = vmatprep.subr.bf16.mxu0 0
    %3026 = vmatpush1.bf16.xpose.msra.mxu0 0
    %3027 = vmatprep.subr.bf16.mxu0 0
    %3028 = vmatpush1.bf16.xpose.msra.mxu0 0
    %3029 = vmatprep.subr.bf16.mxu0 0
    %3030 = vmatpush1.bf16.xpose.msra.mxu0 0
    %3031 = vmatprep.subr.bf16.mxu0 0
    %3032 = vmatpush1.bf16.xpose.msra.mxu0 0
    %3033 = vmatprep.subr.bf16.mxu0 0
    %3034 = vmatpush1.bf16.xpose.msra.mxu0 0
    %3035 = vmatprep.mubr.bf16.mxu0 0
    %3036 = vmatmul.mubr.bf16.gmra.mrb[0].mxu0 %v2995
    %v3037 = vpop.f32.mrb[0].mxu0
    %v3038 = vadd.f32 %v1500, %v3037
    %v3039 = vpop.f32.mrb[0].mxu0
    %v3040 = vpop.f32.mrb[0].mxu0
    %v3041 = vpop.f32.mrb[0].mxu0
    %3042 = vdwg.mxu0
    %3045 = vrot.lane.b32.xlu0 %v2953, 64
    %v3046 = vpop.permute.xlu0 %3045
    %3047 = vrot.lane.b32.xlu0 %v2959, 64
    %v3048 = vpop.permute.xlu0 %3047
    %v3050 = vsel %vm952, %v2919, 0
    %v3053 = vsel %vm952, %v3046, 0
    %v3056 = vsel %vm952, %v3048, 0
    %3058 = vmatprep.subr.bf16.mxu0 0
    %3059 = vmatpush1.bf16.xpose.msra.mxu0 %v3053
    %3060 = vmatprep.subr.bf16.mxu0 0
    %3061 = vmatpush1.bf16.xpose.msra.mxu0 %v3056
    %3062 = vmatprep.subr.bf16.mxu0 0
    %3063 = vmatpush1.bf16.xpose.msra.mxu0 0
    %3064 = vmatprep.subr.bf16.mxu0 0
    %3065 = vmatpush1.bf16.xpose.msra.mxu0 0
    %3066 = vmatprep.subr.bf16.mxu0 0
    %3067 = vmatpush1.bf16.xpose.msra.mxu0 0
    %3068 = vmatprep.subr.bf16.mxu0 0
    %3069 = vmatpush1.bf16.xpose.msra.mxu0 0
    %3070 = vmatprep.subr.bf16.mxu0 0
    %3071 = vmatpush1.bf16.xpose.msra.mxu0 0
    %3072 = vmatprep.subr.bf16.mxu0 0
    %3073 = vmatpush1.bf16.xpose.msra.mxu0 0
    %3074 = vmatprep.subr.bf16.mxu0 0
    %3075 = vmatpush1.bf16.xpose.msra.mxu0 0
    %3076 = vmatprep.subr.bf16.mxu0 0
    %3077 = vmatpush1.bf16.xpose.msra.mxu0 0
    %3078 = vmatprep.subr.bf16.mxu0 0
    %3079 = vmatpush1.bf16.xpose.msra.mxu0 0
    %3080 = vmatprep.subr.bf16.mxu0 0
    %3081 = vmatpush1.bf16.xpose.msra.mxu0 0
    %3082 = vmatprep.subr.bf16.mxu0 0
    %3083 = vmatpush1.bf16.xpose.msra.mxu0 0
    %3084 = vmatprep.subr.bf16.mxu0 0
    %3085 = vmatpush1.bf16.xpose.msra.mxu0 0
    %3086 = vmatprep.subr.bf16.mxu0 0
    %3087 = vmatpush1.bf16.xpose.msra.mxu0 0
    %3088 = vmatprep.subr.bf16.mxu0 0
    %3089 = vmatpush1.bf16.xpose.msra.mxu0 0
    %3090 = vmatprep.mubr.bf16.mxu0 0
    %3091 = vmatmul.mubr.bf16.gmra.mrb[0].mxu0 %v3050
    %v3092 = vpop.f32.mrb[0].mxu0
    %v3093 = vadd.f32 %v1500, %v3092
    %v3094 = vpop.f32.mrb[0].mxu0
    %v3095 = vpop.f32.mrb[0].mxu0
    %v3096 = vpop.f32.mrb[0].mxu0
    %3097 = vdwg.mxu0
    %v3098 = vsel %vm879, %v3038, -inf
    %3099 = vmax.xlane.f32.xlu0 %v3098
    %v3100 = vpop.xlane.xlu0 %3099
    %v3101 = vsel %vm879, %v3093, -inf
    %3102 = vmax.xlane.f32.xlu0 %v3101
    %v3103 = vpop.xlane.xlu0 %3102
    %v3104 = vsub.f32 %v3038, %v3100
    %v3105 = vsub.f32 %v3093, %v3103
    %v3106 = vmul.f32 %v3104, 1.442695
    %v3107 = vpow.pop %v3106
    %v3108 = vmul.f32 %v3105, 1.442695
    %v3109 = vpow.pop %v3108
    %v3110 = vsel %vm879, %v3107, 0.0
    %3111 = vadd.xlane.f32.xlu0 %v3110
    %v3112 = vpop.xlane.xlu0 %3111
    %v3113 = vsel %vm879, %v3109, 0.0
    %3114 = vadd.xlane.f32.xlu0 %v3113
    %v3115 = vpop.xlane.xlu0 %3114
    %v3116 = vrcp.pop %v3112
    %v3117 = vmul.f32 %v3107, %v3116
    %v3118 = vrcp.pop %v3115
    %v3119 = vmul.f32 %v3109, %v3118
    %v3120 = vsel %vm1618, %v3038, -inf
    %3121 = vmax.xlane.f32.xlu0 %v3120
    %v3122 = vpop.xlane.xlu0 %3121
    %v3123 = vsel %vm1618, %v3093, -inf
    %3124 = vmax.xlane.f32.xlu0 %v3123
    %v3125 = vpop.xlane.xlu0 %3124
    %v3126 = vsub.f32 %v3038, %v3122
    %v3127 = vsub.f32 %v3093, %v3125
    %v3128 = vmul.f32 %v3126, 1.442695
    %v3129 = vpow.pop %v3128
    %v3130 = vmul.f32 %v3127, 1.442695
    %v3131 = vpow.pop %v3130
    %3134 = vrot.lane.b32.xlu0 %v3129, 120
    %v3135 = vpop.permute.xlu0 %3134
    %3136 = vrot.lane.b32.xlu0 %v3131, 120
    %v3137 = vpop.permute.xlu0 %3136
    %v3140 = vsel %vm879, %v3135, 0.0
    %3141 = vadd.xlane.f32.xlu0 %v3140
    %v3142 = vpop.xlane.xlu0 %3141
    %v3143 = vsel %vm879, %v3137, 0.0
    %3144 = vadd.xlane.f32.xlu0 %v3143
    %v3145 = vpop.xlane.xlu0 %3144
    %v3146 = vrcp.pop %v3142
    %v3147 = vmul.f32 %v3129, %v3146
    %v3148 = vrcp.pop %v3145
    %v3149 = vmul.f32 %v3131, %v3148
    %v3150 = vsel %vm1649, %v3038, -inf
    %3151 = vmax.xlane.f32.xlu0 %v3150
    %v3152 = vpop.xlane.xlu0 %3151
    %v3153 = vsel %vm1649, %v3093, -inf
    %3154 = vmax.xlane.f32.xlu0 %v3153
    %v3155 = vpop.xlane.xlu0 %3154
    %v3156 = vsub.f32 %v3038, %v3152
    %v3157 = vsub.f32 %v3093, %v3155
    %v3158 = vmul.f32 %v3156, 1.442695
    %v3159 = vpow.pop %v3158
    %v3160 = vmul.f32 %v3157, 1.442695
    %v3161 = vpow.pop %v3160
    %3164 = vrot.lane.b32.xlu0 %v3159, 112
    %v3165 = vpop.permute.xlu0 %3164
    %3166 = vrot.lane.b32.xlu0 %v3161, 112
    %v3167 = vpop.permute.xlu0 %3166
    %v3170 = vsel %vm879, %v3165, 0.0
    %3171 = vadd.xlane.f32.xlu0 %v3170
    %v3172 = vpop.xlane.xlu0 %3171
    %v3173 = vsel %vm879, %v3167, 0.0
    %3174 = vadd.xlane.f32.xlu0 %v3173
    %v3175 = vpop.xlane.xlu0 %3174
    %v3176 = vrcp.pop %v3172
    %v3177 = vmul.f32 %v3159, %v3176
    %v3178 = vrcp.pop %v3175
    %v3179 = vmul.f32 %v3161, %v3178
    %v3180 = vsel %vm1680, %v3038, -inf
    %3181 = vmax.xlane.f32.xlu0 %v3180
    %v3182 = vpop.xlane.xlu0 %3181
    %v3183 = vsel %vm1680, %v3093, -inf
    %3184 = vmax.xlane.f32.xlu0 %v3183
    %v3185 = vpop.xlane.xlu0 %3184
    %v3186 = vsub.f32 %v3038, %v3182
    %v3187 = vsub.f32 %v3093, %v3185
    %v3188 = vmul.f32 %v3186, 1.442695
    %v3189 = vpow.pop %v3188
    %v3190 = vmul.f32 %v3187, 1.442695
    %v3191 = vpow.pop %v3190
    %3194 = vrot.lane.b32.xlu0 %v3189, 104
    %v3195 = vpop.permute.xlu0 %3194
    %3196 = vrot.lane.b32.xlu0 %v3191, 104
    %v3197 = vpop.permute.xlu0 %3196
    %v3200 = vsel %vm879, %v3195, 0.0
    %3201 = vadd.xlane.f32.xlu0 %v3200
    %v3202 = vpop.xlane.xlu0 %3201
    %v3203 = vsel %vm879, %v3197, 0.0
    %3204 = vadd.xlane.f32.xlu0 %v3203
    %v3205 = vpop.xlane.xlu0 %3204
    %v3206 = vrcp.pop %v3202
    %v3207 = vmul.f32 %v3189, %v3206
    %v3208 = vrcp.pop %v3205
    %v3209 = vmul.f32 %v3191, %v3208
    %v3210 = vsel %vm879, %v3117, %v3147
    %v3211 = vsel %vm879, %v3119, %v3149
    %v3212 = vsel %vm845, %v3210, %v3177
    %v3213 = vsel %vm845, %v3211, %v3179
    %v3214 = vsel %vm1715, %v3212, %v3207
    %v3215 = vsel %vm1715, %v3213, %v3209
    %v3216 = vpack.c.bf16 %v3214, %v3214
    %v3217 = vpack.c.bf16 %v3215, %v3215
    %3220 = vrot.lane.b32.xlu0 %v2978, 64
    %v3221 = vpop.permute.xlu0 %3220
    %3222 = vrot.lane.b32.xlu0 %v2984, 64
    %v3223 = vpop.permute.xlu0 %3222
    %v3227 = vsel %vm952, %v3216, 0
    %3229 = vmatprep.subr.bf16.mxu0 0
    %3230 = vmatpush1.bf16.msra.mxu0 %v3221
    %3231 = vmatprep.subr.bf16.mxu0 0
    %3232 = vmatpush1.bf16.msra.mxu0 %v3223
    %3233 = vmatprep.subr.bf16.mxu0 0
    %3234 = vmatpush1.bf16.msra.mxu0 0
    %3235 = vmatprep.subr.bf16.mxu0 0
    %3236 = vmatpush1.bf16.msra.mxu0 0
    %3237 = vmatprep.subr.bf16.mxu0 0
    %3238 = vmatpush1.bf16.msra.mxu0 0
    %3239 = vmatprep.subr.bf16.mxu0 0
    %3240 = vmatpush1.bf16.msra.mxu0 0
    %3241 = vmatprep.subr.bf16.mxu0 0
    %3242 = vmatpush1.bf16.msra.mxu0 0
    %3243 = vmatprep.subr.bf16.mxu0 0
    %3244 = vmatpush1.bf16.msra.mxu0 0
    %3245 = vmatprep.subr.bf16.mxu0 0
    %3246 = vmatpush1.bf16.msra.mxu0 0
    %3247 = vmatprep.subr.bf16.mxu0 0
    %3248 = vmatpush1.bf16.msra.mxu0 0
    %3249 = vmatprep.subr.bf16.mxu0 0
    %3250 = vmatpush1.bf16.msra.mxu0 0
    %3251 = vmatprep.subr.bf16.mxu0 0
    %3252 = vmatpush1.bf16.msra.mxu0 0
    %3253 = vmatprep.subr.bf16.mxu0 0
    %3254 = vmatpush1.bf16.msra.mxu0 0
    %3255 = vmatprep.subr.bf16.mxu0 0
    %3256 = vmatpush1.bf16.msra.mxu0 0
    %3257 = vmatprep.subr.bf16.mxu0 0
    %3258 = vmatpush1.bf16.msra.mxu0 0
    %3259 = vmatprep.subr.bf16.mxu0 0
    %3260 = vmatpush1.bf16.msra.mxu0 0
    %3261 = vmatprep.mubr.bf16.mxu0 0
    %3262 = vmatmul.mubr.bf16.gmra.mrb[0].mxu0 %v3227
    %v3263 = vpop.f32.mrb[0].mxu0
    %v3264 = vadd.f32 0.0, %v3263
    %v3265 = vpop.f32.mrb[0].mxu0
    %v3266 = vpop.f32.mrb[0].mxu0
    %v3267 = vpop.f32.mrb[0].mxu0
    %3268 = vdwg.mxu0
    %3271 = vrot.lane.b32.xlu0 %v2981, 64
    %v3272 = vpop.permute.xlu0 %3271
    %3273 = vrot.lane.b32.xlu0 %v2987, 64
    %v3274 = vpop.permute.xlu0 %3273
    %v3278 = vsel %vm952, %v3217, 0
    %3280 = vmatprep.subr.bf16.mxu0 0
    %3281 = vmatpush1.bf16.msra.mxu0 %v3272
    %3282 = vmatprep.subr.bf16.mxu0 0
    %3283 = vmatpush1.bf16.msra.mxu0 %v3274
    %3284 = vmatprep.subr.bf16.mxu0 0
    %3285 = vmatpush1.bf16.msra.mxu0 0
    %3286 = vmatprep.subr.bf16.mxu0 0
    %3287 = vmatpush1.bf16.msra.mxu0 0
    %3288 = vmatprep.subr.bf16.mxu0 0
    %3289 = vmatpush1.bf16.msra.mxu0 0
    %3290 = vmatprep.subr.bf16.mxu0 0
    %3291 = vmatpush1.bf16.msra.mxu0 0
    %3292 = vmatprep.subr.bf16.mxu0 0
    %3293 = vmatpush1.bf16.msra.mxu0 0
    %3294 = vmatprep.subr.bf16.mxu0 0
    %3295 = vmatpush1.bf16.msra.mxu0 0
    %3296 = vmatprep.subr.bf16.mxu0 0
    %3297 = vmatpush1.bf16.msra.mxu0 0
    %3298 = vmatprep.subr.bf16.mxu0 0
    %3299 = vmatpush1.bf16.msra.mxu0 0
    %3300 = vmatprep.subr.bf16.mxu0 0
    %3301 = vmatpush1.bf16.msra.mxu0 0
    %3302 = vmatprep.subr.bf16.mxu0 0
    %3303 = vmatpush1.bf16.msra.mxu0 0
    %3304 = vmatprep.subr.bf16.mxu0 0
    %3305 = vmatpush1.bf16.msra.mxu0 0
    %3306 = vmatprep.subr.bf16.mxu0 0
    %3307 = vmatpush1.bf16.msra.mxu0 0
    %3308 = vmatprep.subr.bf16.mxu0 0
    %3309 = vmatpush1.bf16.msra.mxu0 0
    %3310 = vmatprep.subr.bf16.mxu0 0
    %3311 = vmatpush1.bf16.msra.mxu0 0
    %3312 = vmatprep.mubr.bf16.mxu0 0
    %3313 = vmatmul.mubr.bf16.gmra.mrb[0].mxu0 %v3278
    %v3314 = vpop.f32.mrb[0].mxu0
    %v3315 = vadd.f32 0.0, %v3314
    %v3316 = vpop.f32.mrb[0].mxu0
    %v3317 = vpop.f32.mrb[0].mxu0
    %v3318 = vpop.f32.mrb[0].mxu0
    %3319 = vdwg.mxu0
    %v3320 = vpack.c.bf16 %v3315, %v3264
    %s3321 = scalar_lea.vmem [#allocation35], 32
    %v3322 = vld [vmem:[%s3321] sm:$0xf]
    %v3323 = vld [vmem:[%s3321 + $0x4] sm:$0xf]
    %v3324 = vld [vmem:[%s3321 + $0x8] sm:$0xf]
    %v3325 = vld [vmem:[%s3321 + $0xc] sm:$0xf]
    %v3326 = vlaneseq
    %v3327 = vshrl.u32 %v3326, 7
    %v3328 = vsub.s32 0, %v3327
    %v3329 = vrot.slane %v2845, %v3328
    %v3334 = vunpack.c.l.b16 %v3322
    %v3335 = vunpack.c.l.b16 %v3323
    %v3336 = vunpack.c.l.b16 %v3324
    %v3337 = vunpack.c.l.b16 %v3325
    %v3338 = vpack.c.b16 %v3335, %v3334
    %v3339 = vpack.c.b16 %v3337, %v3336
    %v3343 = vsel %vm952, %v3320, 0
    %3345 = vmatprep.subr.bf16.mxu0 0
    %3346 = vmatpush1.bf16.msra.mxu0 %v3338
    %3347 = vmatprep.subr.bf16.mxu0 0
    %3348 = vmatpush1.bf16.msra.mxu0 %v3339
    %3349 = vmatprep.subr.bf16.mxu0 0
    %3350 = vmatpush1.bf16.msra.mxu0 0
    %3351 = vmatprep.subr.bf16.mxu0 0
    %3352 = vmatpush1.bf16.msra.mxu0 0
    %3353 = vmatprep.subr.bf16.mxu0 0
    %3354 = vmatpush1.bf16.msra.mxu0 0
    %3355 = vmatprep.subr.bf16.mxu0 0
    %3356 = vmatpush1.bf16.msra.mxu0 0
    %3357 = vmatprep.subr.bf16.mxu0 0
    %3358 = vmatpush1.bf16.msra.mxu0 0
    %3359 = vmatprep.subr.bf16.mxu0 0
    %3360 = vmatpush1.bf16.msra.mxu0 0
    %3361 = vmatprep.subr.bf16.mxu0 0
    %3362 = vmatpush1.bf16.msra.mxu0 0
    %3363 = vmatprep.subr.bf16.mxu0 0
    %3364 = vmatpush1.bf16.msra.mxu0 0
    %3365 = vmatprep.subr.bf16.mxu0 0
    %3366 = vmatpush1.bf16.msra.mxu0 0
    %3367 = vmatprep.subr.bf16.mxu0 0
    %3368 = vmatpush1.bf16.msra.mxu0 0
    %3369 = vmatprep.subr.bf16.mxu0 0
    %3370 = vmatpush1.bf16.msra.mxu0 0
    %3371 = vmatprep.subr.bf16.mxu0 0
    %3372 = vmatpush1.bf16.msra.mxu0 0
    %3373 = vmatprep.subr.bf16.mxu0 0
    %3374 = vmatpush1.bf16.msra.mxu0 0
    %3375 = vmatprep.subr.bf16.mxu0 0
    %3376 = vmatpush1.bf16.msra.mxu0 0
    %3377 = vmatprep.mubr.bf16.mxu0 0
    %3378 = vmatmul.mubr.bf16.gmra.mrb[0].mxu0 %v3343
    %v3379 = vpop.f32.mrb[0].mxu0
    %v3380 = vadd.f32 %v3329, %v3379
    %v3381 = vpop.f32.mrb[0].mxu0
    %v3382 = vpop.f32.mrb[0].mxu0
    %v3383 = vadd.f32 %v3329, %v3382
    %v3384 = vpop.f32.mrb[0].mxu0
    %3385 = vdwg.mxu0
    %v3386 = vadd.f32 %v2842, %v3380
    %v3387 = vadd.f32 %v2843, %v3383
    %v3388 = vsel %vm952, %v3386, 0.0
    %3389 = vadd.xlane.f32.xlu0 %v3388
    %v3390 = vpop.xlane.xlu0 %3389
    %v3391 = vsel %vm952, %v3387, 0.0
    %3392 = vadd.xlane.f32.xlu0 %v3391
    %v3393 = vpop.xlane.xlu0 %3392
    %v3394 = vmul.f32 %v3390, %v1879
    %v3395 = vmul.f32 %v3393, %v1879
    %v3396 = vsub.f32 %v3386, %v3394
    %v3397 = vsub.f32 %v3387, %v3395
    %v3398 = vmul.f32 %v3396, %v3396
    %v3399 = vmul.f32 %v3397, %v3397
    %v3400 = vsel %vm952, %v3398, 0.0
    %3401 = vadd.xlane.f32.xlu0 %v3400
    %v3402 = vpop.xlane.xlu0 %3401
    %v3403 = vsel %vm952, %v3399, 0.0
    %3404 = vadd.xlane.f32.xlu0 %v3403
    %v3405 = vpop.xlane.xlu0 %3404
    %v3406 = vmul.f32 %v3402, %v1879
    %v3407 = vmul.f32 %v3405, %v1879
    %v3408 = vadd.f32 %v3406, 1e-05
    %v3409 = vadd.f32 %v3407, 1e-05
    %v3410 = vrsqrt.pop %v3408
    %v3411 = vrsqrt.pop %v3409
    %v3412 = vmul.f32 %v3396, %v3410
    %v3413 = vmul.f32 %v3397, %v3411
    %v3414 = vlaneseq
    %v3415 = vshrl.u32 %v3414, 7
    %v3416 = vsub.s32 0, %v3415
    %v3417 = vrot.slane %v2848, %v3416
    %v3418 = vmul.f32 %v3412, %v3417
    %v3419 = vmul.f32 %v3413, %v3417
    %v3420 = vlaneseq
    %v3421 = vshrl.u32 %v3420, 7
    %v3422 = vsub.s32 0, %v3421
    %v3423 = vrot.slane %v2849, %v3422
    %v3424 = vadd.f32 %v3418, %v3423
    %v3425 = vadd.f32 %v3419, %v3423
    %v3426 = vpack.c.bf16 %v3425, %v3424
    %s3427 = scalar_lea.vmem [#allocation36], 32
    %v3428 = vld [vmem:[%s3427] sm:$0xf]
    %v3429 = vld [vmem:[%s3427 + $0x4] sm:$0xf]
    %v3430 = vld [vmem:[%s3427 + $0x8] sm:$0xf]
    %v3431 = vld [vmem:[%s3427 + $0xc] sm:$0xf]
    %v3432 = vlaneseq
    %v3433 = vshrl.u32 %v3432, 7
    %v3434 = vsub.s32 0, %v3433
    %v3435 = vrot.slane %v2846, %v3434
    %v3440 = vunpack.c.l.b16 %v3428
    %v3441 = vunpack.c.l.b16 %v3429
    %v3442 = vunpack.c.l.b16 %v3430
    %v3443 = vunpack.c.l.b16 %v3431
    %v3444 = vpack.c.b16 %v3441, %v3440
    %v3445 = vpack.c.b16 %v3443, %v3442
    %v3449 = vsel %vm952, %v3426, 0
    %3451 = vmatprep.subr.bf16.mxu0 0
    %3452 = vmatpush1.bf16.msra.mxu0 %v3444
    %3453 = vmatprep.subr.bf16.mxu0 0
    %3454 = vmatpush1.bf16.msra.mxu0 %v3445
    %3455 = vmatprep.subr.bf16.mxu0 0
    %3456 = vmatpush1.bf16.msra.mxu0 0
    %3457 = vmatprep.subr.bf16.mxu0 0
    %3458 = vmatpush1.bf16.msra.mxu0 0
    %3459 = vmatprep.subr.bf16.mxu0 0
    %3460 = vmatpush1.bf16.msra.mxu0 0
    %3461 = vmatprep.subr.bf16.mxu0 0
    %3462 = vmatpush1.bf16.msra.mxu0 0
    %3463 = vmatprep.subr.bf16.mxu0 0
    %3464 = vmatpush1.bf16.msra.mxu0 0
    %3465 = vmatprep.subr.bf16.mxu0 0
    %3466 = vmatpush1.bf16.msra.mxu0 0
    %3467 = vmatprep.subr.bf16.mxu0 0
    %3468 = vmatpush1.bf16.msra.mxu0 0
    %3469 = vmatprep.subr.bf16.mxu0 0
    %3470 = vmatpush1.bf16.msra.mxu0 0
    %3471 = vmatprep.subr.bf16.mxu0 0
    %3472 = vmatpush1.bf16.msra.mxu0 0
    %3473 = vmatprep.subr.bf16.mxu0 0
    %3474 = vmatpush1.bf16.msra.mxu0 0
    %3475 = vmatprep.subr.bf16.mxu0 0
    %3476 = vmatpush1.bf16.msra.mxu0 0
    %3477 = vmatprep.subr.bf16.mxu0 0
    %3478 = vmatpush1.bf16.msra.mxu0 0
    %3479 = vmatprep.subr.bf16.mxu0 0
    %3480 = vmatpush1.bf16.msra.mxu0 0
    %3481 = vmatprep.subr.bf16.mxu0 0
    %3482 = vmatpush1.bf16.msra.mxu0 0
    %3483 = vmatprep.mubr.bf16.mxu0 0
    %3484 = vmatmul.mubr.bf16.gmra.mrb[0].mxu0 %v3449
    %v3485 = vpop.f32.mrb[0].mxu0
    %v3486 = vadd.f32 %v3435, %v3485
    %v3487 = vpop.f32.mrb[0].mxu0
    %v3488 = vpop.f32.mrb[0].mxu0
    %v3489 = vadd.f32 %v3435, %v3488
    %v3490 = vpop.f32.mrb[0].mxu0
    %3491 = vdwg.mxu0
    %v3492 = vmax.f32 %v3486, 0.0
    %v3493 = vmax.f32 %v3489, 0.0
    %v3494 = vpack.c.bf16 %v3493, %v3492
    %s3495 = scalar_lea.vmem [#allocation38], 32
    %v3496 = vld [vmem:[%s3495] sm:$0xf]
    %v3497 = vld [vmem:[%s3495 + $0x4] sm:$0xf]
    %v3498 = vld [vmem:[%s3495 + $0x8] sm:$0xf]
    %v3499 = vld [vmem:[%s3495 + $0xc] sm:$0xf]
    %v3500 = vlaneseq
    %v3501 = vshrl.u32 %v3500, 7
    %v3502 = vsub.s32 0, %v3501
    %v3503 = vrot.slane %v2847, %v3502
    %v3508 = vunpack.c.l.b16 %v3496
    %v3509 = vunpack.c.l.b16 %v3497
    %v3510 = vunpack.c.l.b16 %v3498
    %v3511 = vunpack.c.l.b16 %v3499
    %v3512 = vpack.c.b16 %v3509, %v3508
    %v3513 = vpack.c.b16 %v3511, %v3510
    %v3517 = vsel %vm952, %v3494, 0
    %3519 = vmatprep.subr.bf16.mxu0 0
    %3520 = vmatpush1.bf16.msra.mxu0 %v3512
    %3521 = vmatprep.subr.bf16.mxu0 0
    %3522 = vmatpush1.bf16.msra.mxu0 %v3513
    %3523 = vmatprep.subr.bf16.mxu0 0
    %3524 = vmatpush1.bf16.msra.mxu0 0
    %3525 = vmatprep.subr.bf16.mxu0 0
    %3526 = vmatpush1.bf16.msra.mxu0 0
    %3527 = vmatprep.subr.bf16.mxu0 0
    %3528 = vmatpush1.bf16.msra.mxu0 0
    %3529 = vmatprep.subr.bf16.mxu0 0
    %3530 = vmatpush1.bf16.msra.mxu0 0
    %3531 = vmatprep.subr.bf16.mxu0 0
    %3532 = vmatpush1.bf16.msra.mxu0 0
    %3533 = vmatprep.subr.bf16.mxu0 0
    %3534 = vmatpush1.bf16.msra.mxu0 0
    %3535 = vmatprep.subr.bf16.mxu0 0
    %3536 = vmatpush1.bf16.msra.mxu0 0
    %3537 = vmatprep.subr.bf16.mxu0 0
    %3538 = vmatpush1.bf16.msra.mxu0 0
    %3539 = vmatprep.subr.bf16.mxu0 0
    %3540 = vmatpush1.bf16.msra.mxu0 0
    %3541 = vmatprep.subr.bf16.mxu0 0
    %3542 = vmatpush1.bf16.msra.mxu0 0
    %3543 = vmatprep.subr.bf16.mxu0 0
    %3544 = vmatpush1.bf16.msra.mxu0 0
    %3545 = vmatprep.subr.bf16.mxu0 0
    %3546 = vmatpush1.bf16.msra.mxu0 0
    %3547 = vmatprep.subr.bf16.mxu0 0
    %3548 = vmatpush1.bf16.msra.mxu0 0
    %3549 = vmatprep.subr.bf16.mxu0 0
    %3550 = vmatpush1.bf16.msra.mxu0 0
    %3551 = vmatprep.mubr.bf16.mxu0 0
    %3552 = vmatmul.mubr.bf16.gmra.mrb[0].mxu0 %v3517
    %v3553 = vpop.f32.mrb[0].mxu0
    %v3554 = vadd.f32 %v3503, %v3553
    %v3555 = vpop.f32.mrb[0].mxu0
    %v3556 = vpop.f32.mrb[0].mxu0
    %v3557 = vadd.f32 %v3503, %v3556
    %v3558 = vpop.f32.mrb[0].mxu0
    %3559 = vdwg.mxu0
    %v3560 = vadd.f32 %v3424, %v3554
    %v3561 = vadd.f32 %v3425, %v3557
    %v3562 = vsel %vm952, %v3560, 0.0
    %3563 = vadd.xlane.f32.xlu0 %v3562
    %v3564 = vpop.xlane.xlu0 %3563
    %v3565 = vsel %vm952, %v3561, 0.0
    %3566 = vadd.xlane.f32.xlu0 %v3565
    %v3567 = vpop.xlane.xlu0 %3566
    %v3568 = vmul.f32 %v3564, %v1879
    %v3569 = vmul.f32 %v3567, %v1879
    %v3570 = vsub.f32 %v3560, %v3568
    %v3571 = vsub.f32 %v3561, %v3569
    %v3572 = vmul.f32 %v3570, %v3570
    %v3573 = vmul.f32 %v3571, %v3571
    %v3574 = vsel %vm952, %v3572, 0.0
    %3575 = vadd.xlane.f32.xlu0 %v3574
    %v3576 = vpop.xlane.xlu0 %3575
    %v3577 = vsel %vm952, %v3573, 0.0
    %3578 = vadd.xlane.f32.xlu0 %v3577
    %v3579 = vpop.xlane.xlu0 %3578
    %v3580 = vmul.f32 %v3576, %v1879
    %v3581 = vmul.f32 %v3579, %v1879
    %v3582 = vadd.f32 %v3580, 1e-05
    %v3583 = vadd.f32 %v3581, 1e-05
    %v3584 = vrsqrt.pop %v3582
    %v3585 = vrsqrt.pop %v3583
    %v3586 = vmul.f32 %v3570, %v3584
    %v3587 = vmul.f32 %v3571, %v3585
    %v3588 = vlaneseq
    %v3589 = vshrl.u32 %v3588, 7
    %v3590 = vsub.s32 0, %v3589
    %v3591 = vrot.slane %v2850, %v3590
    %v3592 = vmul.f32 %v3586, %v3591
    %v3593 = vmul.f32 %v3587, %v3591
    %v3594 = vlaneseq
    %v3595 = vshrl.u32 %v3594, 7
    %v3596 = vsub.s32 0, %v3595
    %v3597 = vrot.slane %v2851, %v3596
    %v3598 = vadd.f32 %v3592, %v3597
    %v3599 = vadd.f32 %v3593, %v3597
    %v3600 = vld [vmem:[#allocation39 + $0x18] sm:$0x1]
    %v3601 = vld [vmem:[#allocation39 + $0x19] sm:$0x1]
    %v3602 = vld [vmem:[#allocation39 + $0x1a] sm:$0x1]
    %v3603 = vld [vmem:[#allocation39 + $0x1b] sm:$0x1]
    %v3604 = vld [vmem:[#allocation39 + $0x1c] sm:$0x1]
    %v3605 = vld [vmem:[#allocation39 + $0x1d] sm:$0x1]
    %v3606 = vld [vmem:[#allocation39 + $0x1e] sm:$0x1]
    %v3607 = vld [vmem:[#allocation39 + $0x1f] sm:$0x1]
    %v3608 = vpack.c.bf16 %v3599, %v3598
    %s3609 = scalar_lea.vmem [#allocation27], 48
    %v3610 = vld [vmem:[%s3609] sm:$0xf]
    %v3611 = vld [vmem:[%s3609 + $0x4] sm:$0xf]
    %v3612 = vld [vmem:[%s3609 + $0x8] sm:$0xf]
    %v3613 = vld [vmem:[%s3609 + $0xc] sm:$0xf]
    %v3614 = vlaneseq
    %v3615 = vshrl.u32 %v3614, 7
    %v3616 = vsub.s32 0, %v3615
    %v3617 = vrot.slane %v3600, %v3616
    %v3622 = vunpack.c.l.b16 %v3610
    %v3623 = vunpack.c.l.b16 %v3611
    %v3624 = vunpack.c.l.b16 %v3612
    %v3625 = vunpack.c.l.b16 %v3613
    %v3626 = vpack.c.b16 %v3623, %v3622
    %v3627 = vpack.c.b16 %v3625, %v3624
    %v3631 = vsel %vm952, %v3608, 0
    %3633 = vmatprep.subr.bf16.mxu0 0
    %3634 = vmatpush1.bf16.msra.mxu0 %v3626
    %3635 = vmatprep.subr.bf16.mxu0 0
    %3636 = vmatpush1.bf16.msra.mxu0 %v3627
    %3637 = vmatprep.subr.bf16.mxu0 0
    %3638 = vmatpush1.bf16.msra.mxu0 0
    %3639 = vmatprep.subr.bf16.mxu0 0
    %3640 = vmatpush1.bf16.msra.mxu0 0
    %3641 = vmatprep.subr.bf16.mxu0 0
    %3642 = vmatpush1.bf16.msra.mxu0 0
    %3643 = vmatprep.subr.bf16.mxu0 0
    %3644 = vmatpush1.bf16.msra.mxu0 0
    %3645 = vmatprep.subr.bf16.mxu0 0
    %3646 = vmatpush1.bf16.msra.mxu0 0
    %3647 = vmatprep.subr.bf16.mxu0 0
    %3648 = vmatpush1.bf16.msra.mxu0 0
    %3649 = vmatprep.subr.bf16.mxu0 0
    %3650 = vmatpush1.bf16.msra.mxu0 0
    %3651 = vmatprep.subr.bf16.mxu0 0
    %3652 = vmatpush1.bf16.msra.mxu0 0
    %3653 = vmatprep.subr.bf16.mxu0 0
    %3654 = vmatpush1.bf16.msra.mxu0 0
    %3655 = vmatprep.subr.bf16.mxu0 0
    %3656 = vmatpush1.bf16.msra.mxu0 0
    %3657 = vmatprep.subr.bf16.mxu0 0
    %3658 = vmatpush1.bf16.msra.mxu0 0
    %3659 = vmatprep.subr.bf16.mxu0 0
    %3660 = vmatpush1.bf16.msra.mxu0 0
    %3661 = vmatprep.subr.bf16.mxu0 0
    %3662 = vmatpush1.bf16.msra.mxu0 0
    %3663 = vmatprep.subr.bf16.mxu0 0
    %3664 = vmatpush1.bf16.msra.mxu0 0
    %3665 = vmatprep.mubr.bf16.mxu0 0
    %3666 = vmatmul.mubr.bf16.gmra.mrb[0].mxu0 %v3631
    %v3667 = vpop.f32.mrb[0].mxu0
    %v3668 = vadd.f32 %v3617, %v3667
    %v3669 = vpop.f32.mrb[0].mxu0
    %v3670 = vpop.f32.mrb[0].mxu0
    %v3671 = vadd.f32 %v3617, %v3670
    %v3672 = vpop.f32.mrb[0].mxu0
    %3673 = vdwg.mxu0
    %v3674 = vpack.c.bf16 %v3668, %v3668
    %v3675 = vpack.c.bf16 %v3671, %v3671
    %3676 = vrot.lane.b32.xlu0 %v1420, 96
    %v3677 = vpop.permute.xlu0 %3676
    %v3679 = vmul.bf16 %v1410, %v3677
    %v3680 = vmul.bf16 %v1411, %v3677
    %3681 = vrot.lane.b32.xlu0 %v1429, 96
    %v3682 = vpop.permute.xlu0 %3681
    %v3684 = vmul.bf16 %v1410, %v3682
    %v3685 = vmul.bf16 %v1411, %v3682
    %3686 = vrot.lane.b32.xlu0 %v1435, 96
    %v3687 = vpop.permute.xlu0 %3686
    %v3689 = vmul.bf16 %v1410, %v3687
    %v3690 = vmul.bf16 %v1411, %v3687
    %3691 = vrot.lane.b32.xlu0 %v1441, 96
    %v3692 = vpop.permute.xlu0 %3691
    %v3694 = vmul.bf16 %v1410, %v3692
    %v3695 = vmul.bf16 %v1411, %v3692
    %v3698 = vrot.slane %v3684, 4
    %v3699 = vrot.slane %v3685, 4
    %v3702 = vrot.slane %v3694, 4
    %v3703 = vrot.slane %v3695, 4
    %v3706 = vsel %vm883, %v3679, %v3698
    %v3709 = vsel %vm883, %v3680, %v3699
    %v3712 = vsel %vm883, %v3689, %v3702
    %v3715 = vsel %vm883, %v3690, %v3703
    %v3716 = vmul.bf16 %v1412, %v3677
    %v3717 = vmul.bf16 %v1413, %v3677
    %v3718 = vmul.bf16 %v1412, %v3682
    %v3719 = vmul.bf16 %v1413, %v3682
    %v3720 = vmul.bf16 %v1412, %v3687
    %v3721 = vmul.bf16 %v1413, %v3687
    %v3722 = vmul.bf16 %v1412, %v3692
    %v3723 = vmul.bf16 %v1413, %v3692
    %v3726 = vrot.slane %v3718, 4
    %v3727 = vrot.slane %v3719, 4
    %v3730 = vrot.slane %v3722, 4
    %v3731 = vrot.slane %v3723, 4
    %v3734 = vsel %vm883, %v3716, %v3726
    %v3737 = vsel %vm883, %v3717, %v3727
    %v3740 = vsel %vm883, %v3720, %v3730
    %v3743 = vsel %vm883, %v3721, %v3731
    %3746 = vrot.lane.b32.xlu0 %v3706, 32
    %v3747 = vpop.permute.xlu0 %3746
    %3748 = vrot.lane.b32.xlu0 %v3712, 32
    %v3749 = vpop.permute.xlu0 %3748
    %v3751 = vsel %vm952, %v3674, 0
    %v3754 = vsel %vm952, %v3747, 0
    %v3757 = vsel %vm952, %v3749, 0
    %3759 = vmatprep.subr.bf16.mxu0 0
    %3760 = vmatpush1.bf16.xpose.msra.mxu0 %v3754
    %3761 = vmatprep.subr.bf16.mxu0 0
    %3762 = vmatpush1.bf16.xpose.msra.mxu0 %v3757
    %3763 = vmatprep.subr.bf16.mxu0 0
    %3764 = vmatpush1.bf16.xpose.msra.mxu0 0
    %3765 = vmatprep.subr.bf16.mxu0 0
    %3766 = vmatpush1.bf16.xpose.msra.mxu0 0
    %3767 = vmatprep.subr.bf16.mxu0 0
    %3768 = vmatpush1.bf16.xpose.msra.mxu0 0
    %3769 = vmatprep.subr.bf16.mxu0 0
    %3770 = vmatpush1.bf16.xpose.msra.mxu0 0
    %3771 = vmatprep.subr.bf16.mxu0 0
    %3772 = vmatpush1.bf16.xpose.msra.mxu0 0
    %3773 = vmatprep.subr.bf16.mxu0 0
    %3774 = vmatpush1.bf16.xpose.msra.mxu0 0
    %3775 = vmatprep.subr.bf16.mxu0 0
    %3776 = vmatpush1.bf16.xpose.msra.mxu0 0
    %3777 = vmatprep.subr.bf16.mxu0 0
    %3778 = vmatpush1.bf16.xpose.msra.mxu0 0
    %3779 = vmatprep.subr.bf16.mxu0 0
    %3780 = vmatpush1.bf16.xpose.msra.mxu0 0
    %3781 = vmatprep.subr.bf16.mxu0 0
    %3782 = vmatpush1.bf16.xpose.msra.mxu0 0
    %3783 = vmatprep.subr.bf16.mxu0 0
    %3784 = vmatpush1.bf16.xpose.msra.mxu0 0
    %3785 = vmatprep.subr.bf16.mxu0 0
    %3786 = vmatpush1.bf16.xpose.msra.mxu0 0
    %3787 = vmatprep.subr.bf16.mxu0 0
    %3788 = vmatpush1.bf16.xpose.msra.mxu0 0
    %3789 = vmatprep.subr.bf16.mxu0 0
    %3790 = vmatpush1.bf16.xpose.msra.mxu0 0
    %3791 = vmatprep.mubr.bf16.mxu0 0
    %3792 = vmatmul.mubr.bf16.gmra.mrb[0].mxu0 %v3751
    %v3793 = vpop.f32.mrb[0].mxu0
    %v3794 = vadd.f32 %v1500, %v3793
    %v3795 = vpop.f32.mrb[0].mxu0
    %v3796 = vpop.f32.mrb[0].mxu0
    %v3797 = vpop.f32.mrb[0].mxu0
    %3798 = vdwg.mxu0
    %3801 = vrot.lane.b32.xlu0 %v3709, 32
    %v3802 = vpop.permute.xlu0 %3801
    %3803 = vrot.lane.b32.xlu0 %v3715, 32
    %v3804 = vpop.permute.xlu0 %3803
    %v3806 = vsel %vm952, %v3675, 0
    %v3809 = vsel %vm952, %v3802, 0
    %v3812 = vsel %vm952, %v3804, 0
    %3814 = vmatprep.subr.bf16.mxu0 0
    %3815 = vmatpush1.bf16.xpose.msra.mxu0 %v3809
    %3816 = vmatprep.subr.bf16.mxu0 0
    %3817 = vmatpush1.bf16.xpose.msra.mxu0 %v3812
    %3818 = vmatprep.subr.bf16.mxu0 0
    %3819 = vmatpush1.bf16.xpose.msra.mxu0 0
    %3820 = vmatprep.subr.bf16.mxu0 0
    %3821 = vmatpush1.bf16.xpose.msra.mxu0 0
    %3822 = vmatprep.subr.bf16.mxu0 0
    %3823 = vmatpush1.bf16.xpose.msra.mxu0 0
    %3824 = vmatprep.subr.bf16.mxu0 0
    %3825 = vmatpush1.bf16.xpose.msra.mxu0 0
    %3826 = vmatprep.subr.bf16.mxu0 0
    %3827 = vmatpush1.bf16.xpose.msra.mxu0 0
    %3828 = vmatprep.subr.bf16.mxu0 0
    %3829 = vmatpush1.bf16.xpose.msra.mxu0 0
    %3830 = vmatprep.subr.bf16.mxu0 0
    %3831 = vmatpush1.bf16.xpose.msra.mxu0 0
    %3832 = vmatprep.subr.bf16.mxu0 0
    %3833 = vmatpush1.bf16.xpose.msra.mxu0 0
    %3834 = vmatprep.subr.bf16.mxu0 0
    %3835 = vmatpush1.bf16.xpose.msra.mxu0 0
    %3836 = vmatprep.subr.bf16.mxu0 0
    %3837 = vmatpush1.bf16.xpose.msra.mxu0 0
    %3838 = vmatprep.subr.bf16.mxu0 0
    %3839 = vmatpush1.bf16.xpose.msra.mxu0 0
    %3840 = vmatprep.subr.bf16.mxu0 0
    %3841 = vmatpush1.bf16.xpose.msra.mxu0 0
    %3842 = vmatprep.subr.bf16.mxu0 0
    %3843 = vmatpush1.bf16.xpose.msra.mxu0 0
    %3844 = vmatprep.subr.bf16.mxu0 0
    %3845 = vmatpush1.bf16.xpose.msra.mxu0 0
    %3846 = vmatprep.mubr.bf16.mxu0 0
    %3847 = vmatmul.mubr.bf16.gmra.mrb[0].mxu0 %v3806
    %v3848 = vpop.f32.mrb[0].mxu0
    %v3849 = vadd.f32 %v1500, %v3848
    %v3850 = vpop.f32.mrb[0].mxu0
    %v3851 = vpop.f32.mrb[0].mxu0
    %v3852 = vpop.f32.mrb[0].mxu0
    %3853 = vdwg.mxu0
    %v3854 = vsel %vm879, %v3794, -inf
    %3855 = vmax.xlane.f32.xlu0 %v3854
    %v3856 = vpop.xlane.xlu0 %3855
    %v3857 = vsel %vm879, %v3849, -inf
    %3858 = vmax.xlane.f32.xlu0 %v3857
    %v3859 = vpop.xlane.xlu0 %3858
    %v3860 = vsub.f32 %v3794, %v3856
    %v3861 = vsub.f32 %v3849, %v3859
    %v3862 = vmul.f32 %v3860, 1.442695
    %v3863 = vpow.pop %v3862
    %v3864 = vmul.f32 %v3861, 1.442695
    %v3865 = vpow.pop %v3864
    %v3866 = vsel %vm879, %v3863, 0.0
    %3867 = vadd.xlane.f32.xlu0 %v3866
    %v3868 = vpop.xlane.xlu0 %3867
    %v3869 = vsel %vm879, %v3865, 0.0
    %3870 = vadd.xlane.f32.xlu0 %v3869
    %v3871 = vpop.xlane.xlu0 %3870
    %v3872 = vrcp.pop %v3868
    %v3873 = vmul.f32 %v3863, %v3872
    %v3874 = vrcp.pop %v3871
    %v3875 = vmul.f32 %v3865, %v3874
    %v3876 = vsel %vm1618, %v3794, -inf
    %3877 = vmax.xlane.f32.xlu0 %v3876
    %v3878 = vpop.xlane.xlu0 %3877
    %v3879 = vsel %vm1618, %v3849, -inf
    %3880 = vmax.xlane.f32.xlu0 %v3879
    %v3881 = vpop.xlane.xlu0 %3880
    %v3882 = vsub.f32 %v3794, %v3878
    %v3883 = vsub.f32 %v3849, %v3881
    %v3884 = vmul.f32 %v3882, 1.442695
    %v3885 = vpow.pop %v3884
    %v3886 = vmul.f32 %v3883, 1.442695
    %v3887 = vpow.pop %v3886
    %3890 = vrot.lane.b32.xlu0 %v3885, 120
    %v3891 = vpop.permute.xlu0 %3890
    %3892 = vrot.lane.b32.xlu0 %v3887, 120
    %v3893 = vpop.permute.xlu0 %3892
    %v3896 = vsel %vm879, %v3891, 0.0
    %3897 = vadd.xlane.f32.xlu0 %v3896
    %v3898 = vpop.xlane.xlu0 %3897
    %v3899 = vsel %vm879, %v3893, 0.0
    %3900 = vadd.xlane.f32.xlu0 %v3899
    %v3901 = vpop.xlane.xlu0 %3900
    %v3902 = vrcp.pop %v3898
    %v3903 = vmul.f32 %v3885, %v3902
    %v3904 = vrcp.pop %v3901
    %v3905 = vmul.f32 %v3887, %v3904
    %v3906 = vsel %vm1649, %v3794, -inf
    %3907 = vmax.xlane.f32.xlu0 %v3906
    %v3908 = vpop.xlane.xlu0 %3907
    %v3909 = vsel %vm1649, %v3849, -inf
    %3910 = vmax.xlane.f32.xlu0 %v3909
    %v3911 = vpop.xlane.xlu0 %3910
    %v3912 = vsub.f32 %v3794, %v3908
    %v3913 = vsub.f32 %v3849, %v3911
    %v3914 = vmul.f32 %v3912, 1.442695
    %v3915 = vpow.pop %v3914
    %v3916 = vmul.f32 %v3913, 1.442695
    %v3917 = vpow.pop %v3916
    %3920 = vrot.lane.b32.xlu0 %v3915, 112
    %v3921 = vpop.permute.xlu0 %3920
    %3922 = vrot.lane.b32.xlu0 %v3917, 112
    %v3923 = vpop.permute.xlu0 %3922
    %v3926 = vsel %vm879, %v3921, 0.0
    %3927 = vadd.xlane.f32.xlu0 %v3926
    %v3928 = vpop.xlane.xlu0 %3927
    %v3929 = vsel %vm879, %v3923, 0.0
    %3930 = vadd.xlane.f32.xlu0 %v3929
    %v3931 = vpop.xlane.xlu0 %3930
    %v3932 = vrcp.pop %v3928
    %v3933 = vmul.f32 %v3915, %v3932
    %v3934 = vrcp.pop %v3931
    %v3935 = vmul.f32 %v3917, %v3934
    %v3936 = vsel %vm1680, %v3794, -inf
    %3937 = vmax.xlane.f32.xlu0 %v3936
    %v3938 = vpop.xlane.xlu0 %3937
    %v3939 = vsel %vm1680, %v3849, -inf
    %3940 = vmax.xlane.f32.xlu0 %v3939
    %v3941 = vpop.xlane.xlu0 %3940
    %v3942 = vsub.f32 %v3794, %v3938
    %v3943 = vsub.f32 %v3849, %v3941
    %v3944 = vmul.f32 %v3942, 1.442695
    %v3945 = vpow.pop %v3944
    %v3946 = vmul.f32 %v3943, 1.442695
    %v3947 = vpow.pop %v3946
    %3950 = vrot.lane.b32.xlu0 %v3945, 104
    %v3951 = vpop.permute.xlu0 %3950
    %3952 = vrot.lane.b32.xlu0 %v3947, 104
    %v3953 = vpop.permute.xlu0 %3952
    %v3956 = vsel %vm879, %v3951, 0.0
    %3957 = vadd.xlane.f32.xlu0 %v3956
    %v3958 = vpop.xlane.xlu0 %3957
    %v3959 = vsel %vm879, %v3953, 0.0
    %3960 = vadd.xlane.f32.xlu0 %v3959
    %v3961 = vpop.xlane.xlu0 %3960
    %v3962 = vrcp.pop %v3958
    %v3963 = vmul.f32 %v3945, %v3962
    %v3964 = vrcp.pop %v3961
    %v3965 = vmul.f32 %v3947, %v3964
    %v3966 = vsel %vm879, %v3873, %v3903
    %v3967 = vsel %vm879, %v3875, %v3905
    %v3968 = vsel %vm845, %v3966, %v3933
    %v3969 = vsel %vm845, %v3967, %v3935
    %v3970 = vsel %vm1715, %v3968, %v3963
    %v3971 = vsel %vm1715, %v3969, %v3965
    %v3972 = vpack.c.bf16 %v3970, %v3970
    %v3973 = vpack.c.bf16 %v3971, %v3971
    %3976 = vrot.lane.b32.xlu0 %v3734, 32
    %v3977 = vpop.permute.xlu0 %3976
    %3978 = vrot.lane.b32.xlu0 %v3740, 32
    %v3979 = vpop.permute.xlu0 %3978
    %v3983 = vsel %vm952, %v3972, 0
    %3985 = vmatprep.subr.bf16.mxu0 0
    %3986 = vmatpush1.bf16.msra.mxu0 %v3977
    %3987 = vmatprep.subr.bf16.mxu0 0
    %3988 = vmatpush1.bf16.msra.mxu0 %v3979
    %3989 = vmatprep.subr.bf16.mxu0 0
    %3990 = vmatpush1.bf16.msra.mxu0 0
    %3991 = vmatprep.subr.bf16.mxu0 0
    %3992 = vmatpush1.bf16.msra.mxu0 0
    %3993 = vmatprep.subr.bf16.mxu0 0
    %3994 = vmatpush1.bf16.msra.mxu0 0
    %3995 = vmatprep.subr.bf16.mxu0 0
    %3996 = vmatpush1.bf16.msra.mxu0 0
    %3997 = vmatprep.subr.bf16.mxu0 0
    %3998 = vmatpush1.bf16.msra.mxu0 0
    %3999 = vmatprep.subr.bf16.mxu0 0
    %4000 = vmatpush1.bf16.msra.mxu0 0
    %4001 = vmatprep.subr.bf16.mxu0 0
    %4002 = vmatpush1.bf16.msra.mxu0 0
    %4003 = vmatprep.subr.bf16.mxu0 0
    %4004 = vmatpush1.bf16.msra.mxu0 0
    %4005 = vmatprep.subr.bf16.mxu0 0
    %4006 = vmatpush1.bf16.msra.mxu0 0
    %4007 = vmatprep.subr.bf16.mxu0 0
    %4008 = vmatpush1.bf16.msra.mxu0 0
    %4009 = vmatprep.subr.bf16.mxu0 0
    %4010 = vmatpush1.bf16.msra.mxu0 0
    %4011 = vmatprep.subr.bf16.mxu0 0
    %4012 = vmatpush1.bf16.msra.mxu0 0
    %4013 = vmatprep.subr.bf16.mxu0 0
    %4014 = vmatpush1.bf16.msra.mxu0 0
    %4015 = vmatprep.subr.bf16.mxu0 0
    %4016 = vmatpush1.bf16.msra.mxu0 0
    %4017 = vmatprep.mubr.bf16.mxu0 0
    %4018 = vmatmul.mubr.bf16.gmra.mrb[0].mxu0 %v3983
    %v4019 = vpop.f32.mrb[0].mxu0
    %v4020 = vadd.f32 0.0, %v4019
    %v4021 = vpop.f32.mrb[0].mxu0
    %v4022 = vpop.f32.mrb[0].mxu0
    %v4023 = vpop.f32.mrb[0].mxu0
    %4024 = vdwg.mxu0
    %4027 = vrot.lane.b32.xlu0 %v3737, 32
    %v4028 = vpop.permute.xlu0 %4027
    %4029 = vrot.lane.b32.xlu0 %v3743, 32
    %v4030 = vpop.permute.xlu0 %4029
    %v4034 = vsel %vm952, %v3973, 0
    %4036 = vmatprep.subr.bf16.mxu0 0
    %4037 = vmatpush1.bf16.msra.mxu0 %v4028
    %4038 = vmatprep.subr.bf16.mxu0 0
    %4039 = vmatpush1.bf16.msra.mxu0 %v4030
    %4040 = vmatprep.subr.bf16.mxu0 0
    %4041 = vmatpush1.bf16.msra.mxu0 0
    %4042 = vmatprep.subr.bf16.mxu0 0
    %4043 = vmatpush1.bf16.msra.mxu0 0
    %4044 = vmatprep.subr.bf16.mxu0 0
    %4045 = vmatpush1.bf16.msra.mxu0 0
    %4046 = vmatprep.subr.bf16.mxu0 0
    %4047 = vmatpush1.bf16.msra.mxu0 0
    %4048 = vmatprep.subr.bf16.mxu0 0
    %4049 = vmatpush1.bf16.msra.mxu0 0
    %4050 = vmatprep.subr.bf16.mxu0 0
    %4051 = vmatpush1.bf16.msra.mxu0 0
    %4052 = vmatprep.subr.bf16.mxu0 0
    %4053 = vmatpush1.bf16.msra.mxu0 0
    %4054 = vmatprep.subr.bf16.mxu0 0
    %4055 = vmatpush1.bf16.msra.mxu0 0
    %4056 = vmatprep.subr.bf16.mxu0 0
    %4057 = vmatpush1.bf16.msra.mxu0 0
    %4058 = vmatprep.subr.bf16.mxu0 0
    %4059 = vmatpush1.bf16.msra.mxu0 0
    %4060 = vmatprep.subr.bf16.mxu0 0
    %4061 = vmatpush1.bf16.msra.mxu0 0
    %4062 = vmatprep.subr.bf16.mxu0 0
    %4063 = vmatpush1.bf16.msra.mxu0 0
    %4064 = vmatprep.subr.bf16.mxu0 0
    %4065 = vmatpush1.bf16.msra.mxu0 0
    %4066 = vmatprep.subr.bf16.mxu0 0
    %4067 = vmatpush1.bf16.msra.mxu0 0
    %4068 = vmatprep.mubr.bf16.mxu0 0
    %4069 = vmatmul.mubr.bf16.gmra.mrb[0].mxu0 %v4034
    %v4070 = vpop.f32.mrb[0].mxu0
    %v4071 = vadd.f32 0.0, %v4070
    %v4072 = vpop.f32.mrb[0].mxu0
    %v4073 = vpop.f32.mrb[0].mxu0
    %v4074 = vpop.f32.mrb[0].mxu0
    %4075 = vdwg.mxu0
    %v4076 = vpack.c.bf16 %v4071, %v4020
    %s4077 = scalar_lea.vmem [#allocation35], 48
    %v4078 = vld [vmem:[%s4077] sm:$0xf]
    %v4079 = vld [vmem:[%s4077 + $0x4] sm:$0xf]
    %v4080 = vld [vmem:[%s4077 + $0x8] sm:$0xf]
    %v4081 = vld [vmem:[%s4077 + $0xc] sm:$0xf]
    %v4082 = vlaneseq
    %v4083 = vshrl.u32 %v4082, 7
    %v4084 = vsub.s32 0, %v4083
    %v4085 = vrot.slane %v3601, %v4084
    %v4090 = vunpack.c.l.b16 %v4078
    %v4091 = vunpack.c.l.b16 %v4079
    %v4092 = vunpack.c.l.b16 %v4080
    %v4093 = vunpack.c.l.b16 %v4081
    %v4094 = vpack.c.b16 %v4091, %v4090
    %v4095 = vpack.c.b16 %v4093, %v4092
    %v4099 = vsel %vm952, %v4076, 0
    %4101 = vmatprep.subr.bf16.mxu0 0
    %4102 = vmatpush1.bf16.msra.mxu0 %v4094
    %4103 = vmatprep.subr.bf16.mxu0 0
    %4104 = vmatpush1.bf16.msra.mxu0 %v4095
    %4105 = vmatprep.subr.bf16.mxu0 0
    %4106 = vmatpush1.bf16.msra.mxu0 0
    %4107 = vmatprep.subr.bf16.mxu0 0
    %4108 = vmatpush1.bf16.msra.mxu0 0
    %4109 = vmatprep.subr.bf16.mxu0 0
    %4110 = vmatpush1.bf16.msra.mxu0 0
    %4111 = vmatprep.subr.bf16.mxu0 0
    %4112 = vmatpush1.bf16.msra.mxu0 0
    %4113 = vmatprep.subr.bf16.mxu0 0
    %4114 = vmatpush1.bf16.msra.mxu0 0
    %4115 = vmatprep.subr.bf16.mxu0 0
    %4116 = vmatpush1.bf16.msra.mxu0 0
    %4117 = vmatprep.subr.bf16.mxu0 0
    %4118 = vmatpush1.bf16.msra.mxu0 0
    %4119 = vmatprep.subr.bf16.mxu0 0
    %4120 = vmatpush1.bf16.msra.mxu0 0
    %4121 = vmatprep.subr.bf16.mxu0 0
    %4122 = vmatpush1.bf16.msra.mxu0 0
    %4123 = vmatprep.subr.bf16.mxu0 0
    %4124 = vmatpush1.bf16.msra.mxu0 0
    %4125 = vmatprep.subr.bf16.mxu0 0
    %4126 = vmatpush1.bf16.msra.mxu0 0
    %4127 = vmatprep.subr.bf16.mxu0 0
    %4128 = vmatpush1.bf16.msra.mxu0 0
    %4129 = vmatprep.subr.bf16.mxu0 0
    %4130 = vmatpush1.bf16.msra.mxu0 0
    %4131 = vmatprep.subr.bf16.mxu0 0
    %4132 = vmatpush1.bf16.msra.mxu0 0
    %4133 = vmatprep.mubr.bf16.mxu0 0
    %4134 = vmatmul.mubr.bf16.gmra.mrb[0].mxu0 %v4099
    %v4135 = vpop.f32.mrb[0].mxu0
    %v4136 = vadd.f32 %v4085, %v4135
    %v4137 = vpop.f32.mrb[0].mxu0
    %v4138 = vpop.f32.mrb[0].mxu0
    %v4139 = vadd.f32 %v4085, %v4138
    %v4140 = vpop.f32.mrb[0].mxu0
    %4141 = vdwg.mxu0
    %v4142 = vadd.f32 %v3598, %v4136
    %v4143 = vadd.f32 %v3599, %v4139
    %v4144 = vsel %vm952, %v4142, 0.0
    %4145 = vadd.xlane.f32.xlu0 %v4144
    %v4146 = vpop.xlane.xlu0 %4145
    %v4147 = vsel %vm952, %v4143, 0.0
    %4148 = vadd.xlane.f32.xlu0 %v4147
    %v4149 = vpop.xlane.xlu0 %4148
    %v4150 = vmul.f32 %v4146, %v1879
    %v4151 = vmul.f32 %v4149, %v1879
    %v4152 = vsub.f32 %v4142, %v4150
    %v4153 = vsub.f32 %v4143, %v4151
    %v4154 = vmul.f32 %v4152, %v4152
    %v4155 = vmul.f32 %v4153, %v4153
    %v4156 = vsel %vm952, %v4154, 0.0
    %4157 = vadd.xlane.f32.xlu0 %v4156
    %v4158 = vpop.xlane.xlu0 %4157
    %v4159 = vsel %vm952, %v4155, 0.0
    %4160 = vadd.xlane.f32.xlu0 %v4159
    %v4161 = vpop.xlane.xlu0 %4160
    %v4162 = vmul.f32 %v4158, %v1879
    %v4163 = vmul.f32 %v4161, %v1879
    %v4164 = vadd.f32 %v4162, 1e-05
    %v4165 = vadd.f32 %v4163, 1e-05
    %v4166 = vrsqrt.pop %v4164
    %v4167 = vrsqrt.pop %v4165
    %v4168 = vmul.f32 %v4152, %v4166
    %v4169 = vmul.f32 %v4153, %v4167
    %v4170 = vlaneseq
    %v4171 = vshrl.u32 %v4170, 7
    %v4172 = vsub.s32 0, %v4171
    %v4173 = vrot.slane %v3604, %v4172
    %v4174 = vmul.f32 %v4168, %v4173
    %v4175 = vmul.f32 %v4169, %v4173
    %v4176 = vlaneseq
    %v4177 = vshrl.u32 %v4176, 7
    %v4178 = vsub.s32 0, %v4177
    %v4179 = vrot.slane %v3605, %v4178
    %v4180 = vadd.f32 %v4174, %v4179
    %v4181 = vadd.f32 %v4175, %v4179
    %v4182 = vpack.c.bf16 %v4181, %v4180
    %s4183 = scalar_lea.vmem [#allocation36], 48
    %v4184 = vld [vmem:[%s4183] sm:$0xf]
    %v4185 = vld [vmem:[%s4183 + $0x4] sm:$0xf]
    %v4186 = vld [vmem:[%s4183 + $0x8] sm:$0xf]
    %v4187 = vld [vmem:[%s4183 + $0xc] sm:$0xf]
    %v4188 = vlaneseq
    %v4189 = vshrl.u32 %v4188, 7
    %v4190 = vsub.s32 0, %v4189
    %v4191 = vrot.slane %v3602, %v4190
    %v4196 = vunpack.c.l.b16 %v4184
    %v4197 = vunpack.c.l.b16 %v4185
    %v4198 = vunpack.c.l.b16 %v4186
    %v4199 = vunpack.c.l.b16 %v4187
    %v4200 = vpack.c.b16 %v4197, %v4196
    %v4201 = vpack.c.b16 %v4199, %v4198
    %v4205 = vsel %vm952, %v4182, 0
    %4207 = vmatprep.subr.bf16.mxu0 0
    %4208 = vmatpush1.bf16.msra.mxu0 %v4200
    %4209 = vmatprep.subr.bf16.mxu0 0
    %4210 = vmatpush1.bf16.msra.mxu0 %v4201
    %4211 = vmatprep.subr.bf16.mxu0 0
    %4212 = vmatpush1.bf16.msra.mxu0 0
    %4213 = vmatprep.subr.bf16.mxu0 0
    %4214 = vmatpush1.bf16.msra.mxu0 0
    %4215 = vmatprep.subr.bf16.mxu0 0
    %4216 = vmatpush1.bf16.msra.mxu0 0
    %4217 = vmatprep.subr.bf16.mxu0 0
    %4218 = vmatpush1.bf16.msra.mxu0 0
    %4219 = vmatprep.subr.bf16.mxu0 0
    %4220 = vmatpush1.bf16.msra.mxu0 0
    %4221 = vmatprep.subr.bf16.mxu0 0
    %4222 = vmatpush1.bf16.msra.mxu0 0
    %4223 = vmatprep.subr.bf16.mxu0 0
    %4224 = vmatpush1.bf16.msra.mxu0 0
    %4225 = vmatprep.subr.bf16.mxu0 0
    %4226 = vmatpush1.bf16.msra.mxu0 0
    %4227 = vmatprep.subr.bf16.mxu0 0
    %4228 = vmatpush1.bf16.msra.mxu0 0
    %4229 = vmatprep.subr.bf16.mxu0 0
    %4230 = vmatpush1.bf16.msra.mxu0 0
    %4231 = vmatprep.subr.bf16.mxu0 0
    %4232 = vmatpush1.bf16.msra.mxu0 0
    %4233 = vmatprep.subr.bf16.mxu0 0
    %4234 = vmatpush1.bf16.msra.mxu0 0
    %4235 = vmatprep.subr.bf16.mxu0 0
    %4236 = vmatpush1.bf16.msra.mxu0 0
    %4237 = vmatprep.subr.bf16.mxu0 0
    %4238 = vmatpush1.bf16.msra.mxu0 0
    %4239 = vmatprep.mubr.bf16.mxu0 0
    %4240 = vmatmul.mubr.bf16.gmra.mrb[0].mxu0 %v4205
    %v4241 = vpop.f32.mrb[0].mxu0
    %v4242 = vadd.f32 %v4191, %v4241
    %v4243 = vpop.f32.mrb[0].mxu0
    %v4244 = vpop.f32.mrb[0].mxu0
    %v4245 = vadd.f32 %v4191, %v4244
    %v4246 = vpop.f32.mrb[0].mxu0
    %4247 = vdwg.mxu0
    %v4248 = vmax.f32 %v4242, 0.0
    %v4249 = vmax.f32 %v4245, 0.0
    %v4250 = vpack.c.bf16 %v4249, %v4248
    %s4251 = scalar_lea.vmem [#allocation38], 48
    %v4252 = vld [vmem:[%s4251] sm:$0xf]
    %v4253 = vld [vmem:[%s4251 + $0x4] sm:$0xf]
    %v4254 = vld [vmem:[%s4251 + $0x8] sm:$0xf]
    %v4255 = vld [vmem:[%s4251 + $0xc] sm:$0xf]
    %v4256 = vlaneseq
    %v4257 = vshrl.u32 %v4256, 7
    %v4258 = vsub.s32 0, %v4257
    %v4259 = vrot.slane %v3603, %v4258
    %v4264 = vunpack.c.l.b16 %v4252
    %v4265 = vunpack.c.l.b16 %v4253
    %v4266 = vunpack.c.l.b16 %v4254
    %v4267 = vunpack.c.l.b16 %v4255
    %v4268 = vpack.c.b16 %v4265, %v4264
    %v4269 = vpack.c.b16 %v4267, %v4266
    %v4273 = vsel %vm952, %v4250, 0
    %4275 = vmatprep.subr.bf16.mxu0 0
    %4276 = vmatpush1.bf16.msra.mxu0 %v4268
    %4277 = vmatprep.subr.bf16.mxu0 0
    %4278 = vmatpush1.bf16.msra.mxu0 %v4269
    %4279 = vmatprep.subr.bf16.mxu0 0
    %4280 = vmatpush1.bf16.msra.mxu0 0
    %4281 = vmatprep.subr.bf16.mxu0 0
    %4282 = vmatpush1.bf16.msra.mxu0 0
    %4283 = vmatprep.subr.bf16.mxu0 0
    %4284 = vmatpush1.bf16.msra.mxu0 0
    %4285 = vmatprep.subr.bf16.mxu0 0
    %4286 = vmatpush1.bf16.msra.mxu0 0
    %4287 = vmatprep.subr.bf16.mxu0 0
    %4288 = vmatpush1.bf16.msra.mxu0 0
    %4289 = vmatprep.subr.bf16.mxu0 0
    %4290 = vmatpush1.bf16.msra.mxu0 0
    %4291 = vmatprep.subr.bf16.mxu0 0
    %4292 = vmatpush1.bf16.msra.mxu0 0
    %4293 = vmatprep.subr.bf16.mxu0 0
    %4294 = vmatpush1.bf16.msra.mxu0 0
    %4295 = vmatprep.subr.bf16.mxu0 0
    %4296 = vmatpush1.bf16.msra.mxu0 0
    %4297 = vmatprep.subr.bf16.mxu0 0
    %4298 = vmatpush1.bf16.msra.mxu0 0
    %4299 = vmatprep.subr.bf16.mxu0 0
    %4300 = vmatpush1.bf16.msra.mxu0 0
    %4301 = vmatprep.subr.bf16.mxu0 0
    %4302 = vmatpush1.bf16.msra.mxu0 0
    %4303 = vmatprep.subr.bf16.mxu0 0
    %4304 = vmatpush1.bf16.msra.mxu0 0
    %4305 = vmatprep.subr.bf16.mxu0 0
    %4306 = vmatpush1.bf16.msra.mxu0 0
    %4307 = vmatprep.mubr.bf16.mxu0 0
    %4308 = vmatmul.mubr.bf16.gmra.mrb[0].mxu0 %v4273
    %v4309 = vpop.f32.mrb[0].mxu0
    %v4310 = vadd.f32 %v4259, %v4309
    %v4311 = vpop.f32.mrb[0].mxu0
    %v4312 = vpop.f32.mrb[0].mxu0
    %v4313 = vadd.f32 %v4259, %v4312
    %v4314 = vpop.f32.mrb[0].mxu0
    %4315 = vdwg.mxu0
    %v4316 = vadd.f32 %v4180, %v4310
    %v4317 = vadd.f32 %v4181, %v4313
    %v4318 = vsel %vm952, %v4316, 0.0
    %4319 = vadd.xlane.f32.xlu0 %v4318
    %v4320 = vpop.xlane.xlu0 %4319
    %v4321 = vsel %vm952, %v4317, 0.0
    %4322 = vadd.xlane.f32.xlu0 %v4321
    %v4323 = vpop.xlane.xlu0 %4322
    %v4324 = vmul.f32 %v4320, %v1879
    %v4325 = vmul.f32 %v4323, %v1879
    %v4326 = vsub.f32 %v4316, %v4324
    %v4327 = vsub.f32 %v4317, %v4325
    %v4328 = vmul.f32 %v4326, %v4326
    %v4329 = vmul.f32 %v4327, %v4327
    %v4330 = vsel %vm952, %v4328, 0.0
    %4331 = vadd.xlane.f32.xlu0 %v4330
    %v4332 = vpop.xlane.xlu0 %4331
    %v4333 = vsel %vm952, %v4329, 0.0
    %4334 = vadd.xlane.f32.xlu0 %v4333
    %v4335 = vpop.xlane.xlu0 %4334
    %v4336 = vmul.f32 %v4332, %v1879
    %v4337 = vmul.f32 %v4335, %v1879
    %v4338 = vadd.f32 %v4336, 1e-05
    %v4339 = vadd.f32 %v4337, 1e-05
    %v4340 = vrsqrt.pop %v4338
    %v4341 = vrsqrt.pop %v4339
    %v4342 = vmul.f32 %v4326, %v4340
    %v4343 = vmul.f32 %v4327, %v4341
    %v4344 = vlaneseq
    %v4345 = vshrl.u32 %v4344, 7
    %v4346 = vsub.s32 0, %v4345
    %v4347 = vrot.slane %v3606, %v4346
    %v4348 = vmul.f32 %v4342, %v4347
    %v4349 = vmul.f32 %v4343, %v4347
    %v4350 = vlaneseq
    %v4351 = vshrl.u32 %v4350, 7
    %v4352 = vsub.s32 0, %v4351
    %v4353 = vrot.slane %v3607, %v4352
    %v4354 = vadd.f32 %v4348, %v4353
    %v4355 = vadd.f32 %v4349, %v4353
    %v4356 = vadd.f32 %v1067, %v4354
    %v4357 = vadd.f32 %v1068, %v4355
    %v4358 = vld [vmem:[#allocation41] sm:$0x1]
    %v4360 = vlaneseq
    %v4361 = vshrl.u32 %v4360, 7
    %v4362 = vsub.s32 0, %v4361
    %v4363 = vrot.slane %v4358, %v4362
    %v4365 = vmul.f32 %v4356, %v4363
    %v4366 = vmul.f32 %v4357, %v4363
    %v4367 = vsel %vm952, %v4365, 0.0
    %4368 = vadd.xlane.f32.xlu0 %v4367
    %v4369 = vpop.xlane.xlu0 %4368
    %v4370 = vsel %vm952, %v4366, 0.0
    %4371 = vadd.xlane.f32.xlu0 %v4370
    %v4372 = vpop.xlane.xlu0 %4371
    %v4373 = vld [vmem:[#allocation2] sm:$0x1]
    %v4375 = vlaneseq
    %v4376 = vshrl.u32 %v4375, 7
    %v4377 = vsub.s32 0, %v4376
    %v4378 = vrot.slane %v4373, %v4377
    %4379 = vset.pattern.permute.xlu0 0
    %4380 = vperm.xlu0 %4379, %v4378
    %v4381 = vpop.permute.xlu0 %4380
    %v4383 = vadd.f32 %v4369, %v4381
    %v4384 = vadd.f32 %v4372, %v4381
    %v4387 = vlaneseq
    %v4388 = vshrl.u32 %v4387, 7
    %v4389 = vsub.s32 %v864, %v4388
    %v4390 = vrot.slane %v4383, %v4389
    %v4391 = vlaneseq
    %v4392 = vshrl.u32 %v4391, 7
    %v4393 = vsub.s32 %v864, %v4392
    %v4394 = vrot.slane %v4384, %v4393
    %vm4395 = vcmask 1041409
    %v4396 = vsel %vm4395, %v4394, %v4390
    %vm4398 = vcmask 58368
    %4399 = vst.msk [vmem:[#allocation42] sm:$0x3] %vm4398, %v4396
    // Predicated region
    $region206: #{tpu_custom_call.1} parent=1 // pred_check
      _
    $region207: #{tpu_custom_call.1} parent=1 // pred_check_branch
      %4401 = sbr.rel (0) target = $region209
    $region208: #{tpu_custom_call.1} parent=1 // pred_region
      %s4403 = ssub.s32 32, 32
      %4404 = vsyncadd [#allocation5], %s4403
      %s4406 = sshll.u32 [#allocation42], 4
      %s4407 = int_to_ptr.vmem [resolvable:$true] %s4406
      %4409 = dma.vmem_to_hbm [thread:$0]  %s4407, 32, %s26, [#allocation5]
    $region209: #{tpu_custom_call.1} parent=1 // pred_fallthru
      _
    // Predicated region
    $region210: #{tpu_custom_call.1} parent=1 // pred_check
      _
    $region211: #{tpu_custom_call.1} parent=1 // pred_check_branch
      %4411 = sbr.rel (0) target = $region213
    $region212: #{tpu_custom_call.1} parent=1 // pred_region
      %4412 = dma.done [#allocation5], 32
    $region213: #{tpu_custom_call.1} parent=1 // pred_fallthru
      _
    %4413 = vsyncpa [#allocation4], 1
    %4414 = vsyncpa [#allocation7], 1
    %4415 = vsyncpa [#allocation10], 1
    %4416 = vsyncpa [#allocation13], 1
    %4417 = vsyncpa [#allocation16], 1
    %4418 = vsyncpa [#allocation19], 1
    %4419 = vsyncpa [#allocation22], 1
    %4420 = vsyncpa [#allocation25], 1
    %4421 = vsyncpa [#allocation28], 1
    %4422 = vsyncpa [#allocation31], 1
    %4423 = vsyncpa [#allocation34], 1
    %4424 = vsyncpa [#allocation37], 1
    %4425 = vsyncpa [#allocation40], 1
    %4426 = vsyncpa [#allocation5], 1

</llo_original>
